<compile_context>
chip_gen: v7x
topology: tpu7x:2x2x1
jax: 0.10.0
libtpu: 0.0.40
codegen_flags: <defaults>
</compile_context>

<pallas_src>
import functools

import jax
import jax.numpy as jnp
import numpy as np
from jax.experimental import pallas as pl
from jax.experimental.pallas import tpu as pltpu


_MATMUL_DTYPE = jnp.bfloat16          # MXU operand dtype (f32 accumulation)
_LANE = 128                           # vreg lane width


# ------------------------------ tiling helpers ------------------------------


def _round_up(v, m):
    return ((v + m - 1) // m) * m


@functools.lru_cache(maxsize=None)
def _tpu_vmem_and_mxu():
    """(physical VMEM bytes, prefer-256-wide-N-tile) for the current chip."""
    vmem_cap = 64 * (1 << 20)                     # conservative default (v7x)
    try:
        vmem_cap = int(pltpu.get_tpu_info().vmem_capacity_bytes)
    except Exception:
        pass
    vmem_cap = max(vmem_cap, 32 * (1 << 20))
    prefer_256 = True                             # v6e / v7x MXU is 2x256x256
    try:
        kind = jax.devices()[0].device_kind.lower()
        if "v5 lite" in kind or "v5e" in kind or "v5lite" in kind:
            prefer_256 = False                    # v5e MXU N width is 128
    except Exception:
        pass
    return vmem_cap, prefer_256


def _pick_cout_tile(cout, prefer_256):
    """Output-channel tile (cout is already a multiple of 128)."""
    if prefer_256 and cout % 256 == 0:
        return 256
    return 128


def _pick_batch_block(n, cap, fits):
    """Largest divisor of n (<= cap) whose per-step VMEM footprint fits."""
    nb = 1
    for cand in range(1, min(n, cap) + 1):
        if n % cand == 0 and fits(cand):
            nb = cand
    return nb


def _pad_last(a, target):
    c = a.shape[-1]
    if c == target:
        return a
    widths = [(0, 0)] * (a.ndim - 1) + [(0, target - c)]
    return jnp.pad(a, widths)


def _pad_conv_w(w, cin_p, cout_p):
    _, _, cin, cout = w.shape
    return jnp.pad(w, ((0, 0), (0, 0), (0, cin_p - cin), (0, cout_p - cout)))


# ----------------------------- Pallas kernel -------------------------------


def _bnrelu_conv_kernel(x_ref, s_ref, b_ref, w_ref, *rest,
                        NB, KH, KW, stride, pad, Ho, Wo,
                        has_shortcut, has_residual, want_stats):
    rest = list(rest)
    wsc_ref = rest.pop(0) if has_shortcut else None
    r_ref = rest.pop(0) if has_residual else None
    o_ref = rest.pop(0)
    sc_ref = rest.pop(0) if has_shortcut else None
    stats_ref = rest.pop(0) if want_stats else None
    pad_ref = rest.pop(0) if pad > 0 else None
    (col_ref,) = rest

    H, W, Cin = x_ref.shape[1], x_ref.shape[2], x_ref.shape[3]
    M = NB * Ho * Wo
    cj = pl.program_id(1)              # Cout-tile index (inner, sequential)

    # ---- BN+ReLU + im2col built once per batch block; reused for every Cout tile
    @pl.when(cj == 0)
    def _build_im2col():
        x = x_ref[...].astype(jnp.float32)                 # (NB, H, W, Cin)
        scale = s_ref[...].reshape(1, 1, 1, Cin)
        shift = b_ref[...].reshape(1, 1, 1, Cin)
        # BN + ReLU on the VPU in f32, then ONE downcast to bf16 before im2col.
        xb = jnp.maximum(x * scale + shift, 0.0).astype(col_ref.dtype)

        if pad > 0:
            Hp, Wp = H + 2 * pad, W + 2 * pad
            zdt = pad_ref.dtype
            # Zero only the border; the interior is fully rewritten each block.
            # (Kept per-block: an SMEM "first visit" flag would itself need
            #  initialization; these are a handful of tiny bf16 stores.)
            pad_ref[:, 0:pad, :, :] = jnp.zeros((NB, pad, Wp, Cin), zdt)
            pad_ref[:, Hp - pad:Hp, :, :] = jnp.zeros((NB, pad, Wp, Cin), zdt)
            pad_ref[:, :, 0:pad, :] = jnp.zeros((NB, Hp, pad, Cin), zdt)
            pad_ref[:, :, Wp - pad:Wp, :] = jnp.zeros((NB, Hp, pad, Cin), zdt)
            pad_ref[:, pad:pad + H, pad:pad + W, :] = xb

        # im2col: each (M, Cin) patch goes straight into its lane-aligned
        # column slab of col_ref (Cin is a multiple of 128 -> unmasked stores).
        idx = 0
        for kh in range(KH):
            for kw in range(KW):
                if stride == 1:
                    if pad > 0:
                        p = pad_ref[:, kh:kh + Ho, kw:kw + Wo, :]
                    else:
                        p = xb[:, kh:kh + Ho, kw:kw + Wo, :]
                else:
                    # TODO(synk): stride>1 still uses an in-kernel strided
                    # slice; wrapper-side space-to-depth would avoid it.
                    xp = pad_ref[...] if pad > 0 else xb
                    p = xp[:, kh:kh + (Ho - 1) * stride + 1:stride,
                              kw:kw + (Wo - 1) * stride + 1:stride, :]
                col_ref[:, idx * Cin:(idx + 1) * Cin] = p.reshape(M, Cin)
                idx += 1

    # ---- one MXU matmul per (batch-block, Cout-tile):  (M, K) @ (K, TCout)
    acc = jnp.dot(col_ref[...], w_ref[...],
                  preferred_element_type=jnp.float32)      # (M, TCout) f32
    out = acc.reshape(NB, Ho, Wo, acc.shape[-1])
    if has_residual:
        out = out + r_ref[...].astype(jnp.float32)
    o_ref[...] = out.astype(o_ref.dtype)

    if has_shortcut:
        # 1x1 stride-s shortcut == matmul on the centre im2col slab (the centre
        # tap of a (2p+1)x(2p+1), pad=p, stride-s conv samples exactly the
        # pixels the 1x1 stride-s conv needs) -> no second pass over x / bn1.
        ctr = (KH // 2) * KW + (KW // 2)
        xc = col_ref[:, ctr * Cin:(ctr + 1) * Cin]
        sc = jnp.dot(xc, wsc_ref[...], preferred_element_type=jnp.float32)
        sc_ref[...] = sc.reshape(NB, Ho, Wo, sc.shape[-1]).astype(sc_ref.dtype)

    if want_stats:
        # Per-channel partial (sum, sum_sq) of the f32 conv output, so the
        # wrapper never re-reads h from HBM just for bn2 batch statistics.
        s = jnp.sum(acc, axis=0, keepdims=True)            # (1, TCout)
        ss = jnp.sum(acc * acc, axis=0, keepdims=True)     # (1, TCout)
        stats_ref[0] = jnp.concatenate([s, ss], axis=0)    # one (2, TCout) store


def fused_bnrelu_conv(x, scale, shift, w, *, stride, pad, residual=None,
                      shortcut_w=None, want_stats=False,
                      out_dtype=jnp.float32, shortcut_dtype=jnp.float32):
    """y[n] = conv(relu(x[n]*scale+shift), w) (+ residual[n]).  NHWC / HWIO.

    Channels must be pre-padded to a multiple of 128.  Optionally also returns
    the fused 1x1 shortcut conv (same stride) and per-batch-block partial
    (sum, sum_sq) of the conv output, shaped (num_batch_blocks, 2, Cout).
    """
    N, H, W, Cin = x.shape
    KH, KW, Cin_w, Cout = w.shape
    assert Cin_w == Cin
    assert Cin % _LANE == 0 and Cout % _LANE == 0, "pad channels to 128 first"
    Ho = (H + 2 * pad - KH) // stride + 1
    Wo = (W + 2 * pad - KW) // stride + 1
    K = KH * KW * Cin
    has_res = residual is not None
    has_sc = shortcut_w is not None
    if has_sc:
        assert KH % 2 == 1 and KW % 2 == 1 and pad == KH // 2 == KW // 2
        wsc = shortcut_w.reshape(Cin, Cout).astype(_MATMUL_DTYPE)

    vmem_cap, prefer_256 = _tpu_vmem_and_mxu()
    vmem_limit = max(min(int(vmem_cap * 0.75), 112 * (1 << 20)), 32 * (1 << 20))
    step_budget = int(vmem_limit * 0.55)

    TCout = _pick_cout_tile(Cout, prefer_256)
    num_cblk = Cout // TCout

    x_isz = np.dtype(x.dtype).itemsize
    o_isz = np.dtype(out_dtype).itemsize
    r_isz = np.dtype(shortcut_dtype).itemsize
    Hp, Wp = H + 2 * pad, W + 2 * pad

    def _step_bytes(nb):
        m = nb * Ho * Wo
        b = 2 * nb * H * W * Cin * x_isz                 # input block (x2 bufs)
        b += 2 * m * TCout * o_isz                       # output block
        if has_res:
            b += 2 * m * TCout * 4
        if has_sc:
            b += 2 * m * TCout * r_isz + 2 * Cin * TCout * 2
        b += 2 * K * TCout * 2                           # weight tile (bf16)
        if pad > 0:
            b += nb * Hp * Wp * Cin * 2                  # padded-input scratch
        b += m * K * 2                                   # im2col scratch (bf16)
        b += nb * H * W * Cin * 4 + m * TCout * 4        # in-kernel f32 temps
        return b

    # Keep >= 2 batch-parallel grid steps so both v7x TensorCores get work
    # (negligible cost on single-TC v5e/v6e: one extra ~0.35us grid step).
    cap = max(1, min(N // 2, 16))
    NB = _pick_batch_block(N, cap, lambda nb: _step_bytes(nb) <= step_budget)
    num_nblk = N // NB

    w2 = w.reshape(K, Cout).astype(_MATMUL_DTYPE)        # one-time weight cast

    kernel = functools.partial(
        _bnrelu_conv_kernel, NB=NB, KH=KH, KW=KW, stride=stride, pad=pad,
        Ho=Ho, Wo=Wo, has_shortcut=has_sc, has_residual=has_res,
        want_stats=want_stats)

    in_specs = [
        pl.BlockSpec((NB, H, W, Cin), lambda n, c: (n, 0, 0, 0)),
        pl.BlockSpec((1, Cin), lambda n, c: (0, 0)),
        pl.BlockSpec((1, Cin), lambda n, c: (0, 0)),
        pl.BlockSpec((K, TCout), lambda n, c: (0, c)),
    ]
    args = [x, scale.reshape(1, Cin).astype(jnp.float32),
            shift.reshape(1, Cin).astype(jnp.float32), w2]
    if has_sc:
        in_specs.append(pl.BlockSpec((Cin, TCout), lambda n, c: (0, c)))
        args.append(wsc)
    if has_res:
        in_specs.append(pl.BlockSpec((NB, Ho, Wo, TCout),
                                     lambda n, c: (n, 0, 0, c)))
        args.append(residual)

    out_shapes = [jax.ShapeDtypeStruct((N, Ho, Wo, Cout), out_dtype)]
    out_specs = [pl.BlockSpec((NB, Ho, Wo, TCout), lambda n, c: (n, 0, 0, c))]
    if has_sc:
        out_shapes.append(jax.ShapeDtypeStruct((N, Ho, Wo, Cout), shortcut_dtype))
        out_specs.append(pl.BlockSpec((NB, Ho, Wo, TCout),
                                      lambda n, c: (n, 0, 0, c)))
    if want_stats:
        out_shapes.append(jax.ShapeDtypeStruct((num_nblk, 2, Cout), jnp.float32))
        out_specs.append(pl.BlockSpec((1, 2, TCout), lambda n, c: (n, 0, c)))

    scratch_shapes = []
    if pad > 0:
        scratch_shapes.append(pltpu.VMEM((NB, Hp, Wp, Cin), _MATMUL_DTYPE))
    scratch_shapes.append(pltpu.VMEM((NB * Ho * Wo, K), _MATMUL_DTYPE))

    outs = pl.pallas_call(
        kernel,
        out_shape=tuple(out_shapes),
        grid_spec=pltpu.PrefetchScalarGridSpec(
            num_scalar_prefetch=0,
            grid=(num_nblk, num_cblk),
            in_specs=in_specs,
            out_specs=tuple(out_specs),
            scratch_shapes=scratch_shapes),
        compiler_params=pltpu.CompilerParams(
            # batch-block axis feeds both TCs on v7x; the Cout axis must stay
            # sequential because it reuses the im2col scratch built at c == 0.
            dimension_semantics=("parallel", "arbitrary"),
            vmem_limit_bytes=vmem_limit),
    )(*args)

    if len(out_shapes) == 1:
        return outs[0]
    return outs


# ------------------------------ block wrapper ------------------------------


def _affine_from_moments(mean, var, gamma, beta, eps=1e-5):
    scale = gamma * jax.lax.rsqrt(var + eps)
    return scale, beta - mean * scale


def meta_basic_block_forward(x_nchw, params, *, in_planes, out_planes, stride):
    x = jnp.transpose(x_nchw, (0, 2, 3, 1)).astype(jnp.float32)   # NCHW -> NHWC
    equal = (in_planes == out_planes)
    if equal:
        # identity shortcut + stride>1 would shape-mismatch (it does in PyTorch
        # too); WRN never instantiates that combination.
        assert stride == 1, "equalInOut blocks must have stride == 1"

    # bn1 statistics (training-mode batch stats, biased variance) on the real
    # channels; x is produced outside any kernel, so this pass is unavoidable.
    m1 = jnp.mean(x, axis=(0, 1, 2))
    v1 = jnp.var(x, axis=(0, 1, 2))
    s1, b1 = _affine_from_moments(m1, v1, params["bn1_gamma"], params["bn1_beta"])

    # Zero-pad channels to the 128-lane width; the whole block runs padded and
    # only the final output is sliced back.  Zero-padded gammas/betas/weights
    # keep the padded channels exactly zero end-to-end.
    cin_p = _round_up(in_planes, _LANE)
    cout_p = _round_up(out_planes, _LANE)
    xp = _pad_last(x, cin_p)
    s1p, b1p = _pad_last(s1, cin_p), _pad_last(b1, cin_p)
    w1p = _pad_conv_w(params["conv1_w"], cin_p, cout_p)
    w2p = _pad_conv_w(params["conv2_w"], cout_p, cout_p)

    if equal:
        # conv1(relu(bn1(x))), with bn2's sum / sum-of-squares fused in;
        # h stored as bf16 (it is only re-read as an MXU operand).
        h, h_stats = fused_bnrelu_conv(xp, s1p, b1p, w1p, stride=stride, pad=1,
                                       want_stats=True, out_dtype=jnp.bfloat16)
        residual = xp
    else:
        # 1x1 convShortcut(relu(bn1(x))) fused into the same kernel (second
        # matmul on the centre im2col slab) -> no second pass over x.
        wscp = _pad_conv_w(params["convsc_w"], cin_p, cout_p)
        h, residual, h_stats = fused_bnrelu_conv(
            xp, s1p, b1p, w1p, stride=stride, pad=1,
            shortcut_w=wscp, want_stats=True, out_dtype=jnp.bfloat16)

    cnt = h.shape[0] * h.shape[1] * h.shape[2]
    sums = jnp.sum(h_stats, axis=0)                               # (2, cout_p)
    m2 = sums[0] / cnt
    # TODO(synk): E[h^2]-E[h]^2 can cancel for large-mean channels; a centered
    # per-block sum would be safer for very deep/wide nets.
    v2 = jnp.maximum(sums[1] / cnt - m2 * m2, 0.0)                # biased var
    s2, b2 = _affine_from_moments(m2, v2,
                                  _pad_last(params["bn2_gamma"], cout_p),
                                  _pad_last(params["bn2_beta"], cout_p))

    # conv2(relu(bn2(h))) + residual, fused in one kernel.
    y = fused_bnrelu_conv(h, s2, b2, w2p, stride=1, pad=1, residual=residual)
    return jnp.transpose(y[..., :out_planes], (0, 3, 1, 2))       # NHWC -> NCHW


# ------------------------------ pure-JAX reference --------------------------


def reference_forward(x_nchw, params, *, in_planes, out_planes, stride,
                      match_kernel=False):
    """Pure-JAX reference.  match_kernel=True mirrors the kernel's numerics
    (bf16 MXU inputs, f32 accumulation, h stored as bf16, bn2 stats from f32 h).
    """
    x = jnp.transpose(x_nchw, (0, 2, 3, 1)).astype(jnp.float32)
    mm_dtype = jnp.bfloat16 if match_kernel else jnp.float32

    def conv(z, w, s, p):
        return jax.lax.conv_general_dilated(
            z.astype(mm_dtype), w.astype(mm_dtype), (s, s), [(p, p), (p, p)],
            dimension_numbers=("NHWC", "HWIO", "NHWC"),
            preferred_element_type=jnp.float32)

    def moments(z):
        return jnp.mean(z, axis=(0, 1, 2)), jnp.var(z, axis=(0, 1, 2))

    m1, v1 = moments(x)
    s1 = params["bn1_gamma"] * jax.lax.rsqrt(v1 + 1e-5)
    a = jnp.maximum(x * s1 + (params["bn1_beta"] - m1 * s1), 0.0)

    h = conv(a, params["conv1_w"], stride, 1)
    m2, v2 = moments(h)                       # kernel takes stats from f32 acc
    if match_kernel:
        h = h.astype(jnp.bfloat16).astype(jnp.float32)
    s2 = params["bn2_gamma"] * jax.lax.rsqrt(v2 + 1e-5)
    o = jnp.maximum(h * s2 + (params["bn2_beta"] - m2 * s2), 0.0)

    y = conv(o, params["conv2_w"], 1, 1)
    res = x if in_planes == out_planes else conv(a, params["convsc_w"], stride, 0)
    return jnp.transpose(res + y, (0, 3, 1, 2))


# ---------------------------------- main ------------------------------------


def _make_params(key, in_planes, out_planes):
    k = jax.random.split(key, 6)
    params = {
        "bn1_gamma": jax.random.uniform(k[0], (in_planes,), jnp.float32, 0.5, 1.5),
        "bn1_beta": 0.1 * jax.random.normal(k[1], (in_planes,), jnp.float32),
        "bn2_gamma": jax.random.uniform(k[2], (out_planes,), jnp.float32, 0.5, 1.5),
        "bn2_beta": 0.1 * jax.random.normal(k[3], (out_planes,), jnp.float32),
        # HWIO conv weights (PyTorch OIHW transposed), kaiming-ish scale.
        "conv1_w": jax.random.normal(k[4], (3, 3, in_planes, out_planes),
                                     jnp.float32) * np.sqrt(2.0 / (9 * in_planes)),
        "conv2_w": jax.random.normal(k[5], (3, 3, out_planes, out_planes),
                                     jnp.float32) * np.sqrt(2.0 / (9 * out_planes)),
    }
    if in_planes != out_planes:
        params["convsc_w"] = jax.random.normal(
            jax.random.fold_in(key, 7), (1, 1, in_planes, out_planes),
            jnp.float32) * np.sqrt(2.0 / in_planes)
    return params


def _check_case(x, params, in_p, out_p, stride):
    y = jax.block_until_ready(meta_basic_block_forward(
        x, params, in_planes=in_p, out_planes=out_p, stride=stride))
    # Tight check against a reference that mirrors the kernel's numerics.
    y_match = reference_forward(x, params, in_planes=in_p, out_planes=out_p,
                                stride=stride, match_kernel=True)
    np.testing.assert_allclose(np.asarray(y), np.asarray(y_match),
                               rtol=5e-3, atol=5e-3)
    # Looser check against the full-f32 reference (gap is bf16 MXU inputs and
    # the bf16 storage of the conv1 intermediate).
    y_f32 = reference_forward(x, params, in_planes=in_p, out_planes=out_p,
                              stride=stride, match_kernel=False)
    np.testing.assert_allclose(np.asarray(y), np.asarray(y_f32),
                               rtol=3e-2, atol=3e-2)
    return y


if __name__ == "__main__":
    key = jax.random.PRNGKey(0)

    # Case 1: equalInOut (identity shortcut), stride=1.
    in_p, out_p, stride = 8, 8, 1
    kx, kp = jax.random.split(key)
    x = jax.random.normal(kx, (2, in_p, 16, 16), jnp.float32)     # NCHW like torch
    params = _make_params(kp, in_p, out_p)
    y = _check_case(x, params, in_p, out_p, stride)
    assert y.shape == (2, out_p, 16, 16)

    # Case 2: channel-changing block (fused 1x1 conv shortcut), stride=1.
    in_p2, out_p2 = 4, 8
    kx2, kp2 = jax.random.split(jax.random.fold_in(key, 1))
    x2 = jax.random.normal(kx2, (2, in_p2, 16, 16), jnp.float32)
    params2 = _make_params(kp2, in_p2, out_p2)
    y2 = _check_case(x2, params2, in_p2, out_p2, 1)
    assert y2.shape == (2, out_p2, 16, 16)

    print("KERNEL_OK")
</pallas_src>

<mosaic_0001>
module attributes {stable_mosaic.version = 11 : i64} {
  func.func @_bnrelu_conv_kernel(%arg0: i32, %arg1: i32, %arg2: memref<1x16x16x128xf32, #tpu.memory_space<vmem>>, %arg3: memref<1x128xf32, #tpu.memory_space<vmem>>, %arg4: memref<1x128xf32, #tpu.memory_space<vmem>>, %arg5: memref<1152x128xbf16, #tpu.memory_space<vmem>>, %arg6: memref<1x16x16x128xbf16, #tpu.memory_space<vmem>>, %arg7: memref<1x2x128xf32, #tpu.memory_space<vmem>>, %arg8: memref<1x18x18x128xbf16, #tpu.memory_space<vmem>>, %arg9: memref<256x1152xbf16, #tpu.memory_space<vmem>>) attributes {dimension_semantics = [#tpu.dimension_semantics<parallel>, #tpu.dimension_semantics<arbitrary>], iteration_bounds = array<i64: 2, 1>, scalar_prefetch = 0 : i64, scratch_operands = 2 : i64, tpu.core_type = #tpu.core_type<tc>, window_params = [{transform_indices = @transform_0, window_bounds = array<i64: 1, 16, 16, 128>}, {pipeline_mode = #tpu.pipeline_mode<synchronous>, transform_indices = @transform_1, window_bounds = array<i64: 1, 128>}, {pipeline_mode = #tpu.pipeline_mode<synchronous>, transform_indices = @transform_2, window_bounds = array<i64: 1, 128>}, {transform_indices = @transform_3, window_bounds = array<i64: 1152, 128>}, {transform_indices = @transform_4, window_bounds = array<i64: 1, 16, 16, 128>}, {transform_indices = @transform_5, window_bounds = array<i64: 1, 2, 128>}]} {
    %c0_i32 = arith.constant 0 : i32
    %0 = arith.cmpi eq, %arg1, %c0_i32 : i32
    %1 = arith.extui %0 : i1 to i32
    %c0_i32_0 = arith.constant 0 : i32
    %2 = arith.cmpi ne, %1, %c0_i32_0 : i32
    scf.if %2 {
      %c0_13 = arith.constant 0 : index
      %c0_14 = arith.constant 0 : index
      %c0_15 = arith.constant 0 : index
      %c0_16 = arith.constant 0 : index
      %18 = vector.load %arg2[%c0_13, %c0_14, %c0_15, %c0_16] : memref<1x16x16x128xf32, #tpu.memory_space<vmem>>, vector<1x16x16x128xf32>
      %c0_17 = arith.constant 0 : index
      %c0_18 = arith.constant 0 : index
      %19 = vector.load %arg3[%c0_17, %c0_18] : memref<1x128xf32, #tpu.memory_space<vmem>>, vector<1x128xf32>
      %20 = vector.shape_cast %19 : vector<1x128xf32> to vector<1x1x1x128xf32>
      %c0_19 = arith.constant 0 : index
      %c0_20 = arith.constant 0 : index
      %21 = vector.load %arg4[%c0_19, %c0_20] : memref<1x128xf32, #tpu.memory_space<vmem>>, vector<1x128xf32>
      %22 = vector.shape_cast %21 : vector<1x128xf32> to vector<1x1x1x128xf32>
      %23 = vector.broadcast %20 : vector<1x1x1x128xf32> to vector<1x16x16x128xf32>
      %24 = arith.mulf %18, %23 : vector<1x16x16x128xf32>
      %25 = vector.broadcast %22 : vector<1x1x1x128xf32> to vector<1x16x16x128xf32>
      %26 = arith.addf %24, %25 : vector<1x16x16x128xf32>
      %cst_21 = arith.constant 0.000000e+00 : f32
      %27 = vector.broadcast %cst_21 : f32 to vector<1x16x16x128xf32>
      %28 = arith.maximumf %26, %27 : vector<1x16x16x128xf32>
      %29 = arith.truncf %28 : vector<1x16x16x128xf32> to vector<1x16x16x128xbf16>
      %cst_22 = arith.constant 0.000000e+00 : bf16
      %30 = vector.broadcast %cst_22 : bf16 to vector<1x1x18x128xbf16>
      %c0_23 = arith.constant 0 : index
      %c0_24 = arith.constant 0 : index
      %c0_25 = arith.constant 0 : index
      %c0_26 = arith.constant 0 : index
      %31 = vector.load %arg8[%c0_23, %c0_24, %c0_25, %c0_26] : memref<1x18x18x128xbf16, #tpu.memory_space<vmem>>, vector<1x1x18x128xbf16>
      tpu.vector_store %arg8[%c0_23, %c0_24, %c0_25, %c0_26], %30 {strides = array<i32>} : memref<1x18x18x128xbf16, #tpu.memory_space<vmem>>, vector<1x1x18x128xbf16>,
      %cst_27 = arith.constant 0.000000e+00 : bf16
      %32 = vector.broadcast %cst_27 : bf16 to vector<1x1x18x128xbf16>
      %c0_28 = arith.constant 0 : index
      %c17 = arith.constant 17 : index
      %c0_29 = arith.constant 0 : index
      %c0_30 = arith.constant 0 : index
      %33 = vector.load %arg8[%c0_28, %c17, %c0_29, %c0_30] : memref<1x18x18x128xbf16, #tpu.memory_space<vmem>>, vector<1x1x18x128xbf16>
      tpu.vector_store %arg8[%c0_28, %c17, %c0_29, %c0_30], %32 {strides = array<i32>} : memref<1x18x18x128xbf16, #tpu.memory_space<vmem>>, vector<1x1x18x128xbf16>,
      %cst_31 = arith.constant 0.000000e+00 : bf16
      %34 = vector.broadcast %cst_31 : bf16 to vector<1x18x1x128xbf16>
      %c0_32 = arith.constant 0 : index
      %c0_33 = arith.constant 0 : index
      %c0_34 = arith.constant 0 : index
      %c0_35 = arith.constant 0 : index
      %35 = vector.load %arg8[%c0_32, %c0_33, %c0_34, %c0_35] : memref<1x18x18x128xbf16, #tpu.memory_space<vmem>>, vector<1x18x1x128xbf16>
      tpu.vector_store %arg8[%c0_32, %c0_33, %c0_34, %c0_35], %34 {strides = array<i32>} : memref<1x18x18x128xbf16, #tpu.memory_space<vmem>>, vector<1x18x1x128xbf16>,
      %cst_36 = arith.constant 0.000000e+00 : bf16
      %36 = vector.broadcast %cst_36 : bf16 to vector<1x18x1x128xbf16>
      %c0_37 = arith.constant 0 : index
      %c0_38 = arith.constant 0 : index
      %c17_39 = arith.constant 17 : index
      %c0_40 = arith.constant 0 : index
      %37 = vector.load %arg8[%c0_37, %c0_38, %c17_39, %c0_40] : memref<1x18x18x128xbf16, #tpu.memory_space<vmem>>, vector<1x18x1x128xbf16>
      tpu.vector_store %arg8[%c0_37, %c0_38, %c17_39, %c0_40], %36 {strides = array<i32>} : memref<1x18x18x128xbf16, #tpu.memory_space<vmem>>, vector<1x18x1x128xbf16>,
      %c0_41 = arith.constant 0 : index
      %c1 = arith.constant 1 : index
      %c1_42 = arith.constant 1 : index
      %c0_43 = arith.constant 0 : index
      %38 = vector.load %arg8[%c0_41, %c1, %c1_42, %c0_43] : memref<1x18x18x128xbf16, #tpu.memory_space<vmem>>, vector<1x16x16x128xbf16>
      tpu.vector_store %arg8[%c0_41, %c1, %c1_42, %c0_43], %29 {strides = array<i32>} : memref<1x18x18x128xbf16, #tpu.memory_space<vmem>>, vector<1x16x16x128xbf16>,
      %c0_44 = arith.constant 0 : index
      %c0_45 = arith.constant 0 : index
      %c0_46 = arith.constant 0 : index
      %c0_47 = arith.constant 0 : index
      %39 = vector.load %arg8[%c0_44, %c0_45, %c0_46, %c0_47] : memref<1x18x18x128xbf16, #tpu.memory_space<vmem>>, vector<1x16x16x128xbf16>
      %40 = vector.shape_cast %39 : vector<1x16x16x128xbf16> to vector<256x128xbf16>
      %c0_48 = arith.constant 0 : index
      %c0_49 = arith.constant 0 : index
      %41 = vector.load %arg9[%c0_48, %c0_49] : memref<256x1152xbf16, #tpu.memory_space<vmem>>, vector<256x128xbf16>
      tpu.vector_store %arg9[%c0_48, %c0_49], %40 {strides = array<i32>} : memref<256x1152xbf16, #tpu.memory_space<vmem>>, vector<256x128xbf16>,
      %c0_50 = arith.constant 0 : index
      %c0_51 = arith.constant 0 : index
      %c1_52 = arith.constant 1 : index
      %c0_53 = arith.constant 0 : index
      %42 = vector.load %arg8[%c0_50, %c0_51, %c1_52, %c0_53] : memref<1x18x18x128xbf16, #tpu.memory_space<vmem>>, vector<1x16x16x128xbf16>
      %43 = vector.shape_cast %42 : vector<1x16x16x128xbf16> to vector<256x128xbf16>
      %c0_54 = arith.constant 0 : index
      %c128 = arith.constant 128 : index
      %44 = vector.load %arg9[%c0_54, %c128] : memref<256x1152xbf16, #tpu.memory_space<vmem>>, vector<256x128xbf16>
      tpu.vector_store %arg9[%c0_54, %c128], %43 {strides = array<i32>} : memref<256x1152xbf16, #tpu.memory_space<vmem>>, vector<256x128xbf16>,
      %c0_55 = arith.constant 0 : index
      %c0_56 = arith.constant 0 : index
      %c2 = arith.constant 2 : index
      %c0_57 = arith.constant 0 : index
      %45 = vector.load %arg8[%c0_55, %c0_56, %c2, %c0_57] : memref<1x18x18x128xbf16, #tpu.memory_space<vmem>>, vector<1x16x16x128xbf16>
      %46 = vector.shape_cast %45 : vector<1x16x16x128xbf16> to vector<256x128xbf16>
      %c0_58 = arith.constant 0 : index
      %c256 = arith.constant 256 : index
      %47 = vector.load %arg9[%c0_58, %c256] : memref<256x1152xbf16, #tpu.memory_space<vmem>>, vector<256x128xbf16>
      tpu.vector_store %arg9[%c0_58, %c256], %46 {strides = array<i32>} : memref<256x1152xbf16, #tpu.memory_space<vmem>>, vector<256x128xbf16>,
      %c0_59 = arith.constant 0 : index
      %c1_60 = arith.constant 1 : index
      %c0_61 = arith.constant 0 : index
      %c0_62 = arith.constant 0 : index
      %48 = vector.load %arg8[%c0_59, %c1_60, %c0_61, %c0_62] : memref<1x18x18x128xbf16, #tpu.memory_space<vmem>>, vector<1x16x16x128xbf16>
      %49 = vector.shape_cast %48 : vector<1x16x16x128xbf16> to vector<256x128xbf16>
      %c0_63 = arith.constant 0 : index
      %c384 = arith.constant 384 : index
      %50 = vector.load %arg9[%c0_63, %c384] : memref<256x1152xbf16, #tpu.memory_space<vmem>>, vector<256x128xbf16>
      tpu.vector_store %arg9[%c0_63, %c384], %49 {strides = array<i32>} : memref<256x1152xbf16, #tpu.memory_space<vmem>>, vector<256x128xbf16>,
      %c0_64 = arith.constant 0 : index
      %c1_65 = arith.constant 1 : index
      %c1_66 = arith.constant 1 : index
      %c0_67 = arith.constant 0 : index
      %51 = vector.load %arg8[%c0_64, %c1_65, %c1_66, %c0_67] : memref<1x18x18x128xbf16, #tpu.memory_space<vmem>>, vector<1x16x16x128xbf16>
      %52 = vector.shape_cast %51 : vector<1x16x16x128xbf16> to vector<256x128xbf16>
      %c0_68 = arith.constant 0 : index
      %c512 = arith.constant 512 : index
      %53 = vector.load %arg9[%c0_68, %c512] : memref<256x1152xbf16, #tpu.memory_space<vmem>>, vector<256x128xbf16>
      tpu.vector_store %arg9[%c0_68, %c512], %52 {strides = array<i32>} : memref<256x1152xbf16, #tpu.memory_space<vmem>>, vector<256x128xbf16>,
      %c0_69 = arith.constant 0 : index
      %c1_70 = arith.constant 1 : index
      %c2_71 = arith.constant 2 : index
      %c0_72 = arith.constant 0 : index
      %54 = vector.load %arg8[%c0_69, %c1_70, %c2_71, %c0_72] : memref<1x18x18x128xbf16, #tpu.memory_space<vmem>>, vector<1x16x16x128xbf16>
      %55 = vector.shape_cast %54 : vector<1x16x16x128xbf16> to vector<256x128xbf16>
      %c0_73 = arith.constant 0 : index
      %c640 = arith.constant 640 : index
      %56 = vector.load %arg9[%c0_73, %c640] : memref<256x1152xbf16, #tpu.memory_space<vmem>>, vector<256x128xbf16>
      tpu.vector_store %arg9[%c0_73, %c640], %55 {strides = array<i32>} : memref<256x1152xbf16, #tpu.memory_space<vmem>>, vector<256x128xbf16>,
      %c0_74 = arith.constant 0 : index
      %c2_75 = arith.constant 2 : index
      %c0_76 = arith.constant 0 : index
      %c0_77 = arith.constant 0 : index
      %57 = vector.load %arg8[%c0_74, %c2_75, %c0_76, %c0_77] : memref<1x18x18x128xbf16, #tpu.memory_space<vmem>>, vector<1x16x16x128xbf16>
      %58 = vector.shape_cast %57 : vector<1x16x16x128xbf16> to vector<256x128xbf16>
      %c0_78 = arith.constant 0 : index
      %c768 = arith.constant 768 : index
      %59 = vector.load %arg9[%c0_78, %c768] : memref<256x1152xbf16, #tpu.memory_space<vmem>>, vector<256x128xbf16>
      tpu.vector_store %arg9[%c0_78, %c768], %58 {strides = array<i32>} : memref<256x1152xbf16, #tpu.memory_space<vmem>>, vector<256x128xbf16>,
      %c0_79 = arith.constant 0 : index
      %c2_80 = arith.constant 2 : index
      %c1_81 = arith.constant 1 : index
      %c0_82 = arith.constant 0 : index
      %60 = vector.load %arg8[%c0_79, %c2_80, %c1_81, %c0_82] : memref<1x18x18x128xbf16, #tpu.memory_space<vmem>>, vector<1x16x16x128xbf16>
      %61 = vector.shape_cast %60 : vector<1x16x16x128xbf16> to vector<256x128xbf16>
      %c0_83 = arith.constant 0 : index
      %c896 = arith.constant 896 : index
      %62 = vector.load %arg9[%c0_83, %c896] : memref<256x1152xbf16, #tpu.memory_space<vmem>>, vector<256x128xbf16>
      tpu.vector_store %arg9[%c0_83, %c896], %61 {strides = array<i32>} : memref<256x1152xbf16, #tpu.memory_space<vmem>>, vector<256x128xbf16>,
      %c0_84 = arith.constant 0 : index
      %c2_85 = arith.constant 2 : index
      %c2_86 = arith.constant 2 : index
      %c0_87 = arith.constant 0 : index
      %63 = vector.load %arg8[%c0_84, %c2_85, %c2_86, %c0_87] : memref<1x18x18x128xbf16, #tpu.memory_space<vmem>>, vector<1x16x16x128xbf16>
      %64 = vector.shape_cast %63 : vector<1x16x16x128xbf16> to vector<256x128xbf16>
      %c0_88 = arith.constant 0 : index
      %c1024 = arith.constant 1024 : index
      %65 = vector.load %arg9[%c0_88, %c1024] : memref<256x1152xbf16, #tpu.memory_space<vmem>>, vector<256x128xbf16>
      tpu.vector_store %arg9[%c0_88, %c1024], %64 {strides = array<i32>} : memref<256x1152xbf16, #tpu.memory_space<vmem>>, vector<256x128xbf16>,
    } else {
    }
    %c0 = arith.constant 0 : index
    %c0_1 = arith.constant 0 : index
    %3 = vector.load %arg9[%c0, %c0_1] : memref<256x1152xbf16, #tpu.memory_space<vmem>>, vector<256x1152xbf16>
    %c0_2 = arith.constant 0 : index
    %c0_3 = arith.constant 0 : index
    %4 = vector.load %arg5[%c0_2, %c0_3] : memref<1152x128xbf16, #tpu.memory_space<vmem>>, vector<1152x128xbf16>
    %cst = arith.constant dense<0.000000e+00> : vector<256x128xf32>
    %5 = tpu.matmul %3, %4, %cst {dimension_numbers = #tpu.dot_dimension_numbers<[1], [0], [0], [1], [0, 0, 1, 1], [], []>} : vector<256x1152xbf16>, vector<1152x128xbf16>, vector<256x128xf32> -> vector<256x128xf32>
    %6 = vector.shape_cast %5 : vector<256x128xf32> to vector<1x16x16x128xf32>
    %7 = arith.truncf %6 : vector<1x16x16x128xf32> to vector<1x16x16x128xbf16>
    %c0_4 = arith.constant 0 : index
    %c0_5 = arith.constant 0 : index
    %c0_6 = arith.constant 0 : index
    %c0_7 = arith.constant 0 : index
    %8 = vector.load %arg6[%c0_4, %c0_5, %c0_6, %c0_7] : memref<1x16x16x128xbf16, #tpu.memory_space<vmem>>, vector<1x16x16x128xbf16>
    tpu.vector_store %arg6[%c0_4, %c0_5, %c0_6, %c0_7], %7 {strides = array<i32>} : memref<1x16x16x128xbf16, #tpu.memory_space<vmem>>, vector<1x16x16x128xbf16>,
    %cst_8 = arith.constant dense<0.000000e+00> : vector<128xf32>
    %9 = vector.multi_reduction <add>, %5, %cst_8 [0] : vector<256x128xf32> to vector<128xf32>
    %10 = vector.shape_cast %9 : vector<128xf32> to vector<1x128xf32>
    %11 = arith.mulf %5, %5 : vector<256x128xf32>
    %cst_9 = arith.constant dense<0.000000e+00> : vector<128xf32>
    %12 = vector.multi_reduction <add>, %11, %cst_9 [0] : vector<256x128xf32> to vector<128xf32>
    %13 = vector.shape_cast %12 : vector<128xf32> to vector<1x128xf32>
    %14 = tpu.concatenate %10, %13 in 0 : vector<1x128xf32>, vector<1x128xf32> -> vector<2x128xf32>
    %c0_10 = arith.constant 0 : index
    %c0_11 = arith.constant 0 : index
    %c0_12 = arith.constant 0 : index
    %15 = vector.load %arg7[%c0_10, %c0_11, %c0_12] : memref<1x2x128xf32, #tpu.memory_space<vmem>>, vector<1x2x128xf32>
    %16 = vector.shape_cast %15 : vector<1x2x128xf32> to vector<2x128xf32>
    %17 = vector.shape_cast %14 : vector<2x128xf32> to vector<1x2x128xf32>
    tpu.vector_store %arg7[%c0_10, %c0_11, %c0_12], %17 {strides = array<i32>} : memref<1x2x128xf32, #tpu.memory_space<vmem>>, vector<1x2x128xf32>,
    return
  }
  func.func @transform_0(%arg0: i32, %arg1: i32) -> (i32, i32, i32, i32) {
    %c0_i32 = arith.constant 0 : i32
    %c0_i32_0 = arith.constant 0 : i32
    %c0_i32_1 = arith.constant 0 : i32
    %c0_i32_2 = arith.constant 0 : i32
    return %arg0, %c0_i32, %c0_i32_0, %c0_i32_1 : i32, i32, i32, i32
  }
  func.func @transform_1(%arg0: i32, %arg1: i32) -> (i32, i32) {
    %c0_i32 = arith.constant 0 : i32
    %c0_i32_0 = arith.constant 0 : i32
    %c0_i32_1 = arith.constant 0 : i32
    return %c0_i32, %c0_i32_0 : i32, i32
  }
  func.func @transform_2(%arg0: i32, %arg1: i32) -> (i32, i32) {
    %c0_i32 = arith.constant 0 : i32
    %c0_i32_0 = arith.constant 0 : i32
    %c0_i32_1 = arith.constant 0 : i32
    return %c0_i32, %c0_i32_0 : i32, i32
  }
  func.func @transform_3(%arg0: i32, %arg1: i32) -> (i32, i32) {
    %c0_i32 = arith.constant 0 : i32
    %c0_i32_0 = arith.constant 0 : i32
    return %c0_i32, %arg1 : i32, i32
  }
  func.func @transform_4(%arg0: i32, %arg1: i32) -> (i32, i32, i32, i32) {
    %c0_i32 = arith.constant 0 : i32
    %c0_i32_0 = arith.constant 0 : i32
    %c0_i32_1 = arith.constant 0 : i32
    return %arg0, %c0_i32, %c0_i32_0, %arg1 : i32, i32, i32, i32
  }
  func.func @transform_5(%arg0: i32, %arg1: i32) -> (i32, i32, i32) {
    %c0_i32 = arith.constant 0 : i32
    %c0_i32_0 = arith.constant 0 : i32
    return %arg0, %c0_i32, %arg1 : i32, i32, i32
  }
}

</mosaic_0001>

<llo_original>
// kernel: tpu_custom_call.1
$region0: #{tpu_custom_call.1}
  #allocation0 [shape = 'u32[]', space=smem, size = 0x4, offset = 0x4, fixed_abs, tag = 'smem constant byte address 0x4 - core index']
  #allocation1 [shape = 'u32[144,128]{1,0:T(1,128)}', space=vmem, size = 0x12000, scoped, tag = 'internal scratch']
  #allocation2 [shape = 'bf16[1,18,18,128]{3,2,1,0:T(8,128)(2,1)}', space=vmem, size = 0x1b000, scoped, tag = 'scratch operand']
  #allocation3 [shape = 'bf16[256,1152]{1,0:T(16,128)(2,1)}', space=vmem, size = 0x90000, scoped, tag = 'scratch operand']
  %s0 = inlined_call_operand.hbm [shape: f32[2,16,16,128], index: 0, kind: input, shape index: {}]
  %s1 = inlined_call_operand.vmem [shape: f32[1,128], index: 1, kind: input, shape index: {}]
  %s2 = inlined_call_operand.vmem [shape: f32[1,128], index: 2, kind: input, shape index: {}]
  %s3 = inlined_call_operand.hbm [shape: bf16[1152,128], index: 3, kind: input, shape index: {}]
  %s4 = inlined_call_operand.hbm [shape: bf16[2,16,16,128], index: 4, kind: output, shape index: {0}]
  %s5 = inlined_call_operand.hbm [shape: f32[2,2,128], index: 5, kind: output, shape index: {1}]
  %6 = xla_tuple %s4, %s5
  %s7 = sld [smem:[#allocation0]]
  $region69: #{tpu_custom_call.1} parent=0
    _
  %s9 = ssub.s32 1, %s7
  %s10 = scalar_select 0, %s9, %s7
  $region1: #{tpu_custom_call.1} parent=0
    #allocation4 [shape = 'u8[262144]{0}', space=vmem, size = 0x40000, scoped, tag = 'input window, operand 0']
    #allocation5 [shape = 's32[2]{0}', space=sflag, size = 0x8, scoped, tag = 'scoped memory for tpu_custom_call.1']
    #allocation6 [shape = 's32[2]{0}', space=sflag, size = 0x8, scoped, tag = 'scoped memory for tpu_custom_call.1']
    #allocation7 [shape = 'u8[294912]{0}', space=vmem, size = 0x48000, scoped, tag = 'input window, operand 3, single buffered']
    #allocation8 [shape = 's32[1]{0}', space=sflag, size = 0x4, scoped, tag = 'scoped memory for tpu_custom_call.1']
    #allocation9 [shape = 'u8[131072]{0}', space=vmem, size = 0x20000, scoped, tag = 'output window, operand 0']
    #allocation10 [shape = 'u8[2048]{0}', space=vmem, size = 0x800, scoped, tag = 'output window, operand 1']
    #allocation11 [shape = 's32[2]{0}', space=sflag, size = 0x8, scoped, tag = 'scoped memory for tpu_custom_call.1']
    %11 = vsyncpa [#allocation5], 0
    %s12 = scalar_lea.sflag [#allocation5], 1
    %13 = vsyncpa %s12, 0
    %14 = vsyncpa [#allocation8], 0
    %15 = vsyncpa [#allocation6], 0
    %s16 = scalar_lea.sflag [#allocation6], 1
    %17 = vsyncpa %s16, 0
    %18 = vsyncpa [#allocation11], 0
    %s19 = scalar_lea.sflag [#allocation11], 1
    %20 = vsyncpa %s19, 0
    loop: start=0, step=1, limit=4
    $region2: #{tpu_custom_call.1} parent=1 // loop_pre_header
      _
    $region3: #{tpu_custom_call.1} parent=1 // loop_header
      %s22 = sphi 0, %s26
      %p23 = scmp.ge.s32.totalorder %s22, 4
      %s29 = sphi 0, %s41
      %s30 = sphi 0, %s37
      %s31 = sphi 0, %s29
      %s32 = sphi 0, %s30
      %s33 = sphi 0, %s31
      %s34 = sphi 0, %s32
      %s44 = sphi 0, %s46
      %s47 = sphi 0, %s44
      %s48 = sphi 0, %s47
      %s64 = sphi 0, %s48
      %s68 = sphi 0, %s68
      %s70 = sphi 0, %s68
      %s71 = sphi 0, %s70
      %s85 = sphi 0, %s71
      %s89 = sphi 0, %s89
      %s91 = sphi 0, %s89
      %s92 = sphi 0, %s91
      %s106 = sphi 0, %s92
      %s112 = sphi 0, %s114
      %s115 = sphi 0, %s112
      %s116 = sphi 0, %s115
      %s132 = sphi 0, %s116
      %s140 = sphi 0, %s142
      %s143 = sphi 0, %s140
      %s144 = sphi 0, %s143
      %s160 = sphi 0, %s144
      %s168 = sphi 0, %s170
      %s171 = sphi 0, %s168
      %s172 = sphi 0, %s171
      %s188 = sphi 0, %s172
    $region4: #{tpu_custom_call.1} parent=1 // loop_header_branch
      %25 = sbr.rel (%p23) target = $region8
    $region5: #{tpu_custom_call.1} parent=1 // loop_body
      %s27 = ssub.s32 %s22, 1
      %s28 = ssub.s32 %s22, 2
      %s35 = sadd.s32 1, %s30
      %p36 = scmp.ge.s32.totalorder %s35, 1
      %s37 = scalar_select %p36, 0, %s35
      %s38 = sadd.s32 1, %s29
      %s39 = scalar_select %p36, %s38, %s29
      %p40 = scmp.ge.s32.totalorder %s39, 2
      %s41 = scalar_select %p40, 0, %s39
      %s42 = ssub.s32 %s29, %s41
      %p43 = scmp.eq.s32.totalorder %s42, 0
      %s45 = sadd.s32 %s44, 1
      %s46 = scalar_select %p43, %s44, %s45
      %p49 = pneg %p43
      %p50 = scmp.eq.s32.totalorder %s22, 1
      %p51 = por %p49, %p50
      %p52 = scmp.ne.s32.totalorder %s44, %s47
      %p53 = scmp.eq.s32.totalorder %s22, 0
      %p54 = por %p52, %p53
      %p55 = scmp.ne.s32.totalorder %s44, %s47
      %p56 = scmp.eq.s32.totalorder %s27, 1
      %p57 = por %p55, %p56
      %p58 = scmp.ne.s32.totalorder %s47, %s48
      %p59 = scmp.eq.s32.totalorder %s27, 0
      %p60 = por %p58, %p59
      %p61 = scmp.ne.s32.totalorder %s47, %s48
      %p62 = scmp.eq.s32.totalorder %s28, 1
      %p63 = por %p61, %p62
      %p65 = scmp.ne.s32.totalorder %s48, %s64
      %p66 = scmp.eq.s32.totalorder %s28, 0
      %p67 = por %p65, %p66
      %s69 = sadd.s32 %s68, 1
      %p72 = scmp.eq.s32.totalorder %s22, 1
      %p73 = scmp.ne.s32.totalorder %s68, %s70
      %p74 = scmp.eq.s32.totalorder %s22, 0
      %p75 = por %p73, %p74
      %p76 = scmp.ne.s32.totalorder %s68, %s70
      %p77 = scmp.eq.s32.totalorder %s27, 1
      %p78 = por %p76, %p77
      %p79 = scmp.ne.s32.totalorder %s70, %s71
      %p80 = scmp.eq.s32.totalorder %s27, 0
      %p81 = por %p79, %p80
      %p82 = scmp.ne.s32.totalorder %s70, %s71
      %p83 = scmp.eq.s32.totalorder %s28, 1
      %p84 = por %p82, %p83
      %p86 = scmp.ne.s32.totalorder %s71, %s85
      %p87 = scmp.eq.s32.totalorder %s28, 0
      %p88 = por %p86, %p87
      %s90 = sadd.s32 %s89, 1
      %p93 = scmp.eq.s32.totalorder %s22, 1
      %p94 = scmp.ne.s32.totalorder %s89, %s91
      %p95 = scmp.eq.s32.totalorder %s22, 0
      %p96 = por %p94, %p95
      %p97 = scmp.ne.s32.totalorder %s89, %s91
      %p98 = scmp.eq.s32.totalorder %s27, 1
      %p99 = por %p97, %p98
      %p100 = scmp.ne.s32.totalorder %s91, %s92
      %p101 = scmp.eq.s32.totalorder %s27, 0
      %p102 = por %p100, %p101
      %p103 = scmp.ne.s32.totalorder %s91, %s92
      %p104 = scmp.eq.s32.totalorder %s28, 1
      %p105 = por %p103, %p104
      %p107 = scmp.ne.s32.totalorder %s92, %s106
      %p108 = scmp.eq.s32.totalorder %s28, 0
      %p109 = por %p107, %p108
      %s110 = ssub.s32 %s30, %s37
      %p111 = scmp.eq.s32.totalorder %s110, 0
      %s113 = sadd.s32 %s112, 1
      %s114 = scalar_select %p111, %s112, %s113
      %p117 = pneg %p111
      %p118 = scmp.eq.s32.totalorder %s22, 1
      %p119 = por %p117, %p118
      %p120 = scmp.ne.s32.totalorder %s112, %s115
      %p121 = scmp.eq.s32.totalorder %s22, 0
      %p122 = por %p120, %p121
      %p123 = scmp.ne.s32.totalorder %s112, %s115
      %p124 = scmp.eq.s32.totalorder %s27, 1
      %p125 = por %p123, %p124
      %p126 = scmp.ne.s32.totalorder %s115, %s116
      %p127 = scmp.eq.s32.totalorder %s27, 0
      %p128 = por %p126, %p127
      %p129 = scmp.ne.s32.totalorder %s115, %s116
      %p130 = scmp.eq.s32.totalorder %s28, 1
      %p131 = por %p129, %p130
      %p133 = scmp.ne.s32.totalorder %s116, %s132
      %p134 = scmp.eq.s32.totalorder %s28, 0
      %p135 = por %p133, %p134
      %s136 = ssub.s32 %s29, %s41
      %s137 = ssub.s32 %s30, %s37
      %s138 = sor.u32 %s136, %s137
      %p139 = scmp.eq.s32.totalorder %s138, 0
      %s141 = sadd.s32 %s140, 1
      %s142 = scalar_select %p139, %s140, %s141
      %p145 = pneg %p139
      %p146 = scmp.eq.s32.totalorder %s22, 1
      %p147 = por %p145, %p146
      %p148 = scmp.ne.s32.totalorder %s140, %s143
      %p149 = scmp.eq.s32.totalorder %s22, 0
      %p150 = por %p148, %p149
      %p151 = scmp.ne.s32.totalorder %s140, %s143
      %p152 = scmp.eq.s32.totalorder %s27, 1
      %p153 = por %p151, %p152
      %p154 = scmp.ne.s32.totalorder %s143, %s144
      %p155 = scmp.eq.s32.totalorder %s27, 0
      %p156 = por %p154, %p155
      %p157 = scmp.ne.s32.totalorder %s143, %s144
      %p158 = scmp.eq.s32.totalorder %s28, 1
      %p159 = por %p157, %p158
      %p161 = scmp.ne.s32.totalorder %s144, %s160
      %p162 = scmp.eq.s32.totalorder %s28, 0
      %p163 = por %p161, %p162
      %s164 = ssub.s32 %s29, %s41
      %s165 = ssub.s32 %s30, %s37
      %s166 = sor.u32 %s164, %s165
      %p167 = scmp.eq.s32.totalorder %s166, 0
      %s169 = sadd.s32 %s168, 1
      %s170 = scalar_select %p167, %s168, %s169
      %p173 = pneg %p167
      %p174 = scmp.eq.s32.totalorder %s22, 1
      %p175 = por %p173, %p174
      %p176 = scmp.ne.s32.totalorder %s168, %s171
      %p177 = scmp.eq.s32.totalorder %s22, 0
      %p178 = por %p176, %p177
      %p179 = scmp.ne.s32.totalorder %s168, %s171
      %p180 = scmp.eq.s32.totalorder %s27, 1
      %p181 = por %p179, %p180
      %p182 = scmp.ne.s32.totalorder %s171, %s172
      %p183 = scmp.eq.s32.totalorder %s27, 0
      %p184 = por %p182, %p183
      %p185 = scmp.ne.s32.totalorder %s171, %s172
      %p186 = scmp.eq.s32.totalorder %s28, 1
      %p187 = por %p185, %p186
      %p189 = scmp.ne.s32.totalorder %s172, %s188
      %p190 = scmp.eq.s32.totalorder %s28, 0
      %p191 = por %p189, %p190
      %p192 = scmp.le.s32.totalorder 1, %s22
      %p193 = scmp.lt.s32.totalorder %s22, 3
      %p194 = pnand %p192, %p193
      %p195 = pneg %p194
      // Predicated region
      $region9: #{tpu_custom_call.1} parent=5 // pred_check
        _
      $region10: #{tpu_custom_call.1} parent=5 // pred_check_branch
        %197 = sbr.rel (%p194) target = $region12
      $region11: #{tpu_custom_call.1} parent=5 // pred_region
        %s198 = ssub.s32 %s22, 1
        // Predicated region
        $region13: #{tpu_custom_call.1} parent=11 // pred_check
          %p199 = pneg %p81
        $region14: #{tpu_custom_call.1} parent=11 // pred_check_branch
          %201 = sbr.rel (%p199) target = $region16
        $region15: #{tpu_custom_call.1} parent=11 // pred_region
          _
        $region16: #{tpu_custom_call.1} parent=11 // pred_fallthru
          _
        // Predicated region
        $region17: #{tpu_custom_call.1} parent=11 // pred_check
          %p202 = pneg %p102
        $region18: #{tpu_custom_call.1} parent=11 // pred_check_branch
          %204 = sbr.rel (%p202) target = $region20
        $region19: #{tpu_custom_call.1} parent=11 // pred_region
          _
        $region20: #{tpu_custom_call.1} parent=11 // pred_fallthru
          _
        // Predicated region
        $region21: #{tpu_custom_call.1} parent=11 // pred_check
          %p205 = pneg %p128
        $region22: #{tpu_custom_call.1} parent=11 // pred_check_branch
          %207 = sbr.rel (%p205) target = $region24
        $region23: #{tpu_custom_call.1} parent=11 // pred_region
          %s209 = ssub.s32 9216, 9216
          %210 = vsyncadd [#allocation8], %s209
          %s211 = smul.addr %s32, 64
          %s212 = scalar_lea.hbm %s3, %s211
          %s213 = sshll.u32 [#allocation7], 4
          %s214 = int_to_ptr.vmem [resolvable:$true] %s213
          %219 = dma.hbm_to_vmem [thread:$0]  %s212, 9216, %s214, [#allocation8], 64, 64, 4
        $region24: #{tpu_custom_call.1} parent=11 // pred_fallthru
          _
      $region12: #{tpu_custom_call.1} parent=5 // pred_fallthru
        _
      %p220 = scmp.lt.s32.totalorder %s22, 2
      // Predicated region
      $region25: #{tpu_custom_call.1} parent=5 // pred_check
        %p221 = pneg %p220
      $region26: #{tpu_custom_call.1} parent=5 // pred_check_branch
        %223 = sbr.rel (%p221) target = $region28
      $region27: #{tpu_custom_call.1} parent=5 // pred_region
        // Predicated region
        $region29: #{tpu_custom_call.1} parent=27 // pred_check
          %p224 = pneg %p54
        $region30: #{tpu_custom_call.1} parent=27 // pred_check_branch
          %226 = sbr.rel (%p224) target = $region32
        $region31: #{tpu_custom_call.1} parent=27 // pred_region
          %s227 = sand.u32 %s44, 1
          %s228 = scalar_lea.sflag [#allocation5], %s227
          %s229 = sand.u32 %s44, 1
          %s230 = smul.addr %s229, 256
          %s231 = scalar_lea.vmem [#allocation4], %s230
          %s233 = ssub.s32 4096, 4096
          %234 = vsyncadd %s228, %s233
          %s235 = smul.addr %s29, 32
          %s236 = smul.addr %s235, 128
          %s237 = scalar_lea.hbm %s0, %s236
          %s238 = sshll.u32 %s231, 4
          %s239 = int_to_ptr.vmem [resolvable:$true] %s238
          %244 = dma.hbm_to_vmem [thread:$0]  %s237, 4096, %s239, %s228, 128, 128, 8
        $region32: #{tpu_custom_call.1} parent=27 // pred_fallthru
          _
      $region28: #{tpu_custom_call.1} parent=5 // pred_fallthru
        _
      %p245 = scmp.le.s32.totalorder 1, %s22
      %p246 = scmp.lt.s32.totalorder %s22, 3
      %p247 = pnand %p245, %p246
      %p248 = pneg %p247
      // Predicated region
      $region33: #{tpu_custom_call.1} parent=5 // pred_check
        _
      $region34: #{tpu_custom_call.1} parent=5 // pred_check_branch
        %250 = sbr.rel (%p247) target = $region36
      $region35: #{tpu_custom_call.1} parent=5 // pred_region
        %s251 = ssub.s32 %s22, 1
        %s252 = sand.u32 %s47, 1
        %s253 = scalar_lea.sflag [#allocation5], %s252
        %s254 = sand.u32 %s47, 1
        %s255 = smul.addr %s254, 256
        %s256 = scalar_lea.vmem [#allocation4], %s255
        // Predicated region
        $region37: #{tpu_custom_call.1} parent=35 // pred_check
          %p257 = pneg %p60
        $region38: #{tpu_custom_call.1} parent=35 // pred_check_branch
          %259 = sbr.rel (%p257) target = $region40
        $region39: #{tpu_custom_call.1} parent=35 // pred_region
          %260 = dma.done %s253, 4096
        $region40: #{tpu_custom_call.1} parent=35 // pred_fallthru
          _
        // Predicated region
        $region41: #{tpu_custom_call.1} parent=35 // pred_check
          %p261 = pneg %p128
        $region42: #{tpu_custom_call.1} parent=35 // pred_check_branch
          %263 = sbr.rel (%p261) target = $region44
        $region43: #{tpu_custom_call.1} parent=35 // pred_region
          %264 = dma.done [#allocation8], 9216
        $region44: #{tpu_custom_call.1} parent=35 // pred_fallthru
          _
        %s265 = sand.u32 %s47, 1
        %s266 = scalar_lea.sflag [#allocation5], %s265
        %s267 = sand.u32 %s47, 1
        %s268 = smul.addr %s267, 256
        %s269 = scalar_lea.vmem [#allocation4], %s268
        %p270 = pneg %p60
        %p271 = pneg %p57
        %p272 = pneg %p81
        %p273 = pneg %p78
        %p274 = pneg %p102
        %p275 = pneg %p99
        %p276 = pneg %p128
        %p277 = pneg %p125
        %p278 = pneg %p156
        %p279 = pneg %p153
        %s280 = sand.u32 %s143, 1
        %s281 = scalar_lea.sflag [#allocation6], %s280
        %s282 = sand.u32 %s143, 1
        %s283 = smul.addr %s282, 128
        %s284 = scalar_lea.vmem [#allocation9], %s283
        %p285 = pneg %p184
        %p286 = pneg %p181
        %s287 = sand.u32 %s171, 1
        %s288 = scalar_lea.sflag [#allocation11], %s287
        %s289 = sand.u32 %s171, 1
        %s290 = smul.addr %s289, 2
        %s291 = scalar_lea.vmem [#allocation10], %s290
        %p293 = scmp.eq.s32.totalorder %s32, 0
        // Predicated region
        $region45: #{tpu_custom_call.1} parent=35 // pred_check
          %p294 = pneg %p293
        $region46: #{tpu_custom_call.1} parent=35 // pred_check_branch
          %296 = sbr.rel (%p294) target = $region48
        $region47: #{tpu_custom_call.1} parent=35 // pred_region
          %v297 = vld [vmem:[%s256] sm:$0xff]
          %v298 = vld [vmem:[%s256 + $0x8] sm:$0xff]
          %v299 = vld [vmem:[%s256 + $0x10] sm:$0xff]
          %v300 = vld [vmem:[%s256 + $0x18] sm:$0xff]
          %v301 = vld [vmem:[%s256 + $0x20] sm:$0xff]
          %v302 = vld [vmem:[%s256 + $0x28] sm:$0xff]
          %v303 = vld [vmem:[%s256 + $0x30] sm:$0xff]
          %v304 = vld [vmem:[%s256 + $0x38] sm:$0xff]
          %v305 = vld [vmem:[%s256 + $0x40] sm:$0xff]
          %v306 = vld [vmem:[%s256 + $0x48] sm:$0xff]
          %v307 = vld [vmem:[%s256 + $0x50] sm:$0xff]
          %v308 = vld [vmem:[%s256 + $0x58] sm:$0xff]
          %v309 = vld [vmem:[%s256 + $0x60] sm:$0xff]
          %v310 = vld [vmem:[%s256 + $0x68] sm:$0xff]
          %v311 = vld [vmem:[%s256 + $0x70] sm:$0xff]
          %v312 = vld [vmem:[%s256 + $0x78] sm:$0xff]
          %v313 = vld [vmem:[%s256 + $0x80] sm:$0xff]
          %v314 = vld [vmem:[%s256 + $0x88] sm:$0xff]
          %v315 = vld [vmem:[%s256 + $0x90] sm:$0xff]
          %v316 = vld [vmem:[%s256 + $0x98] sm:$0xff]
          %v317 = vld [vmem:[%s256 + $0xa0] sm:$0xff]
          %v318 = vld [vmem:[%s256 + $0xa8] sm:$0xff]
          %v319 = vld [vmem:[%s256 + $0xb0] sm:$0xff]
          %v320 = vld [vmem:[%s256 + $0xb8] sm:$0xff]
          %v321 = vld [vmem:[%s256 + $0xc0] sm:$0xff]
          %v322 = vld [vmem:[%s256 + $0xc8] sm:$0xff]
          %v323 = vld [vmem:[%s256 + $0xd0] sm:$0xff]
          %v324 = vld [vmem:[%s256 + $0xd8] sm:$0xff]
          %v325 = vld [vmem:[%s256 + $0xe0] sm:$0xff]
          %v326 = vld [vmem:[%s256 + $0xe8] sm:$0xff]
          %v327 = vld [vmem:[%s256 + $0xf0] sm:$0xff]
          %v328 = vld [vmem:[%s256 + $0xf8] sm:$0xff]
          %v329 = vld [vmem:[%s1] sm:$0x1]
          %v330 = vld [vmem:[%s2] sm:$0x1]
          %v332 = vlaneseq
          %v333 = vshrl.u32 %v332, 7
          %v334 = vsub.s32 0, %v333
          %v335 = vrot.slane %v329, %v334
          %v337 = vmul.f32 %v297, %v335
          %v338 = vmul.f32 %v298, %v335
          %v339 = vmul.f32 %v299, %v335
          %v340 = vmul.f32 %v300, %v335
          %v341 = vmul.f32 %v301, %v335
          %v342 = vmul.f32 %v302, %v335
          %v343 = vmul.f32 %v303, %v335
          %v344 = vmul.f32 %v304, %v335
          %v345 = vmul.f32 %v305, %v335
          %v346 = vmul.f32 %v306, %v335
          %v347 = vmul.f32 %v307, %v335
          %v348 = vmul.f32 %v308, %v335
          %v349 = vmul.f32 %v309, %v335
          %v350 = vmul.f32 %v310, %v335
          %v351 = vmul.f32 %v311, %v335
          %v352 = vmul.f32 %v312, %v335
          %v353 = vmul.f32 %v313, %v335
          %v354 = vmul.f32 %v314, %v335
          %v355 = vmul.f32 %v315, %v335
          %v356 = vmul.f32 %v316, %v335
          %v357 = vmul.f32 %v317, %v335
          %v358 = vmul.f32 %v318, %v335
          %v359 = vmul.f32 %v319, %v335
          %v360 = vmul.f32 %v320, %v335
          %v361 = vmul.f32 %v321, %v335
          %v362 = vmul.f32 %v322, %v335
          %v363 = vmul.f32 %v323, %v335
          %v364 = vmul.f32 %v324, %v335
          %v365 = vmul.f32 %v325, %v335
          %v366 = vmul.f32 %v326, %v335
          %v367 = vmul.f32 %v327, %v335
          %v368 = vmul.f32 %v328, %v335
          %v370 = vlaneseq
          %v371 = vshrl.u32 %v370, 7
          %v372 = vsub.s32 0, %v371
          %v373 = vrot.slane %v330, %v372
          %v375 = vadd.f32 %v337, %v373
          %v376 = vadd.f32 %v338, %v373
          %v377 = vadd.f32 %v339, %v373
          %v378 = vadd.f32 %v340, %v373
          %v379 = vadd.f32 %v341, %v373
          %v380 = vadd.f32 %v342, %v373
          %v381 = vadd.f32 %v343, %v373
          %v382 = vadd.f32 %v344, %v373
          %v383 = vadd.f32 %v345, %v373
          %v384 = vadd.f32 %v346, %v373
          %v385 = vadd.f32 %v347, %v373
          %v386 = vadd.f32 %v348, %v373
          %v387 = vadd.f32 %v349, %v373
          %v388 = vadd.f32 %v350, %v373
          %v389 = vadd.f32 %v351, %v373
          %v390 = vadd.f32 %v352, %v373
          %v391 = vadd.f32 %v353, %v373
          %v392 = vadd.f32 %v354, %v373
          %v393 = vadd.f32 %v355, %v373
          %v394 = vadd.f32 %v356, %v373
          %v395 = vadd.f32 %v357, %v373
          %v396 = vadd.f32 %v358, %v373
          %v397 = vadd.f32 %v359, %v373
          %v398 = vadd.f32 %v360, %v373
          %v399 = vadd.f32 %v361, %v373
          %v400 = vadd.f32 %v362, %v373
          %v401 = vadd.f32 %v363, %v373
          %v402 = vadd.f32 %v364, %v373
          %v403 = vadd.f32 %v365, %v373
          %v404 = vadd.f32 %v366, %v373
          %v405 = vadd.f32 %v367, %v373
          %v406 = vadd.f32 %v368, %v373
          %v407 = vmax.f32 %v375, 0.0
          %v408 = vmax.f32 %v376, 0.0
          %v409 = vmax.f32 %v377, 0.0
          %v410 = vmax.f32 %v378, 0.0
          %v411 = vmax.f32 %v379, 0.0
          %v412 = vmax.f32 %v380, 0.0
          %v413 = vmax.f32 %v381, 0.0
          %v414 = vmax.f32 %v382, 0.0
          %v415 = vmax.f32 %v383, 0.0
          %v416 = vmax.f32 %v384, 0.0
          %v417 = vmax.f32 %v385, 0.0
          %v418 = vmax.f32 %v386, 0.0
          %v419 = vmax.f32 %v387, 0.0
          %v420 = vmax.f32 %v388, 0.0
          %v421 = vmax.f32 %v389, 0.0
          %v422 = vmax.f32 %v390, 0.0
          %v423 = vmax.f32 %v391, 0.0
          %v424 = vmax.f32 %v392, 0.0
          %v425 = vmax.f32 %v393, 0.0
          %v426 = vmax.f32 %v394, 0.0
          %v427 = vmax.f32 %v395, 0.0
          %v428 = vmax.f32 %v396, 0.0
          %v429 = vmax.f32 %v397, 0.0
          %v430 = vmax.f32 %v398, 0.0
          %v431 = vmax.f32 %v399, 0.0
          %v432 = vmax.f32 %v400, 0.0
          %v433 = vmax.f32 %v401, 0.0
          %v434 = vmax.f32 %v402, 0.0
          %v435 = vmax.f32 %v403, 0.0
          %v436 = vmax.f32 %v404, 0.0
          %v437 = vmax.f32 %v405, 0.0
          %v438 = vmax.f32 %v406, 0.0
          %v439 = vpack.c.bf16 %v408, %v407
          %v440 = vpack.c.bf16 %v410, %v409
          %v441 = vpack.c.bf16 %v412, %v411
          %v442 = vpack.c.bf16 %v414, %v413
          %v443 = vpack.c.bf16 %v416, %v415
          %v444 = vpack.c.bf16 %v418, %v417
          %v445 = vpack.c.bf16 %v420, %v419
          %v446 = vpack.c.bf16 %v422, %v421
          %v447 = vpack.c.bf16 %v424, %v423
          %v448 = vpack.c.bf16 %v426, %v425
          %v449 = vpack.c.bf16 %v428, %v427
          %v450 = vpack.c.bf16 %v430, %v429
          %v451 = vpack.c.bf16 %v432, %v431
          %v452 = vpack.c.bf16 %v434, %v433
          %v453 = vpack.c.bf16 %v436, %v435
          %v454 = vpack.c.bf16 %v438, %v437
          %455 = vst [vmem:[#allocation2] sm:$0xf] 0
          %456 = vst [vmem:[#allocation2 + $0x4] sm:$0xf] 0
          %457 = vst [vmem:[#allocation2 + $0x8] sm:$0x1] 0
          %s458 = scalar_lea.vmem [#allocation2], 204
          %459 = vst [vmem:[%s458] sm:$0xf] 0
          %460 = vst [vmem:[%s458 + $0x4] sm:$0xf] 0
          %461 = vst [vmem:[%s458 + $0x8] sm:$0x1] 0
          %vm462 = vcmask 1040384
          %vm463 = vsmask.f32 256
          %vm464 = vmand %vm462, %vm463
          %v465 = vld [vmem:[#allocation2] sm:$0x1]
          %v466 = vsel %vm464, 0, %v465
          %467 = vst [vmem:[#allocation2] sm:$0x1] %v466
          %v468 = vld [vmem:[#allocation2 + $0xc] sm:$0x1]
          %v469 = vsel %vm464, 0, %v468
          %470 = vst [vmem:[#allocation2 + $0xc] sm:$0x1] %v469
          %v471 = vld [vmem:[#allocation2 + $0x18] sm:$0x1]
          %v472 = vsel %vm464, 0, %v471
          %473 = vst [vmem:[#allocation2 + $0x18] sm:$0x1] %v472
          %v474 = vld [vmem:[#allocation2 + $0x24] sm:$0x1]
          %v475 = vsel %vm464, 0, %v474
          %476 = vst [vmem:[#allocation2 + $0x24] sm:$0x1] %v475
          %v477 = vld [vmem:[#allocation2 + $0x30] sm:$0x1]
          %v478 = vsel %vm464, 0, %v477
          %479 = vst [vmem:[#allocation2 + $0x30] sm:$0x1] %v478
          %v480 = vld [vmem:[#allocation2 + $0x3c] sm:$0x1]
          %v481 = vsel %vm464, 0, %v480
          %482 = vst [vmem:[#allocation2 + $0x3c] sm:$0x1] %v481
          %v483 = vld [vmem:[#allocation2 + $0x48] sm:$0x1]
          %v484 = vsel %vm464, 0, %v483
          %485 = vst [vmem:[#allocation2 + $0x48] sm:$0x1] %v484
          %v486 = vld [vmem:[#allocation2 + $0x54] sm:$0x1]
          %v487 = vsel %vm464, 0, %v486
          %488 = vst [vmem:[#allocation2 + $0x54] sm:$0x1] %v487
          %v489 = vld [vmem:[#allocation2 + $0x60] sm:$0x1]
          %v490 = vsel %vm464, 0, %v489
          %491 = vst [vmem:[#allocation2 + $0x60] sm:$0x1] %v490
          %v492 = vld [vmem:[#allocation2 + $0x6c] sm:$0x1]
          %v493 = vsel %vm464, 0, %v492
          %494 = vst [vmem:[#allocation2 + $0x6c] sm:$0x1] %v493
          %v495 = vld [vmem:[#allocation2 + $0x78] sm:$0x1]
          %v496 = vsel %vm464, 0, %v495
          %497 = vst [vmem:[#allocation2 + $0x78] sm:$0x1] %v496
          %v498 = vld [vmem:[#allocation2 + $0x84] sm:$0x1]
          %v499 = vsel %vm464, 0, %v498
          %500 = vst [vmem:[#allocation2 + $0x84] sm:$0x1] %v499
          %v501 = vld [vmem:[#allocation2 + $0x90] sm:$0x1]
          %v502 = vsel %vm464, 0, %v501
          %503 = vst [vmem:[#allocation2 + $0x90] sm:$0x1] %v502
          %v504 = vld [vmem:[#allocation2 + $0x9c] sm:$0x1]
          %v505 = vsel %vm464, 0, %v504
          %506 = vst [vmem:[#allocation2 + $0x9c] sm:$0x1] %v505
          %v507 = vld [vmem:[#allocation2 + $0xa8] sm:$0x1]
          %v508 = vsel %vm464, 0, %v507
          %509 = vst [vmem:[#allocation2 + $0xa8] sm:$0x1] %v508
          %v510 = vld [vmem:[#allocation2 + $0xb4] sm:$0x1]
          %v511 = vsel %vm464, 0, %v510
          %512 = vst [vmem:[#allocation2 + $0xb4] sm:$0x1] %v511
          %v513 = vld [vmem:[#allocation2 + $0xc0] sm:$0x1]
          %v514 = vsel %vm464, 0, %v513
          %515 = vst [vmem:[#allocation2 + $0xc0] sm:$0x1] %v514
          %v516 = vld [vmem:[#allocation2 + $0xcc] sm:$0x1]
          %v517 = vsel %vm464, 0, %v516
          %518 = vst [vmem:[#allocation2 + $0xcc] sm:$0x1] %v517
          %vm519 = vsmask.f32 7938
          %vm520 = vmand %vm462, %vm519
          %v521 = vld [vmem:[#allocation2 + $0x8] sm:$0x1]
          %v522 = vsel %vm520, 0, %v521
          %523 = vst [vmem:[#allocation2 + $0x8] sm:$0x1] %v522
          %v524 = vld [vmem:[#allocation2 + $0x14] sm:$0x1]
          %v525 = vsel %vm520, 0, %v524
          %526 = vst [vmem:[#allocation2 + $0x14] sm:$0x1] %v525
          %v527 = vld [vmem:[#allocation2 + $0x20] sm:$0x1]
          %v528 = vsel %vm520, 0, %v527
          %529 = vst [vmem:[#allocation2 + $0x20] sm:$0x1] %v528
          %v530 = vld [vmem:[#allocation2 + $0x2c] sm:$0x1]
          %v531 = vsel %vm520, 0, %v530
          %532 = vst [vmem:[#allocation2 + $0x2c] sm:$0x1] %v531
          %v533 = vld [vmem:[#allocation2 + $0x38] sm:$0x1]
          %v534 = vsel %vm520, 0, %v533
          %535 = vst [vmem:[#allocation2 + $0x38] sm:$0x1] %v534
          %v536 = vld [vmem:[#allocation2 + $0x44] sm:$0x1]
          %v537 = vsel %vm520, 0, %v536
          %538 = vst [vmem:[#allocation2 + $0x44] sm:$0x1] %v537
          %v539 = vld [vmem:[#allocation2 + $0x50] sm:$0x1]
          %v540 = vsel %vm520, 0, %v539
          %541 = vst [vmem:[#allocation2 + $0x50] sm:$0x1] %v540
          %v542 = vld [vmem:[#allocation2 + $0x5c] sm:$0x1]
          %v543 = vsel %vm520, 0, %v542
          %544 = vst [vmem:[#allocation2 + $0x5c] sm:$0x1] %v543
          %v545 = vld [vmem:[#allocation2 + $0x68] sm:$0x1]
          %v546 = vsel %vm520, 0, %v545
          %547 = vst [vmem:[#allocation2 + $0x68] sm:$0x1] %v546
          %v548 = vld [vmem:[#allocation2 + $0x74] sm:$0x1]
          %v549 = vsel %vm520, 0, %v548
          %550 = vst [vmem:[#allocation2 + $0x74] sm:$0x1] %v549
          %v551 = vld [vmem:[#allocation2 + $0x80] sm:$0x1]
          %v552 = vsel %vm520, 0, %v551
          %553 = vst [vmem:[#allocation2 + $0x80] sm:$0x1] %v552
          %v554 = vld [vmem:[#allocation2 + $0x8c] sm:$0x1]
          %v555 = vsel %vm520, 0, %v554
          %556 = vst [vmem:[#allocation2 + $0x8c] sm:$0x1] %v555
          %v557 = vld [vmem:[#allocation2 + $0x98] sm:$0x1]
          %v558 = vsel %vm520, 0, %v557
          %559 = vst [vmem:[#allocation2 + $0x98] sm:$0x1] %v558
          %v560 = vld [vmem:[#allocation2 + $0xa4] sm:$0x1]
          %v561 = vsel %vm520, 0, %v560
          %562 = vst [vmem:[#allocation2 + $0xa4] sm:$0x1] %v561
          %v563 = vld [vmem:[#allocation2 + $0xb0] sm:$0x1]
          %v564 = vsel %vm520, 0, %v563
          %565 = vst [vmem:[#allocation2 + $0xb0] sm:$0x1] %v564
          %v566 = vld [vmem:[#allocation2 + $0xbc] sm:$0x1]
          %v567 = vsel %vm520, 0, %v566
          %568 = vst [vmem:[#allocation2 + $0xbc] sm:$0x1] %v567
          %v569 = vld [vmem:[#allocation2 + $0xc8] sm:$0x1]
          %v570 = vsel %vm520, 0, %v569
          %571 = vst [vmem:[#allocation2 + $0xc8] sm:$0x1] %v570
          %v572 = vld [vmem:[#allocation2 + $0xd4] sm:$0x1]
          %v573 = vsel %vm520, 0, %v572
          %574 = vst [vmem:[#allocation2 + $0xd4] sm:$0x1] %v573
          %v591 = vunpack.c.l.b16 %v439
          %v592 = vunpack.c.h.b16 %v439
          %v593 = vunpack.c.l.b16 %v440
          %v594 = vunpack.c.h.b16 %v440
          %v595 = vunpack.c.l.b16 %v441
          %v596 = vunpack.c.h.b16 %v441
          %v597 = vunpack.c.l.b16 %v442
          %v598 = vunpack.c.h.b16 %v442
          %v599 = vunpack.c.l.b16 %v443
          %v600 = vunpack.c.h.b16 %v443
          %v601 = vunpack.c.l.b16 %v444
          %v602 = vunpack.c.h.b16 %v444
          %v603 = vunpack.c.l.b16 %v445
          %v604 = vunpack.c.h.b16 %v445
          %v605 = vunpack.c.l.b16 %v446
          %v606 = vunpack.c.h.b16 %v446
          %v607 = vunpack.c.l.b16 %v447
          %v608 = vunpack.c.h.b16 %v447
          %v609 = vunpack.c.l.b16 %v448
          %v610 = vunpack.c.h.b16 %v448
          %v611 = vunpack.c.l.b16 %v449
          %v612 = vunpack.c.h.b16 %v449
          %v613 = vunpack.c.l.b16 %v450
          %v614 = vunpack.c.h.b16 %v450
          %v615 = vunpack.c.l.b16 %v451
          %v616 = vunpack.c.h.b16 %v451
          %v617 = vunpack.c.l.b16 %v452
          %v618 = vunpack.c.h.b16 %v452
          %v619 = vunpack.c.l.b16 %v453
          %v620 = vunpack.c.h.b16 %v453
          %v621 = vunpack.c.l.b16 %v454
          %v622 = vunpack.c.h.b16 %v454
          %v623 = vpack.c.b16 %v591, %v591
          %v624 = vpack.c.b16 %v592, %v592
          %v625 = vpack.c.b16 %v593, %v593
          %v626 = vpack.c.b16 %v594, %v594
          %v627 = vpack.c.b16 %v595, %v595
          %v628 = vpack.c.b16 %v596, %v596
          %v629 = vpack.c.b16 %v597, %v597
          %v630 = vpack.c.b16 %v598, %v598
          %v631 = vpack.c.b16 %v599, %v599
          %v632 = vpack.c.b16 %v600, %v600
          %v633 = vpack.c.b16 %v601, %v601
          %v634 = vpack.c.b16 %v602, %v602
          %v635 = vpack.c.b16 %v603, %v603
          %v636 = vpack.c.b16 %v604, %v604
          %v637 = vpack.c.b16 %v605, %v605
          %v638 = vpack.c.b16 %v606, %v606
          %v639 = vpack.c.b16 %v607, %v607
          %v640 = vpack.c.b16 %v608, %v608
          %v641 = vpack.c.b16 %v609, %v609
          %v642 = vpack.c.b16 %v610, %v610
          %v643 = vpack.c.b16 %v611, %v611
          %v644 = vpack.c.b16 %v612, %v612
          %v645 = vpack.c.b16 %v613, %v613
          %v646 = vpack.c.b16 %v614, %v614
          %v647 = vpack.c.b16 %v615, %v615
          %v648 = vpack.c.b16 %v616, %v616
          %v649 = vpack.c.b16 %v617, %v617
          %v650 = vpack.c.b16 %v618, %v618
          %v651 = vpack.c.b16 %v619, %v619
          %v652 = vpack.c.b16 %v620, %v620
          %v653 = vpack.c.b16 %v621, %v621
          %v654 = vpack.c.b16 %v622, %v622
          %vm655 = vsmask.f32 4368
          %vm656 = vmor %vm463, %vm655
          %v658 = vshrl.u32 %v623, 16
          %v660 = vrot.slane %v658, 7
          %v661 = vshll.u32 %v623, 16
          %v663 = vor.u32 %v660, %v661
          %v664 = vrot.slane %v660, 4
          %v666 = vshrl.u32 %v624, 16
          %v668 = vrot.slane %v666, 7
          %v669 = vshll.u32 %v624, 16
          %v671 = vor.u32 %v668, %v669
          %v672 = vsel %vm656, %v664, %v671
          %v673 = vrot.slane %v668, 4
          %v675 = vshrl.u32 %v625, 16
          %v677 = vrot.slane %v675, 7
          %v678 = vshll.u32 %v625, 16
          %v680 = vor.u32 %v677, %v678
          %v681 = vrot.slane %v677, 4
          %v683 = vshrl.u32 %v626, 16
          %v685 = vrot.slane %v683, 7
          %v686 = vshll.u32 %v626, 16
          %v688 = vor.u32 %v685, %v686
          %v689 = vsel %vm656, %v681, %v688
          %v690 = vrot.slane %v685, 4
          %v692 = vshrl.u32 %v627, 16
          %v694 = vrot.slane %v692, 7
          %v695 = vshll.u32 %v627, 16
          %v697 = vor.u32 %v694, %v695
          %v698 = vrot.slane %v694, 4
          %v700 = vshrl.u32 %v628, 16
          %v702 = vrot.slane %v700, 7
          %v703 = vshll.u32 %v628, 16
          %v705 = vor.u32 %v702, %v703
          %v706 = vsel %vm656, %v698, %v705
          %v707 = vrot.slane %v702, 4
          %v709 = vshrl.u32 %v629, 16
          %v711 = vrot.slane %v709, 7
          %v712 = vshll.u32 %v629, 16
          %v714 = vor.u32 %v711, %v712
          %v715 = vrot.slane %v711, 4
          %v717 = vshrl.u32 %v630, 16
          %v719 = vrot.slane %v717, 7
          %v720 = vshll.u32 %v630, 16
          %v722 = vor.u32 %v719, %v720
          %v723 = vsel %vm656, %v715, %v722
          %v724 = vrot.slane %v719, 4
          %v726 = vshrl.u32 %v631, 16
          %v728 = vrot.slane %v726, 7
          %v729 = vshll.u32 %v631, 16
          %v731 = vor.u32 %v728, %v729
          %v732 = vrot.slane %v728, 4
          %v734 = vshrl.u32 %v632, 16
          %v736 = vrot.slane %v734, 7
          %v737 = vshll.u32 %v632, 16
          %v739 = vor.u32 %v736, %v737
          %v740 = vsel %vm656, %v732, %v739
          %v741 = vrot.slane %v736, 4
          %v743 = vshrl.u32 %v633, 16
          %v745 = vrot.slane %v743, 7
          %v746 = vshll.u32 %v633, 16
          %v748 = vor.u32 %v745, %v746
          %v749 = vrot.slane %v745, 4
          %v751 = vshrl.u32 %v634, 16
          %v753 = vrot.slane %v751, 7
          %v754 = vshll.u32 %v634, 16
          %v756 = vor.u32 %v753, %v754
          %v757 = vsel %vm656, %v749, %v756
          %v758 = vrot.slane %v753, 4
          %v760 = vshrl.u32 %v635, 16
          %v762 = vrot.slane %v760, 7
          %v763 = vshll.u32 %v635, 16
          %v765 = vor.u32 %v762, %v763
          %v766 = vrot.slane %v762, 4
          %v768 = vshrl.u32 %v636, 16
          %v770 = vrot.slane %v768, 7
          %v771 = vshll.u32 %v636, 16
          %v773 = vor.u32 %v770, %v771
          %v774 = vsel %vm656, %v766, %v773
          %v775 = vrot.slane %v770, 4
          %v777 = vshrl.u32 %v637, 16
          %v779 = vrot.slane %v777, 7
          %v780 = vshll.u32 %v637, 16
          %v782 = vor.u32 %v779, %v780
          %v783 = vrot.slane %v779, 4
          %v785 = vshrl.u32 %v638, 16
          %v787 = vrot.slane %v785, 7
          %v788 = vshll.u32 %v638, 16
          %v790 = vor.u32 %v787, %v788
          %v791 = vsel %vm656, %v783, %v790
          %v792 = vrot.slane %v787, 4
          %v794 = vshrl.u32 %v639, 16
          %v796 = vrot.slane %v794, 7
          %v797 = vshll.u32 %v639, 16
          %v799 = vor.u32 %v796, %v797
          %v800 = vrot.slane %v796, 4
          %v802 = vshrl.u32 %v640, 16
          %v804 = vrot.slane %v802, 7
          %v805 = vshll.u32 %v640, 16
          %v807 = vor.u32 %v804, %v805
          %v808 = vsel %vm656, %v800, %v807
          %v809 = vrot.slane %v804, 4
          %v811 = vshrl.u32 %v641, 16
          %v813 = vrot.slane %v811, 7
          %v814 = vshll.u32 %v641, 16
          %v816 = vor.u32 %v813, %v814
          %v817 = vrot.slane %v813, 4
          %v819 = vshrl.u32 %v642, 16
          %v821 = vrot.slane %v819, 7
          %v822 = vshll.u32 %v642, 16
          %v824 = vor.u32 %v821, %v822
          %v825 = vsel %vm656, %v817, %v824
          %v826 = vrot.slane %v821, 4
          %v828 = vshrl.u32 %v643, 16
          %v830 = vrot.slane %v828, 7
          %v831 = vshll.u32 %v643, 16
          %v833 = vor.u32 %v830, %v831
          %v834 = vrot.slane %v830, 4
          %v836 = vshrl.u32 %v644, 16
          %v838 = vrot.slane %v836, 7
          %v839 = vshll.u32 %v644, 16
          %v841 = vor.u32 %v838, %v839
          %v842 = vsel %vm656, %v834, %v841
          %v843 = vrot.slane %v838, 4
          %v845 = vshrl.u32 %v645, 16
          %v847 = vrot.slane %v845, 7
          %v848 = vshll.u32 %v645, 16
          %v850 = vor.u32 %v847, %v848
          %v851 = vrot.slane %v847, 4
          %v853 = vshrl.u32 %v646, 16
          %v855 = vrot.slane %v853, 7
          %v856 = vshll.u32 %v646, 16
          %v858 = vor.u32 %v855, %v856
          %v859 = vsel %vm656, %v851, %v858
          %v860 = vrot.slane %v855, 4
          %v862 = vshrl.u32 %v647, 16
          %v864 = vrot.slane %v862, 7
          %v865 = vshll.u32 %v647, 16
          %v867 = vor.u32 %v864, %v865
          %v868 = vrot.slane %v864, 4
          %v870 = vshrl.u32 %v648, 16
          %v872 = vrot.slane %v870, 7
          %v873 = vshll.u32 %v648, 16
          %v875 = vor.u32 %v872, %v873
          %v876 = vsel %vm656, %v868, %v875
          %v877 = vrot.slane %v872, 4
          %v879 = vshrl.u32 %v649, 16
          %v881 = vrot.slane %v879, 7
          %v882 = vshll.u32 %v649, 16
          %v884 = vor.u32 %v881, %v882
          %v885 = vrot.slane %v881, 4
          %v887 = vshrl.u32 %v650, 16
          %v889 = vrot.slane %v887, 7
          %v890 = vshll.u32 %v650, 16
          %v892 = vor.u32 %v889, %v890
          %v893 = vsel %vm656, %v885, %v892
          %v894 = vrot.slane %v889, 4
          %v896 = vshrl.u32 %v651, 16
          %v898 = vrot.slane %v896, 7
          %v899 = vshll.u32 %v651, 16
          %v901 = vor.u32 %v898, %v899
          %v902 = vrot.slane %v898, 4
          %v904 = vshrl.u32 %v652, 16
          %v906 = vrot.slane %v904, 7
          %v907 = vshll.u32 %v652, 16
          %v909 = vor.u32 %v906, %v907
          %v910 = vsel %vm656, %v902, %v909
          %v911 = vrot.slane %v906, 4
          %v913 = vshrl.u32 %v653, 16
          %v915 = vrot.slane %v913, 7
          %v916 = vshll.u32 %v653, 16
          %v918 = vor.u32 %v915, %v916
          %v919 = vrot.slane %v915, 4
          %v921 = vshrl.u32 %v654, 16
          %v923 = vrot.slane %v921, 7
          %v924 = vshll.u32 %v654, 16
          %v926 = vor.u32 %v923, %v924
          %v927 = vsel %vm656, %v919, %v926
          %v928 = vrot.slane %v923, 4
          %s977 = scalar_lea.vmem [#allocation2], 12
          %vm978 = vcmask 1043456
          %vm979 = vmand %vm978, %vm519
          %v980 = vld [vmem:[%s977] sm:$0xf]
          %v981 = vsel %vm979, %v663, %v980
          %982 = vst [vmem:[%s977] sm:$0xf] %v981
          %983 = vst [vmem:[%s977 + $0x4] sm:$0xf] %v672
          %v984 = vld [vmem:[%s977 + $0x8] sm:$0x1]
          %v985 = vsel %vm464, %v673, %v984
          %986 = vst [vmem:[%s977 + $0x8] sm:$0x1] %v985
          %v987 = vld [vmem:[%s977 + $0xc] sm:$0xf]
          %v988 = vsel %vm979, %v680, %v987
          %989 = vst [vmem:[%s977 + $0xc] sm:$0xf] %v988
          %990 = vst [vmem:[%s977 + $0x10] sm:$0xf] %v689
          %v991 = vld [vmem:[%s977 + $0x14] sm:$0x1]
          %v992 = vsel %vm464, %v690, %v991
          %993 = vst [vmem:[%s977 + $0x14] sm:$0x1] %v992
          %v994 = vld [vmem:[%s977 + $0x18] sm:$0xf]
          %v995 = vsel %vm979, %v697, %v994
          %996 = vst [vmem:[%s977 + $0x18] sm:$0xf] %v995
          %997 = vst [vmem:[%s977 + $0x1c] sm:$0xf] %v706
          %v998 = vld [vmem:[%s977 + $0x20] sm:$0x1]
          %v999 = vsel %vm464, %v707, %v998
          %1000 = vst [vmem:[%s977 + $0x20] sm:$0x1] %v999
          %v1001 = vld [vmem:[%s977 + $0x24] sm:$0xf]
          %v1002 = vsel %vm979, %v714, %v1001
          %1003 = vst [vmem:[%s977 + $0x24] sm:$0xf] %v1002
          %1004 = vst [vmem:[%s977 + $0x28] sm:$0xf] %v723
          %v1005 = vld [vmem:[%s977 + $0x2c] sm:$0x1]
          %v1006 = vsel %vm464, %v724, %v1005
          %1007 = vst [vmem:[%s977 + $0x2c] sm:$0x1] %v1006
          %v1008 = vld [vmem:[%s977 + $0x30] sm:$0xf]
          %v1009 = vsel %vm979, %v731, %v1008
          %1010 = vst [vmem:[%s977 + $0x30] sm:$0xf] %v1009
          %1011 = vst [vmem:[%s977 + $0x34] sm:$0xf] %v740
          %v1012 = vld [vmem:[%s977 + $0x38] sm:$0x1]
          %v1013 = vsel %vm464, %v741, %v1012
          %1014 = vst [vmem:[%s977 + $0x38] sm:$0x1] %v1013
          %v1015 = vld [vmem:[%s977 + $0x3c] sm:$0xf]
          %v1016 = vsel %vm979, %v748, %v1015
          %1017 = vst [vmem:[%s977 + $0x3c] sm:$0xf] %v1016
          %1018 = vst [vmem:[%s977 + $0x40] sm:$0xf] %v757
          %v1019 = vld [vmem:[%s977 + $0x44] sm:$0x1]
          %v1020 = vsel %vm464, %v758, %v1019
          %1021 = vst [vmem:[%s977 + $0x44] sm:$0x1] %v1020
          %v1022 = vld [vmem:[%s977 + $0x48] sm:$0xf]
          %v1023 = vsel %vm979, %v765, %v1022
          %1024 = vst [vmem:[%s977 + $0x48] sm:$0xf] %v1023
          %1025 = vst [vmem:[%s977 + $0x4c] sm:$0xf] %v774
          %v1026 = vld [vmem:[%s977 + $0x50] sm:$0x1]
          %v1027 = vsel %vm464, %v775, %v1026
          %1028 = vst [vmem:[%s977 + $0x50] sm:$0x1] %v1027
          %v1029 = vld [vmem:[%s977 + $0x54] sm:$0xf]
          %v1030 = vsel %vm979, %v782, %v1029
          %1031 = vst [vmem:[%s977 + $0x54] sm:$0xf] %v1030
          %1032 = vst [vmem:[%s977 + $0x58] sm:$0xf] %v791
          %v1033 = vld [vmem:[%s977 + $0x5c] sm:$0x1]
          %v1034 = vsel %vm464, %v792, %v1033
          %1035 = vst [vmem:[%s977 + $0x5c] sm:$0x1] %v1034
          %v1036 = vld [vmem:[%s977 + $0x60] sm:$0xf]
          %v1037 = vsel %vm979, %v799, %v1036
          %1038 = vst [vmem:[%s977 + $0x60] sm:$0xf] %v1037
          %1039 = vst [vmem:[%s977 + $0x64] sm:$0xf] %v808
          %v1040 = vld [vmem:[%s977 + $0x68] sm:$0x1]
          %v1041 = vsel %vm464, %v809, %v1040
          %1042 = vst [vmem:[%s977 + $0x68] sm:$0x1] %v1041
          %v1043 = vld [vmem:[%s977 + $0x6c] sm:$0xf]
          %v1044 = vsel %vm979, %v816, %v1043
          %1045 = vst [vmem:[%s977 + $0x6c] sm:$0xf] %v1044
          %1046 = vst [vmem:[%s977 + $0x70] sm:$0xf] %v825
          %v1047 = vld [vmem:[%s977 + $0x74] sm:$0x1]
          %v1048 = vsel %vm464, %v826, %v1047
          %1049 = vst [vmem:[%s977 + $0x74] sm:$0x1] %v1048
          %v1050 = vld [vmem:[%s977 + $0x78] sm:$0xf]
          %v1051 = vsel %vm979, %v833, %v1050
          %1052 = vst [vmem:[%s977 + $0x78] sm:$0xf] %v1051
          %1053 = vst [vmem:[%s977 + $0x7c] sm:$0xf] %v842
          %v1054 = vld [vmem:[%s977 + $0x80] sm:$0x1]
          %v1055 = vsel %vm464, %v843, %v1054
          %1056 = vst [vmem:[%s977 + $0x80] sm:$0x1] %v1055
          %v1057 = vld [vmem:[%s977 + $0x84] sm:$0xf]
          %v1058 = vsel %vm979, %v850, %v1057
          %1059 = vst [vmem:[%s977 + $0x84] sm:$0xf] %v1058
          %1060 = vst [vmem:[%s977 + $0x88] sm:$0xf] %v859
          %v1061 = vld [vmem:[%s977 + $0x8c] sm:$0x1]
          %v1062 = vsel %vm464, %v860, %v1061
          %1063 = vst [vmem:[%s977 + $0x8c] sm:$0x1] %v1062
          %v1064 = vld [vmem:[%s977 + $0x90] sm:$0xf]
          %v1065 = vsel %vm979, %v867, %v1064
          %1066 = vst [vmem:[%s977 + $0x90] sm:$0xf] %v1065
          %1067 = vst [vmem:[%s977 + $0x94] sm:$0xf] %v876
          %v1068 = vld [vmem:[%s977 + $0x98] sm:$0x1]
          %v1069 = vsel %vm464, %v877, %v1068
          %1070 = vst [vmem:[%s977 + $0x98] sm:$0x1] %v1069
          %v1071 = vld [vmem:[%s977 + $0x9c] sm:$0xf]
          %v1072 = vsel %vm979, %v884, %v1071
          %1073 = vst [vmem:[%s977 + $0x9c] sm:$0xf] %v1072
          %1074 = vst [vmem:[%s977 + $0xa0] sm:$0xf] %v893
          %v1075 = vld [vmem:[%s977 + $0xa4] sm:$0x1]
          %v1076 = vsel %vm464, %v894, %v1075
          %1077 = vst [vmem:[%s977 + $0xa4] sm:$0x1] %v1076
          %v1078 = vld [vmem:[%s977 + $0xa8] sm:$0xf]
          %v1079 = vsel %vm979, %v901, %v1078
          %1080 = vst [vmem:[%s977 + $0xa8] sm:$0xf] %v1079
          %1081 = vst [vmem:[%s977 + $0xac] sm:$0xf] %v910
          %v1082 = vld [vmem:[%s977 + $0xb0] sm:$0x1]
          %v1083 = vsel %vm464, %v911, %v1082
          %1084 = vst [vmem:[%s977 + $0xb0] sm:$0x1] %v1083
          %v1085 = vld [vmem:[%s977 + $0xb4] sm:$0xf]
          %v1086 = vsel %vm979, %v918, %v1085
          %1087 = vst [vmem:[%s977 + $0xb4] sm:$0xf] %v1086
          %1088 = vst [vmem:[%s977 + $0xb8] sm:$0xf] %v927
          %v1089 = vld [vmem:[%s977 + $0xbc] sm:$0x1]
          %v1090 = vsel %vm464, %v928, %v1089
          %1091 = vst [vmem:[%s977 + $0xbc] sm:$0x1] %v1090
          %v1092 = vld [vmem:[#allocation2] sm:$0xf]
          %v1093 = vld [vmem:[#allocation2 + $0x4] sm:$0xf]
          %v1094 = vld [vmem:[#allocation2 + $0xc] sm:$0xf]
          %v1095 = vld [vmem:[#allocation2 + $0x10] sm:$0xf]
          %v1096 = vld [vmem:[#allocation2 + $0x18] sm:$0xf]
          %v1097 = vld [vmem:[#allocation2 + $0x1c] sm:$0xf]
          %v1098 = vld [vmem:[#allocation2 + $0x24] sm:$0xf]
          %v1099 = vld [vmem:[#allocation2 + $0x28] sm:$0xf]
          %v1100 = vld [vmem:[#allocation2 + $0x30] sm:$0xf]
          %v1101 = vld [vmem:[#allocation2 + $0x34] sm:$0xf]
          %v1102 = vld [vmem:[#allocation2 + $0x3c] sm:$0xf]
          %v1103 = vld [vmem:[#allocation2 + $0x40] sm:$0xf]
          %v1104 = vld [vmem:[#allocation2 + $0x48] sm:$0xf]
          %v1105 = vld [vmem:[#allocation2 + $0x4c] sm:$0xf]
          %v1106 = vld [vmem:[#allocation2 + $0x54] sm:$0xf]
          %v1107 = vld [vmem:[#allocation2 + $0x58] sm:$0xf]
          %v1108 = vld [vmem:[#allocation2 + $0x60] sm:$0xf]
          %v1109 = vld [vmem:[#allocation2 + $0x64] sm:$0xf]
          %v1110 = vld [vmem:[#allocation2 + $0x6c] sm:$0xf]
          %v1111 = vld [vmem:[#allocation2 + $0x70] sm:$0xf]
          %v1112 = vld [vmem:[#allocation2 + $0x78] sm:$0xf]
          %v1113 = vld [vmem:[#allocation2 + $0x7c] sm:$0xf]
          %v1114 = vld [vmem:[#allocation2 + $0x84] sm:$0xf]
          %v1115 = vld [vmem:[#allocation2 + $0x88] sm:$0xf]
          %v1116 = vld [vmem:[#allocation2 + $0x90] sm:$0xf]
          %v1117 = vld [vmem:[#allocation2 + $0x94] sm:$0xf]
          %v1118 = vld [vmem:[#allocation2 + $0x9c] sm:$0xf]
          %v1119 = vld [vmem:[#allocation2 + $0xa0] sm:$0xf]
          %v1120 = vld [vmem:[#allocation2 + $0xa8] sm:$0xf]
          %v1121 = vld [vmem:[#allocation2 + $0xac] sm:$0xf]
          %v1122 = vld [vmem:[#allocation2 + $0xb4] sm:$0xf]
          %v1123 = vld [vmem:[#allocation2 + $0xb8] sm:$0xf]
          %v1156 = vunpack.c.l.b16 %v1092
          %v1157 = vunpack.c.l.b16 %v1093
          %v1158 = vunpack.c.l.b16 %v1094
          %v1159 = vunpack.c.l.b16 %v1095
          %v1160 = vunpack.c.l.b16 %v1096
          %v1161 = vunpack.c.l.b16 %v1097
          %v1162 = vunpack.c.l.b16 %v1098
          %v1163 = vunpack.c.l.b16 %v1099
          %v1164 = vunpack.c.l.b16 %v1100
          %v1165 = vunpack.c.l.b16 %v1101
          %v1166 = vunpack.c.l.b16 %v1102
          %v1167 = vunpack.c.l.b16 %v1103
          %v1168 = vunpack.c.l.b16 %v1104
          %v1169 = vunpack.c.l.b16 %v1105
          %v1170 = vunpack.c.l.b16 %v1106
          %v1171 = vunpack.c.l.b16 %v1107
          %v1172 = vunpack.c.l.b16 %v1108
          %v1173 = vunpack.c.l.b16 %v1109
          %v1174 = vunpack.c.l.b16 %v1110
          %v1175 = vunpack.c.l.b16 %v1111
          %v1176 = vunpack.c.l.b16 %v1112
          %v1177 = vunpack.c.l.b16 %v1113
          %v1178 = vunpack.c.l.b16 %v1114
          %v1179 = vunpack.c.l.b16 %v1115
          %v1180 = vunpack.c.l.b16 %v1116
          %v1181 = vunpack.c.l.b16 %v1117
          %v1182 = vunpack.c.l.b16 %v1118
          %v1183 = vunpack.c.l.b16 %v1119
          %v1184 = vunpack.c.l.b16 %v1120
          %v1185 = vunpack.c.l.b16 %v1121
          %v1186 = vunpack.c.l.b16 %v1122
          %v1187 = vunpack.c.l.b16 %v1123
          %v1188 = vpack.c.b16 %v1157, %v1156
          %v1189 = vpack.c.b16 %v1159, %v1158
          %v1190 = vpack.c.b16 %v1161, %v1160
          %v1191 = vpack.c.b16 %v1163, %v1162
          %v1192 = vpack.c.b16 %v1165, %v1164
          %v1193 = vpack.c.b16 %v1167, %v1166
          %v1194 = vpack.c.b16 %v1169, %v1168
          %v1195 = vpack.c.b16 %v1171, %v1170
          %v1196 = vpack.c.b16 %v1173, %v1172
          %v1197 = vpack.c.b16 %v1175, %v1174
          %v1198 = vpack.c.b16 %v1177, %v1176
          %v1199 = vpack.c.b16 %v1179, %v1178
          %v1200 = vpack.c.b16 %v1181, %v1180
          %v1201 = vpack.c.b16 %v1183, %v1182
          %v1202 = vpack.c.b16 %v1185, %v1184
          %v1203 = vpack.c.b16 %v1187, %v1186
          %1220 = vst [vmem:[#allocation3] sm:$0xff] %v1188
          %1221 = vst [vmem:[#allocation3 + $0x48] sm:$0xff] %v1189
          %1222 = vst [vmem:[#allocation3 + $0x90] sm:$0xff] %v1190
          %1223 = vst [vmem:[#allocation3 + $0xd8] sm:$0xff] %v1191
          %1224 = vst [vmem:[#allocation3 + $0x120] sm:$0xff] %v1192
          %1225 = vst [vmem:[#allocation3 + $0x168] sm:$0xff] %v1193
          %1226 = vst [vmem:[#allocation3 + $0x1b0] sm:$0xff] %v1194
          %1227 = vst [vmem:[#allocation3 + $0x1f8] sm:$0xff] %v1195
          %1228 = vst [vmem:[#allocation3 + $0x240] sm:$0xff] %v1196
          %1229 = vst [vmem:[#allocation3 + $0x288] sm:$0xff] %v1197
          %1230 = vst [vmem:[#allocation3 + $0x2d0] sm:$0xff] %v1198
          %1231 = vst [vmem:[#allocation3 + $0x318] sm:$0xff] %v1199
          %1232 = vst [vmem:[#allocation3 + $0x360] sm:$0xff] %v1200
          %1233 = vst [vmem:[#allocation3 + $0x3a8] sm:$0xff] %v1201
          %1234 = vst [vmem:[#allocation3 + $0x3f0] sm:$0xff] %v1202
          %1235 = vst [vmem:[#allocation3 + $0x438] sm:$0xff] %v1203
          %v1236 = vld [vmem:[#allocation2] sm:$0xf]
          %v1237 = vld [vmem:[#allocation2 + $0x4] sm:$0xf]
          %v1238 = vld [vmem:[#allocation2 + $0x8] sm:$0x1]
          %v1239 = vld [vmem:[#allocation2 + $0xc] sm:$0xf]
          %v1240 = vld [vmem:[#allocation2 + $0x10] sm:$0xf]
          %v1241 = vld [vmem:[#allocation2 + $0x14] sm:$0x1]
          %v1242 = vld [vmem:[#allocation2 + $0x18] sm:$0xf]
          %v1243 = vld [vmem:[#allocation2 + $0x1c] sm:$0xf]
          %v1244 = vld [vmem:[#allocation2 + $0x20] sm:$0x1]
          %v1245 = vld [vmem:[#allocation2 + $0x24] sm:$0xf]
          %v1246 = vld [vmem:[#allocation2 + $0x28] sm:$0xf]
          %v1247 = vld [vmem:[#allocation2 + $0x2c] sm:$0x1]
          %v1248 = vld [vmem:[#allocation2 + $0x30] sm:$0xf]
          %v1249 = vld [vmem:[#allocation2 + $0x34] sm:$0xf]
          %v1250 = vld [vmem:[#allocation2 + $0x38] sm:$0x1]
          %v1251 = vld [vmem:[#allocation2 + $0x3c] sm:$0xf]
          %v1252 = vld [vmem:[#allocation2 + $0x40] sm:$0xf]
          %v1253 = vld [vmem:[#allocation2 + $0x44] sm:$0x1]
          %v1254 = vld [vmem:[#allocation2 + $0x48] sm:$0xf]
          %v1255 = vld [vmem:[#allocation2 + $0x4c] sm:$0xf]
          %v1256 = vld [vmem:[#allocation2 + $0x50] sm:$0x1]
          %v1257 = vld [vmem:[#allocation2 + $0x54] sm:$0xf]
          %v1258 = vld [vmem:[#allocation2 + $0x58] sm:$0xf]
          %v1259 = vld [vmem:[#allocation2 + $0x5c] sm:$0x1]
          %v1260 = vld [vmem:[#allocation2 + $0x60] sm:$0xf]
          %v1261 = vld [vmem:[#allocation2 + $0x64] sm:$0xf]
          %v1262 = vld [vmem:[#allocation2 + $0x68] sm:$0x1]
          %v1263 = vld [vmem:[#allocation2 + $0x6c] sm:$0xf]
          %v1264 = vld [vmem:[#allocation2 + $0x70] sm:$0xf]
          %v1265 = vld [vmem:[#allocation2 + $0x74] sm:$0x1]
          %v1266 = vld [vmem:[#allocation2 + $0x78] sm:$0xf]
          %v1267 = vld [vmem:[#allocation2 + $0x7c] sm:$0xf]
          %v1268 = vld [vmem:[#allocation2 + $0x80] sm:$0x1]
          %v1269 = vld [vmem:[#allocation2 + $0x84] sm:$0xf]
          %v1270 = vld [vmem:[#allocation2 + $0x88] sm:$0xf]
          %v1271 = vld [vmem:[#allocation2 + $0x8c] sm:$0x1]
          %v1272 = vld [vmem:[#allocation2 + $0x90] sm:$0xf]
          %v1273 = vld [vmem:[#allocation2 + $0x94] sm:$0xf]
          %v1274 = vld [vmem:[#allocation2 + $0x98] sm:$0x1]
          %v1275 = vld [vmem:[#allocation2 + $0x9c] sm:$0xf]
          %v1276 = vld [vmem:[#allocation2 + $0xa0] sm:$0xf]
          %v1277 = vld [vmem:[#allocation2 + $0xa4] sm:$0x1]
          %v1278 = vld [vmem:[#allocation2 + $0xa8] sm:$0xf]
          %v1279 = vld [vmem:[#allocation2 + $0xac] sm:$0xf]
          %v1280 = vld [vmem:[#allocation2 + $0xb0] sm:$0x1]
          %v1281 = vld [vmem:[#allocation2 + $0xb4] sm:$0xf]
          %v1282 = vld [vmem:[#allocation2 + $0xb8] sm:$0xf]
          %v1283 = vld [vmem:[#allocation2 + $0xbc] sm:$0x1]
          %vm1284 = vsmask.f32 3328
          %vm1285 = vsmask.f32 7440
          %vm1286 = vmor %vm1284, %vm1285
          %v1288 = vshrl.u32 %v1236, 16
          %v1290 = vrot.slane %v1288, 4
          %v1291 = vshll.u32 %v1236, 16
          %v1293 = vrot.slane %v1291, 5
          %v1294 = vor.u32 %v1290, %v1293
          %v1295 = vrot.slane %v1294, 4
          %v1297 = vshll.u32 %v1237, 16
          %v1299 = vrot.slane %v1297, 5
          %v1300 = vsel %vm1286, %v1295, %v1299
          %v1301 = vshrl.u32 %v1237, 16
          %v1303 = vrot.slane %v1301, 4
          %v1304 = vor.u32 %v1303, %v1299
          %v1305 = vrot.slane %v1304, 4
          %v1307 = vshll.u32 %v1238, 16
          %v1309 = vrot.slane %v1307, 5
          %v1310 = vsel %vm1286, %v1305, %v1309
          %v1312 = vshrl.u32 %v1239, 16
          %v1314 = vrot.slane %v1312, 4
          %v1315 = vshll.u32 %v1239, 16
          %v1317 = vrot.slane %v1315, 5
          %v1318 = vor.u32 %v1314, %v1317
          %v1319 = vrot.slane %v1318, 4
          %v1321 = vshll.u32 %v1240, 16
          %v1323 = vrot.slane %v1321, 5
          %v1324 = vsel %vm1286, %v1319, %v1323
          %v1325 = vshrl.u32 %v1240, 16
          %v1327 = vrot.slane %v1325, 4
          %v1328 = vor.u32 %v1327, %v1323
          %v1329 = vrot.slane %v1328, 4
          %v1331 = vshll.u32 %v1241, 16
          %v1333 = vrot.slane %v1331, 5
          %v1334 = vsel %vm1286, %v1329, %v1333
          %v1336 = vshrl.u32 %v1242, 16
          %v1338 = vrot.slane %v1336, 4
          %v1339 = vshll.u32 %v1242, 16
          %v1341 = vrot.slane %v1339, 5
          %v1342 = vor.u32 %v1338, %v1341
          %v1343 = vrot.slane %v1342, 4
          %v1345 = vshll.u32 %v1243, 16
          %v1347 = vrot.slane %v1345, 5
          %v1348 = vsel %vm1286, %v1343, %v1347
          %v1349 = vshrl.u32 %v1243, 16
          %v1351 = vrot.slane %v1349, 4
          %v1352 = vor.u32 %v1351, %v1347
          %v1353 = vrot.slane %v1352, 4
          %v1355 = vshll.u32 %v1244, 16
          %v1357 = vrot.slane %v1355, 5
          %v1358 = vsel %vm1286, %v1353, %v1357
          %v1360 = vshrl.u32 %v1245, 16
          %v1362 = vrot.slane %v1360, 4
          %v1363 = vshll.u32 %v1245, 16
          %v1365 = vrot.slane %v1363, 5
          %v1366 = vor.u32 %v1362, %v1365
          %v1367 = vrot.slane %v1366, 4
          %v1369 = vshll.u32 %v1246, 16
          %v1371 = vrot.slane %v1369, 5
          %v1372 = vsel %vm1286, %v1367, %v1371
          %v1373 = vshrl.u32 %v1246, 16
          %v1375 = vrot.slane %v1373, 4
          %v1376 = vor.u32 %v1375, %v1371
          %v1377 = vrot.slane %v1376, 4
          %v1379 = vshll.u32 %v1247, 16
          %v1381 = vrot.slane %v1379, 5
          %v1382 = vsel %vm1286, %v1377, %v1381
          %v1384 = vshrl.u32 %v1248, 16
          %v1386 = vrot.slane %v1384, 4
          %v1387 = vshll.u32 %v1248, 16
          %v1389 = vrot.slane %v1387, 5
          %v1390 = vor.u32 %v1386, %v1389
          %v1391 = vrot.slane %v1390, 4
          %v1393 = vshll.u32 %v1249, 16
          %v1395 = vrot.slane %v1393, 5
          %v1396 = vsel %vm1286, %v1391, %v1395
          %v1397 = vshrl.u32 %v1249, 16
          %v1399 = vrot.slane %v1397, 4
          %v1400 = vor.u32 %v1399, %v1395
          %v1401 = vrot.slane %v1400, 4
          %v1403 = vshll.u32 %v1250, 16
          %v1405 = vrot.slane %v1403, 5
          %v1406 = vsel %vm1286, %v1401, %v1405
          %v1408 = vshrl.u32 %v1251, 16
          %v1410 = vrot.slane %v1408, 4
          %v1411 = vshll.u32 %v1251, 16
          %v1413 = vrot.slane %v1411, 5
          %v1414 = vor.u32 %v1410, %v1413
          %v1415 = vrot.slane %v1414, 4
          %v1417 = vshll.u32 %v1252, 16
          %v1419 = vrot.slane %v1417, 5
          %v1420 = vsel %vm1286, %v1415, %v1419
          %v1421 = vshrl.u32 %v1252, 16
          %v1423 = vrot.slane %v1421, 4
          %v1424 = vor.u32 %v1423, %v1419
          %v1425 = vrot.slane %v1424, 4
          %v1427 = vshll.u32 %v1253, 16
          %v1429 = vrot.slane %v1427, 5
          %v1430 = vsel %vm1286, %v1425, %v1429
          %v1432 = vshrl.u32 %v1254, 16
          %v1434 = vrot.slane %v1432, 4
          %v1435 = vshll.u32 %v1254, 16
          %v1437 = vrot.slane %v1435, 5
          %v1438 = vor.u32 %v1434, %v1437
          %v1439 = vrot.slane %v1438, 4
          %v1441 = vshll.u32 %v1255, 16
          %v1443 = vrot.slane %v1441, 5
          %v1444 = vsel %vm1286, %v1439, %v1443
          %v1445 = vshrl.u32 %v1255, 16
          %v1447 = vrot.slane %v1445, 4
          %v1448 = vor.u32 %v1447, %v1443
          %v1449 = vrot.slane %v1448, 4
          %v1451 = vshll.u32 %v1256, 16
          %v1453 = vrot.slane %v1451, 5
          %v1454 = vsel %vm1286, %v1449, %v1453
          %v1456 = vshrl.u32 %v1257, 16
          %v1458 = vrot.slane %v1456, 4
          %v1459 = vshll.u32 %v1257, 16
          %v1461 = vrot.slane %v1459, 5
          %v1462 = vor.u32 %v1458, %v1461
          %v1463 = vrot.slane %v1462, 4
          %v1465 = vshll.u32 %v1258, 16
          %v1467 = vrot.slane %v1465, 5
          %v1468 = vsel %vm1286, %v1463, %v1467
          %v1469 = vshrl.u32 %v1258, 16
          %v1471 = vrot.slane %v1469, 4
          %v1472 = vor.u32 %v1471, %v1467
          %v1473 = vrot.slane %v1472, 4
          %v1475 = vshll.u32 %v1259, 16
          %v1477 = vrot.slane %v1475, 5
          %v1478 = vsel %vm1286, %v1473, %v1477
          %v1480 = vshrl.u32 %v1260, 16
          %v1482 = vrot.slane %v1480, 4
          %v1483 = vshll.u32 %v1260, 16
          %v1485 = vrot.slane %v1483, 5
          %v1486 = vor.u32 %v1482, %v1485
          %v1487 = vrot.slane %v1486, 4
          %v1489 = vshll.u32 %v1261, 16
          %v1491 = vrot.slane %v1489, 5
          %v1492 = vsel %vm1286, %v1487, %v1491
          %v1493 = vshrl.u32 %v1261, 16
          %v1495 = vrot.slane %v1493, 4
          %v1496 = vor.u32 %v1495, %v1491
          %v1497 = vrot.slane %v1496, 4
          %v1499 = vshll.u32 %v1262, 16
          %v1501 = vrot.slane %v1499, 5
          %v1502 = vsel %vm1286, %v1497, %v1501
          %v1504 = vshrl.u32 %v1263, 16
          %v1506 = vrot.slane %v1504, 4
          %v1507 = vshll.u32 %v1263, 16
          %v1509 = vrot.slane %v1507, 5
          %v1510 = vor.u32 %v1506, %v1509
          %v1511 = vrot.slane %v1510, 4
          %v1513 = vshll.u32 %v1264, 16
          %v1515 = vrot.slane %v1513, 5
          %v1516 = vsel %vm1286, %v1511, %v1515
          %v1517 = vshrl.u32 %v1264, 16
          %v1519 = vrot.slane %v1517, 4
          %v1520 = vor.u32 %v1519, %v1515
          %v1521 = vrot.slane %v1520, 4
          %v1523 = vshll.u32 %v1265, 16
          %v1525 = vrot.slane %v1523, 5
          %v1526 = vsel %vm1286, %v1521, %v1525
          %v1528 = vshrl.u32 %v1266, 16
          %v1530 = vrot.slane %v1528, 4
          %v1531 = vshll.u32 %v1266, 16
          %v1533 = vrot.slane %v1531, 5
          %v1534 = vor.u32 %v1530, %v1533
          %v1535 = vrot.slane %v1534, 4
          %v1537 = vshll.u32 %v1267, 16
          %v1539 = vrot.slane %v1537, 5
          %v1540 = vsel %vm1286, %v1535, %v1539
          %v1541 = vshrl.u32 %v1267, 16
          %v1543 = vrot.slane %v1541, 4
          %v1544 = vor.u32 %v1543, %v1539
          %v1545 = vrot.slane %v1544, 4
          %v1547 = vshll.u32 %v1268, 16
          %v1549 = vrot.slane %v1547, 5
          %v1550 = vsel %vm1286, %v1545, %v1549
          %v1552 = vshrl.u32 %v1269, 16
          %v1554 = vrot.slane %v1552, 4
          %v1555 = vshll.u32 %v1269, 16
          %v1557 = vrot.slane %v1555, 5
          %v1558 = vor.u32 %v1554, %v1557
          %v1559 = vrot.slane %v1558, 4
          %v1561 = vshll.u32 %v1270, 16
          %v1563 = vrot.slane %v1561, 5
          %v1564 = vsel %vm1286, %v1559, %v1563
          %v1565 = vshrl.u32 %v1270, 16
          %v1567 = vrot.slane %v1565, 4
          %v1568 = vor.u32 %v1567, %v1563
          %v1569 = vrot.slane %v1568, 4
          %v1571 = vshll.u32 %v1271, 16
          %v1573 = vrot.slane %v1571, 5
          %v1574 = vsel %vm1286, %v1569, %v1573
          %v1576 = vshrl.u32 %v1272, 16
          %v1578 = vrot.slane %v1576, 4
          %v1579 = vshll.u32 %v1272, 16
          %v1581 = vrot.slane %v1579, 5
          %v1582 = vor.u32 %v1578, %v1581
          %v1583 = vrot.slane %v1582, 4
          %v1585 = vshll.u32 %v1273, 16
          %v1587 = vrot.slane %v1585, 5
          %v1588 = vsel %vm1286, %v1583, %v1587
          %v1589 = vshrl.u32 %v1273, 16
          %v1591 = vrot.slane %v1589, 4
          %v1592 = vor.u32 %v1591, %v1587
          %v1593 = vrot.slane %v1592, 4
          %v1595 = vshll.u32 %v1274, 16
          %v1597 = vrot.slane %v1595, 5
          %v1598 = vsel %vm1286, %v1593, %v1597
          %v1600 = vshrl.u32 %v1275, 16
          %v1602 = vrot.slane %v1600, 4
          %v1603 = vshll.u32 %v1275, 16
          %v1605 = vrot.slane %v1603, 5
          %v1606 = vor.u32 %v1602, %v1605
          %v1607 = vrot.slane %v1606, 4
          %v1609 = vshll.u32 %v1276, 16
          %v1611 = vrot.slane %v1609, 5
          %v1612 = vsel %vm1286, %v1607, %v1611
          %v1613 = vshrl.u32 %v1276, 16
          %v1615 = vrot.slane %v1613, 4
          %v1616 = vor.u32 %v1615, %v1611
          %v1617 = vrot.slane %v1616, 4
          %v1619 = vshll.u32 %v1277, 16
          %v1621 = vrot.slane %v1619, 5
          %v1622 = vsel %vm1286, %v1617, %v1621
          %v1624 = vshrl.u32 %v1278, 16
          %v1626 = vrot.slane %v1624, 4
          %v1627 = vshll.u32 %v1278, 16
          %v1629 = vrot.slane %v1627, 5
          %v1630 = vor.u32 %v1626, %v1629
          %v1631 = vrot.slane %v1630, 4
          %v1633 = vshll.u32 %v1279, 16
          %v1635 = vrot.slane %v1633, 5
          %v1636 = vsel %vm1286, %v1631, %v1635
          %v1637 = vshrl.u32 %v1279, 16
          %v1639 = vrot.slane %v1637, 4
          %v1640 = vor.u32 %v1639, %v1635
          %v1641 = vrot.slane %v1640, 4
          %v1643 = vshll.u32 %v1280, 16
          %v1645 = vrot.slane %v1643, 5
          %v1646 = vsel %vm1286, %v1641, %v1645
          %v1648 = vshrl.u32 %v1281, 16
          %v1650 = vrot.slane %v1648, 4
          %v1651 = vshll.u32 %v1281, 16
          %v1653 = vrot.slane %v1651, 5
          %v1654 = vor.u32 %v1650, %v1653
          %v1655 = vrot.slane %v1654, 4
          %v1657 = vshll.u32 %v1282, 16
          %v1659 = vrot.slane %v1657, 5
          %v1660 = vsel %vm1286, %v1655, %v1659
          %v1661 = vshrl.u32 %v1282, 16
          %v1663 = vrot.slane %v1661, 4
          %v1664 = vor.u32 %v1663, %v1659
          %v1665 = vrot.slane %v1664, 4
          %v1667 = vshll.u32 %v1283, 16
          %v1669 = vrot.slane %v1667, 5
          %v1670 = vsel %vm1286, %v1665, %v1669
          %v1671 = vunpack.c.l.b16 %v1300
          %v1672 = vunpack.c.l.b16 %v1310
          %v1673 = vunpack.c.l.b16 %v1324
          %v1674 = vunpack.c.l.b16 %v1334
          %v1675 = vunpack.c.l.b16 %v1348
          %v1676 = vunpack.c.l.b16 %v1358
          %v1677 = vunpack.c.l.b16 %v1372
          %v1678 = vunpack.c.l.b16 %v1382
          %v1679 = vunpack.c.l.b16 %v1396
          %v1680 = vunpack.c.l.b16 %v1406
          %v1681 = vunpack.c.l.b16 %v1420
          %v1682 = vunpack.c.l.b16 %v1430
          %v1683 = vunpack.c.l.b16 %v1444
          %v1684 = vunpack.c.l.b16 %v1454
          %v1685 = vunpack.c.l.b16 %v1468
          %v1686 = vunpack.c.l.b16 %v1478
          %v1687 = vunpack.c.l.b16 %v1492
          %v1688 = vunpack.c.l.b16 %v1502
          %v1689 = vunpack.c.l.b16 %v1516
          %v1690 = vunpack.c.l.b16 %v1526
          %v1691 = vunpack.c.l.b16 %v1540
          %v1692 = vunpack.c.l.b16 %v1550
          %v1693 = vunpack.c.l.b16 %v1564
          %v1694 = vunpack.c.l.b16 %v1574
          %v1695 = vunpack.c.l.b16 %v1588
          %v1696 = vunpack.c.l.b16 %v1598
          %v1697 = vunpack.c.l.b16 %v1612
          %v1698 = vunpack.c.l.b16 %v1622
          %v1699 = vunpack.c.l.b16 %v1636
          %v1700 = vunpack.c.l.b16 %v1646
          %v1701 = vunpack.c.l.b16 %v1660
          %v1702 = vunpack.c.l.b16 %v1670
          %v1703 = vpack.c.b16 %v1672, %v1671
          %v1704 = vpack.c.b16 %v1674, %v1673
          %v1705 = vpack.c.b16 %v1676, %v1675
          %v1706 = vpack.c.b16 %v1678, %v1677
          %v1707 = vpack.c.b16 %v1680, %v1679
          %v1708 = vpack.c.b16 %v1682, %v1681
          %v1709 = vpack.c.b16 %v1684, %v1683
          %v1710 = vpack.c.b16 %v1686, %v1685
          %v1711 = vpack.c.b16 %v1688, %v1687
          %v1712 = vpack.c.b16 %v1690, %v1689
          %v1713 = vpack.c.b16 %v1692, %v1691
          %v1714 = vpack.c.b16 %v1694, %v1693
          %v1715 = vpack.c.b16 %v1696, %v1695
          %v1716 = vpack.c.b16 %v1698, %v1697
          %v1717 = vpack.c.b16 %v1700, %v1699
          %v1718 = vpack.c.b16 %v1702, %v1701
          %1735 = vst [vmem:[#allocation3 + $0x8] sm:$0xff] %v1703
          %1736 = vst [vmem:[#allocation3 + $0x50] sm:$0xff] %v1704
          %1737 = vst [vmem:[#allocation3 + $0x98] sm:$0xff] %v1705
          %1738 = vst [vmem:[#allocation3 + $0xe0] sm:$0xff] %v1706
          %1739 = vst [vmem:[#allocation3 + $0x128] sm:$0xff] %v1707
          %1740 = vst [vmem:[#allocation3 + $0x170] sm:$0xff] %v1708
          %1741 = vst [vmem:[#allocation3 + $0x1b8] sm:$0xff] %v1709
          %1742 = vst [vmem:[#allocation3 + $0x200] sm:$0xff] %v1710
          %1743 = vst [vmem:[#allocation3 + $0x248] sm:$0xff] %v1711
          %1744 = vst [vmem:[#allocation3 + $0x290] sm:$0xff] %v1712
          %1745 = vst [vmem:[#allocation3 + $0x2d8] sm:$0xff] %v1713
          %1746 = vst [vmem:[#allocation3 + $0x320] sm:$0xff] %v1714
          %1747 = vst [vmem:[#allocation3 + $0x368] sm:$0xff] %v1715
          %1748 = vst [vmem:[#allocation3 + $0x3b0] sm:$0xff] %v1716
          %1749 = vst [vmem:[#allocation3 + $0x3f8] sm:$0xff] %v1717
          %1750 = vst [vmem:[#allocation3 + $0x440] sm:$0xff] %v1718
          %v1751 = vld [vmem:[#allocation2] sm:$0xe]
          %v1752 = vld [vmem:[#allocation2 + $0x4] sm:$0xf]
          %v1753 = vld [vmem:[#allocation2 + $0x8] sm:$0x1]
          %v1754 = vld [vmem:[#allocation2 + $0xc] sm:$0xe]
          %v1755 = vld [vmem:[#allocation2 + $0x10] sm:$0xf]
          %v1756 = vld [vmem:[#allocation2 + $0x14] sm:$0x1]
          %v1757 = vld [vmem:[#allocation2 + $0x18] sm:$0xe]
          %v1758 = vld [vmem:[#allocation2 + $0x1c] sm:$0xf]
          %v1759 = vld [vmem:[#allocation2 + $0x20] sm:$0x1]
          %v1760 = vld [vmem:[#allocation2 + $0x24] sm:$0xe]
          %v1761 = vld [vmem:[#allocation2 + $0x28] sm:$0xf]
          %v1762 = vld [vmem:[#allocation2 + $0x2c] sm:$0x1]
          %v1763 = vld [vmem:[#allocation2 + $0x30] sm:$0xe]
          %v1764 = vld [vmem:[#allocation2 + $0x34] sm:$0xf]
          %v1765 = vld [vmem:[#allocation2 + $0x38] sm:$0x1]
          %v1766 = vld [vmem:[#allocation2 + $0x3c] sm:$0xe]
          %v1767 = vld [vmem:[#allocation2 + $0x40] sm:$0xf]
          %v1768 = vld [vmem:[#allocation2 + $0x44] sm:$0x1]
          %v1769 = vld [vmem:[#allocation2 + $0x48] sm:$0xe]
          %v1770 = vld [vmem:[#allocation2 + $0x4c] sm:$0xf]
          %v1771 = vld [vmem:[#allocation2 + $0x50] sm:$0x1]
          %v1772 = vld [vmem:[#allocation2 + $0x54] sm:$0xe]
          %v1773 = vld [vmem:[#allocation2 + $0x58] sm:$0xf]
          %v1774 = vld [vmem:[#allocation2 + $0x5c] sm:$0x1]
          %v1775 = vld [vmem:[#allocation2 + $0x60] sm:$0xe]
          %v1776 = vld [vmem:[#allocation2 + $0x64] sm:$0xf]
          %v1777 = vld [vmem:[#allocation2 + $0x68] sm:$0x1]
          %v1778 = vld [vmem:[#allocation2 + $0x6c] sm:$0xe]
          %v1779 = vld [vmem:[#allocation2 + $0x70] sm:$0xf]
          %v1780 = vld [vmem:[#allocation2 + $0x74] sm:$0x1]
          %v1781 = vld [vmem:[#allocation2 + $0x78] sm:$0xe]
          %v1782 = vld [vmem:[#allocation2 + $0x7c] sm:$0xf]
          %v1783 = vld [vmem:[#allocation2 + $0x80] sm:$0x1]
          %v1784 = vld [vmem:[#allocation2 + $0x84] sm:$0xe]
          %v1785 = vld [vmem:[#allocation2 + $0x88] sm:$0xf]
          %v1786 = vld [vmem:[#allocation2 + $0x8c] sm:$0x1]
          %v1787 = vld [vmem:[#allocation2 + $0x90] sm:$0xe]
          %v1788 = vld [vmem:[#allocation2 + $0x94] sm:$0xf]
          %v1789 = vld [vmem:[#allocation2 + $0x98] sm:$0x1]
          %v1790 = vld [vmem:[#allocation2 + $0x9c] sm:$0xe]
          %v1791 = vld [vmem:[#allocation2 + $0xa0] sm:$0xf]
          %v1792 = vld [vmem:[#allocation2 + $0xa4] sm:$0x1]
          %v1793 = vld [vmem:[#allocation2 + $0xa8] sm:$0xe]
          %v1794 = vld [vmem:[#allocation2 + $0xac] sm:$0xf]
          %v1795 = vld [vmem:[#allocation2 + $0xb0] sm:$0x1]
          %v1796 = vld [vmem:[#allocation2 + $0xb4] sm:$0xe]
          %v1797 = vld [vmem:[#allocation2 + $0xb8] sm:$0xf]
          %v1798 = vld [vmem:[#allocation2 + $0xbc] sm:$0x1]
          %vm1847 = vcmask 1042432
          %vm1848 = vcmask 1046532
          %vm1849 = vmor %vm1847, %vm1848
          %v1850 = vrot.slane %v1751, 5
          %v1851 = vrot.slane %v1850, 4
          %v1852 = vrot.slane %v1752, 5
          %v1853 = vsel %vm1849, %v1851, %v1852
          %v1854 = vrot.slane %v1852, 4
          %v1855 = vrot.slane %v1753, 5
          %v1856 = vsel %vm1849, %v1854, %v1855
          %v1857 = vrot.slane %v1754, 5
          %v1858 = vrot.slane %v1857, 4
          %v1859 = vrot.slane %v1755, 5
          %v1860 = vsel %vm1849, %v1858, %v1859
          %v1861 = vrot.slane %v1859, 4
          %v1862 = vrot.slane %v1756, 5
          %v1863 = vsel %vm1849, %v1861, %v1862
          %v1864 = vrot.slane %v1757, 5
          %v1865 = vrot.slane %v1864, 4
          %v1866 = vrot.slane %v1758, 5
          %v1867 = vsel %vm1849, %v1865, %v1866
          %v1868 = vrot.slane %v1866, 4
          %v1869 = vrot.slane %v1759, 5
          %v1870 = vsel %vm1849, %v1868, %v1869
          %v1871 = vrot.slane %v1760, 5
          %v1872 = vrot.slane %v1871, 4
          %v1873 = vrot.slane %v1761, 5
          %v1874 = vsel %vm1849, %v1872, %v1873
          %v1875 = vrot.slane %v1873, 4
          %v1876 = vrot.slane %v1762, 5
          %v1877 = vsel %vm1849, %v1875, %v1876
          %v1878 = vrot.slane %v1763, 5
          %v1879 = vrot.slane %v1878, 4
          %v1880 = vrot.slane %v1764, 5
          %v1881 = vsel %vm1849, %v1879, %v1880
          %v1882 = vrot.slane %v1880, 4
          %v1883 = vrot.slane %v1765, 5
          %v1884 = vsel %vm1849, %v1882, %v1883
          %v1885 = vrot.slane %v1766, 5
          %v1886 = vrot.slane %v1885, 4
          %v1887 = vrot.slane %v1767, 5
          %v1888 = vsel %vm1849, %v1886, %v1887
          %v1889 = vrot.slane %v1887, 4
          %v1890 = vrot.slane %v1768, 5
          %v1891 = vsel %vm1849, %v1889, %v1890
          %v1892 = vrot.slane %v1769, 5
          %v1893 = vrot.slane %v1892, 4
          %v1894 = vrot.slane %v1770, 5
          %v1895 = vsel %vm1849, %v1893, %v1894
          %v1896 = vrot.slane %v1894, 4
          %v1897 = vrot.slane %v1771, 5
          %v1898 = vsel %vm1849, %v1896, %v1897
          %v1899 = vrot.slane %v1772, 5
          %v1900 = vrot.slane %v1899, 4
          %v1901 = vrot.slane %v1773, 5
          %v1902 = vsel %vm1849, %v1900, %v1901
          %v1903 = vrot.slane %v1901, 4
          %v1904 = vrot.slane %v1774, 5
          %v1905 = vsel %vm1849, %v1903, %v1904
          %v1906 = vrot.slane %v1775, 5
          %v1907 = vrot.slane %v1906, 4
          %v1908 = vrot.slane %v1776, 5
          %v1909 = vsel %vm1849, %v1907, %v1908
          %v1910 = vrot.slane %v1908, 4
          %v1911 = vrot.slane %v1777, 5
          %v1912 = vsel %vm1849, %v1910, %v1911
          %v1913 = vrot.slane %v1778, 5
          %v1914 = vrot.slane %v1913, 4
          %v1915 = vrot.slane %v1779, 5
          %v1916 = vsel %vm1849, %v1914, %v1915
          %v1917 = vrot.slane %v1915, 4
          %v1918 = vrot.slane %v1780, 5
          %v1919 = vsel %vm1849, %v1917, %v1918
          %v1920 = vrot.slane %v1781, 5
          %v1921 = vrot.slane %v1920, 4
          %v1922 = vrot.slane %v1782, 5
          %v1923 = vsel %vm1849, %v1921, %v1922
          %v1924 = vrot.slane %v1922, 4
          %v1925 = vrot.slane %v1783, 5
          %v1926 = vsel %vm1849, %v1924, %v1925
          %v1927 = vrot.slane %v1784, 5
          %v1928 = vrot.slane %v1927, 4
          %v1929 = vrot.slane %v1785, 5
          %v1930 = vsel %vm1849, %v1928, %v1929
          %v1931 = vrot.slane %v1929, 4
          %v1932 = vrot.slane %v1786, 5
          %v1933 = vsel %vm1849, %v1931, %v1932
          %v1934 = vrot.slane %v1787, 5
          %v1935 = vrot.slane %v1934, 4
          %v1936 = vrot.slane %v1788, 5
          %v1937 = vsel %vm1849, %v1935, %v1936
          %v1938 = vrot.slane %v1936, 4
          %v1939 = vrot.slane %v1789, 5
          %v1940 = vsel %vm1849, %v1938, %v1939
          %v1941 = vrot.slane %v1790, 5
          %v1942 = vrot.slane %v1941, 4
          %v1943 = vrot.slane %v1791, 5
          %v1944 = vsel %vm1849, %v1942, %v1943
          %v1945 = vrot.slane %v1943, 4
          %v1946 = vrot.slane %v1792, 5
          %v1947 = vsel %vm1849, %v1945, %v1946
          %v1948 = vrot.slane %v1793, 5
          %v1949 = vrot.slane %v1948, 4
          %v1950 = vrot.slane %v1794, 5
          %v1951 = vsel %vm1849, %v1949, %v1950
          %v1952 = vrot.slane %v1950, 4
          %v1953 = vrot.slane %v1795, 5
          %v1954 = vsel %vm1849, %v1952, %v1953
          %v1955 = vrot.slane %v1796, 5
          %v1956 = vrot.slane %v1955, 4
          %v1957 = vrot.slane %v1797, 5
          %v1958 = vsel %vm1849, %v1956, %v1957
          %v1959 = vrot.slane %v1957, 4
          %v1960 = vrot.slane %v1798, 5
          %v1961 = vsel %vm1849, %v1959, %v1960
          %v1962 = vunpack.c.l.b16 %v1853
          %v1963 = vunpack.c.l.b16 %v1856
          %v1964 = vunpack.c.l.b16 %v1860
          %v1965 = vunpack.c.l.b16 %v1863
          %v1966 = vunpack.c.l.b16 %v1867
          %v1967 = vunpack.c.l.b16 %v1870
          %v1968 = vunpack.c.l.b16 %v1874
          %v1969 = vunpack.c.l.b16 %v1877
          %v1970 = vunpack.c.l.b16 %v1881
          %v1971 = vunpack.c.l.b16 %v1884
          %v1972 = vunpack.c.l.b16 %v1888
          %v1973 = vunpack.c.l.b16 %v1891
          %v1974 = vunpack.c.l.b16 %v1895
          %v1975 = vunpack.c.l.b16 %v1898
          %v1976 = vunpack.c.l.b16 %v1902
          %v1977 = vunpack.c.l.b16 %v1905
          %v1978 = vunpack.c.l.b16 %v1909
          %v1979 = vunpack.c.l.b16 %v1912
          %v1980 = vunpack.c.l.b16 %v1916
          %v1981 = vunpack.c.l.b16 %v1919
          %v1982 = vunpack.c.l.b16 %v1923
          %v1983 = vunpack.c.l.b16 %v1926
          %v1984 = vunpack.c.l.b16 %v1930
          %v1985 = vunpack.c.l.b16 %v1933
          %v1986 = vunpack.c.l.b16 %v1937
          %v1987 = vunpack.c.l.b16 %v1940
          %v1988 = vunpack.c.l.b16 %v1944
          %v1989 = vunpack.c.l.b16 %v1947
          %v1990 = vunpack.c.l.b16 %v1951
          %v1991 = vunpack.c.l.b16 %v1954
          %v1992 = vunpack.c.l.b16 %v1958
          %v1993 = vunpack.c.l.b16 %v1961
          %v1994 = vpack.c.b16 %v1963, %v1962
          %v1995 = vpack.c.b16 %v1965, %v1964
          %v1996 = vpack.c.b16 %v1967, %v1966
          %v1997 = vpack.c.b16 %v1969, %v1968
          %v1998 = vpack.c.b16 %v1971, %v1970
          %v1999 = vpack.c.b16 %v1973, %v1972
          %v2000 = vpack.c.b16 %v1975, %v1974
          %v2001 = vpack.c.b16 %v1977, %v1976
          %v2002 = vpack.c.b16 %v1979, %v1978
          %v2003 = vpack.c.b16 %v1981, %v1980
          %v2004 = vpack.c.b16 %v1983, %v1982
          %v2005 = vpack.c.b16 %v1985, %v1984
          %v2006 = vpack.c.b16 %v1987, %v1986
          %v2007 = vpack.c.b16 %v1989, %v1988
          %v2008 = vpack.c.b16 %v1991, %v1990
          %v2009 = vpack.c.b16 %v1993, %v1992
          %2026 = vst [vmem:[#allocation3 + $0x10] sm:$0xff] %v1994
          %2027 = vst [vmem:[#allocation3 + $0x58] sm:$0xff] %v1995
          %2028 = vst [vmem:[#allocation3 + $0xa0] sm:$0xff] %v1996
          %2029 = vst [vmem:[#allocation3 + $0xe8] sm:$0xff] %v1997
          %2030 = vst [vmem:[#allocation3 + $0x130] sm:$0xff] %v1998
          %2031 = vst [vmem:[#allocation3 + $0x178] sm:$0xff] %v1999
          %2032 = vst [vmem:[#allocation3 + $0x1c0] sm:$0xff] %v2000
          %2033 = vst [vmem:[#allocation3 + $0x208] sm:$0xff] %v2001
          %2034 = vst [vmem:[#allocation3 + $0x250] sm:$0xff] %v2002
          %2035 = vst [vmem:[#allocation3 + $0x298] sm:$0xff] %v2003
          %2036 = vst [vmem:[#allocation3 + $0x2e0] sm:$0xff] %v2004
          %2037 = vst [vmem:[#allocation3 + $0x328] sm:$0xff] %v2005
          %2038 = vst [vmem:[#allocation3 + $0x370] sm:$0xff] %v2006
          %2039 = vst [vmem:[#allocation3 + $0x3b8] sm:$0xff] %v2007
          %2040 = vst [vmem:[#allocation3 + $0x400] sm:$0xff] %v2008
          %2041 = vst [vmem:[#allocation3 + $0x448] sm:$0xff] %v2009
          %v2042 = vld [vmem:[%s977] sm:$0xf]
          %v2043 = vld [vmem:[%s977 + $0x4] sm:$0xf]
          %v2044 = vld [vmem:[%s977 + $0xc] sm:$0xf]
          %v2045 = vld [vmem:[%s977 + $0x10] sm:$0xf]
          %v2046 = vld [vmem:[%s977 + $0x18] sm:$0xf]
          %v2047 = vld [vmem:[%s977 + $0x1c] sm:$0xf]
          %v2048 = vld [vmem:[%s977 + $0x24] sm:$0xf]
          %v2049 = vld [vmem:[%s977 + $0x28] sm:$0xf]
          %v2050 = vld [vmem:[%s977 + $0x30] sm:$0xf]
          %v2051 = vld [vmem:[%s977 + $0x34] sm:$0xf]
          %v2052 = vld [vmem:[%s977 + $0x3c] sm:$0xf]
          %v2053 = vld [vmem:[%s977 + $0x40] sm:$0xf]
          %v2054 = vld [vmem:[%s977 + $0x48] sm:$0xf]
          %v2055 = vld [vmem:[%s977 + $0x4c] sm:$0xf]
          %v2056 = vld [vmem:[%s977 + $0x54] sm:$0xf]
          %v2057 = vld [vmem:[%s977 + $0x58] sm:$0xf]
          %v2058 = vld [vmem:[%s977 + $0x60] sm:$0xf]
          %v2059 = vld [vmem:[%s977 + $0x64] sm:$0xf]
          %v2060 = vld [vmem:[%s977 + $0x6c] sm:$0xf]
          %v2061 = vld [vmem:[%s977 + $0x70] sm:$0xf]
          %v2062 = vld [vmem:[%s977 + $0x78] sm:$0xf]
          %v2063 = vld [vmem:[%s977 + $0x7c] sm:$0xf]
          %v2064 = vld [vmem:[%s977 + $0x84] sm:$0xf]
          %v2065 = vld [vmem:[%s977 + $0x88] sm:$0xf]
          %v2066 = vld [vmem:[%s977 + $0x90] sm:$0xf]
          %v2067 = vld [vmem:[%s977 + $0x94] sm:$0xf]
          %v2068 = vld [vmem:[%s977 + $0x9c] sm:$0xf]
          %v2069 = vld [vmem:[%s977 + $0xa0] sm:$0xf]
          %v2070 = vld [vmem:[%s977 + $0xa8] sm:$0xf]
          %v2071 = vld [vmem:[%s977 + $0xac] sm:$0xf]
          %v2072 = vld [vmem:[%s977 + $0xb4] sm:$0xf]
          %v2073 = vld [vmem:[%s977 + $0xb8] sm:$0xf]
          %v2106 = vunpack.c.l.b16 %v2042
          %v2107 = vunpack.c.l.b16 %v2043
          %v2108 = vunpack.c.l.b16 %v2044
          %v2109 = vunpack.c.l.b16 %v2045
          %v2110 = vunpack.c.l.b16 %v2046
          %v2111 = vunpack.c.l.b16 %v2047
          %v2112 = vunpack.c.l.b16 %v2048
          %v2113 = vunpack.c.l.b16 %v2049
          %v2114 = vunpack.c.l.b16 %v2050
          %v2115 = vunpack.c.l.b16 %v2051
          %v2116 = vunpack.c.l.b16 %v2052
          %v2117 = vunpack.c.l.b16 %v2053
          %v2118 = vunpack.c.l.b16 %v2054
          %v2119 = vunpack.c.l.b16 %v2055
          %v2120 = vunpack.c.l.b16 %v2056
          %v2121 = vunpack.c.l.b16 %v2057
          %v2122 = vunpack.c.l.b16 %v2058
          %v2123 = vunpack.c.l.b16 %v2059
          %v2124 = vunpack.c.l.b16 %v2060
          %v2125 = vunpack.c.l.b16 %v2061
          %v2126 = vunpack.c.l.b16 %v2062
          %v2127 = vunpack.c.l.b16 %v2063
          %v2128 = vunpack.c.l.b16 %v2064
          %v2129 = vunpack.c.l.b16 %v2065
          %v2130 = vunpack.c.l.b16 %v2066
          %v2131 = vunpack.c.l.b16 %v2067
          %v2132 = vunpack.c.l.b16 %v2068
          %v2133 = vunpack.c.l.b16 %v2069
          %v2134 = vunpack.c.l.b16 %v2070
          %v2135 = vunpack.c.l.b16 %v2071
          %v2136 = vunpack.c.l.b16 %v2072
          %v2137 = vunpack.c.l.b16 %v2073
          %v2138 = vpack.c.b16 %v2107, %v2106
          %v2139 = vpack.c.b16 %v2109, %v2108
          %v2140 = vpack.c.b16 %v2111, %v2110
          %v2141 = vpack.c.b16 %v2113, %v2112
          %v2142 = vpack.c.b16 %v2115, %v2114
          %v2143 = vpack.c.b16 %v2117, %v2116
          %v2144 = vpack.c.b16 %v2119, %v2118
          %v2145 = vpack.c.b16 %v2121, %v2120
          %v2146 = vpack.c.b16 %v2123, %v2122
          %v2147 = vpack.c.b16 %v2125, %v2124
          %v2148 = vpack.c.b16 %v2127, %v2126
          %v2149 = vpack.c.b16 %v2129, %v2128
          %v2150 = vpack.c.b16 %v2131, %v2130
          %v2151 = vpack.c.b16 %v2133, %v2132
          %v2152 = vpack.c.b16 %v2135, %v2134
          %v2153 = vpack.c.b16 %v2137, %v2136
          %2170 = vst [vmem:[#allocation3 + $0x18] sm:$0xff] %v2138
          %2171 = vst [vmem:[#allocation3 + $0x60] sm:$0xff] %v2139
          %2172 = vst [vmem:[#allocation3 + $0xa8] sm:$0xff] %v2140
          %2173 = vst [vmem:[#allocation3 + $0xf0] sm:$0xff] %v2141
          %2174 = vst [vmem:[#allocation3 + $0x138] sm:$0xff] %v2142
          %2175 = vst [vmem:[#allocation3 + $0x180] sm:$0xff] %v2143
          %2176 = vst [vmem:[#allocation3 + $0x1c8] sm:$0xff] %v2144
          %2177 = vst [vmem:[#allocation3 + $0x210] sm:$0xff] %v2145
          %2178 = vst [vmem:[#allocation3 + $0x258] sm:$0xff] %v2146
          %2179 = vst [vmem:[#allocation3 + $0x2a0] sm:$0xff] %v2147
          %2180 = vst [vmem:[#allocation3 + $0x2e8] sm:$0xff] %v2148
          %2181 = vst [vmem:[#allocation3 + $0x330] sm:$0xff] %v2149
          %2182 = vst [vmem:[#allocation3 + $0x378] sm:$0xff] %v2150
          %2183 = vst [vmem:[#allocation3 + $0x3c0] sm:$0xff] %v2151
          %2184 = vst [vmem:[#allocation3 + $0x408] sm:$0xff] %v2152
          %2185 = vst [vmem:[#allocation3 + $0x450] sm:$0xff] %v2153
          %v2186 = vld [vmem:[%s977] sm:$0xf]
          %v2187 = vld [vmem:[%s977 + $0x4] sm:$0xf]
          %v2188 = vld [vmem:[%s977 + $0x8] sm:$0x1]
          %v2189 = vld [vmem:[%s977 + $0xc] sm:$0xf]
          %v2190 = vld [vmem:[%s977 + $0x10] sm:$0xf]
          %v2191 = vld [vmem:[%s977 + $0x14] sm:$0x1]
          %v2192 = vld [vmem:[%s977 + $0x18] sm:$0xf]
          %v2193 = vld [vmem:[%s977 + $0x1c] sm:$0xf]
          %v2194 = vld [vmem:[%s977 + $0x20] sm:$0x1]
          %v2195 = vld [vmem:[%s977 + $0x24] sm:$0xf]
          %v2196 = vld [vmem:[%s977 + $0x28] sm:$0xf]
          %v2197 = vld [vmem:[%s977 + $0x2c] sm:$0x1]
          %v2198 = vld [vmem:[%s977 + $0x30] sm:$0xf]
          %v2199 = vld [vmem:[%s977 + $0x34] sm:$0xf]
          %v2200 = vld [vmem:[%s977 + $0x38] sm:$0x1]
          %v2201 = vld [vmem:[%s977 + $0x3c] sm:$0xf]
          %v2202 = vld [vmem:[%s977 + $0x40] sm:$0xf]
          %v2203 = vld [vmem:[%s977 + $0x44] sm:$0x1]
          %v2204 = vld [vmem:[%s977 + $0x48] sm:$0xf]
          %v2205 = vld [vmem:[%s977 + $0x4c] sm:$0xf]
          %v2206 = vld [vmem:[%s977 + $0x50] sm:$0x1]
          %v2207 = vld [vmem:[%s977 + $0x54] sm:$0xf]
          %v2208 = vld [vmem:[%s977 + $0x58] sm:$0xf]
          %v2209 = vld [vmem:[%s977 + $0x5c] sm:$0x1]
          %v2210 = vld [vmem:[%s977 + $0x60] sm:$0xf]
          %v2211 = vld [vmem:[%s977 + $0x64] sm:$0xf]
          %v2212 = vld [vmem:[%s977 + $0x68] sm:$0x1]
          %v2213 = vld [vmem:[%s977 + $0x6c] sm:$0xf]
          %v2214 = vld [vmem:[%s977 + $0x70] sm:$0xf]
          %v2215 = vld [vmem:[%s977 + $0x74] sm:$0x1]
          %v2216 = vld [vmem:[%s977 + $0x78] sm:$0xf]
          %v2217 = vld [vmem:[%s977 + $0x7c] sm:$0xf]
          %v2218 = vld [vmem:[%s977 + $0x80] sm:$0x1]
          %v2219 = vld [vmem:[%s977 + $0x84] sm:$0xf]
          %v2220 = vld [vmem:[%s977 + $0x88] sm:$0xf]
          %v2221 = vld [vmem:[%s977 + $0x8c] sm:$0x1]
          %v2222 = vld [vmem:[%s977 + $0x90] sm:$0xf]
          %v2223 = vld [vmem:[%s977 + $0x94] sm:$0xf]
          %v2224 = vld [vmem:[%s977 + $0x98] sm:$0x1]
          %v2225 = vld [vmem:[%s977 + $0x9c] sm:$0xf]
          %v2226 = vld [vmem:[%s977 + $0xa0] sm:$0xf]
          %v2227 = vld [vmem:[%s977 + $0xa4] sm:$0x1]
          %v2228 = vld [vmem:[%s977 + $0xa8] sm:$0xf]
          %v2229 = vld [vmem:[%s977 + $0xac] sm:$0xf]
          %v2230 = vld [vmem:[%s977 + $0xb0] sm:$0x1]
          %v2231 = vld [vmem:[%s977 + $0xb4] sm:$0xf]
          %v2232 = vld [vmem:[%s977 + $0xb8] sm:$0xf]
          %v2233 = vld [vmem:[%s977 + $0xbc] sm:$0x1]
          %v2235 = vshrl.u32 %v2186, 16
          %v2237 = vrot.slane %v2235, 4
          %v2238 = vshll.u32 %v2186, 16
          %v2240 = vrot.slane %v2238, 5
          %v2241 = vor.u32 %v2237, %v2240
          %v2242 = vrot.slane %v2241, 4
          %v2244 = vshll.u32 %v2187, 16
          %v2246 = vrot.slane %v2244, 5
          %v2247 = vsel %vm1286, %v2242, %v2246
          %v2248 = vshrl.u32 %v2187, 16
          %v2250 = vrot.slane %v2248, 4
          %v2251 = vor.u32 %v2250, %v2246
          %v2252 = vrot.slane %v2251, 4
          %v2254 = vshll.u32 %v2188, 16
          %v2256 = vrot.slane %v2254, 5
          %v2257 = vsel %vm1286, %v2252, %v2256
          %v2259 = vshrl.u32 %v2189, 16
          %v2261 = vrot.slane %v2259, 4
          %v2262 = vshll.u32 %v2189, 16
          %v2264 = vrot.slane %v2262, 5
          %v2265 = vor.u32 %v2261, %v2264
          %v2266 = vrot.slane %v2265, 4
          %v2268 = vshll.u32 %v2190, 16
          %v2270 = vrot.slane %v2268, 5
          %v2271 = vsel %vm1286, %v2266, %v2270
          %v2272 = vshrl.u32 %v2190, 16
          %v2274 = vrot.slane %v2272, 4
          %v2275 = vor.u32 %v2274, %v2270
          %v2276 = vrot.slane %v2275, 4
          %v2278 = vshll.u32 %v2191, 16
          %v2280 = vrot.slane %v2278, 5
          %v2281 = vsel %vm1286, %v2276, %v2280
          %v2283 = vshrl.u32 %v2192, 16
          %v2285 = vrot.slane %v2283, 4
          %v2286 = vshll.u32 %v2192, 16
          %v2288 = vrot.slane %v2286, 5
          %v2289 = vor.u32 %v2285, %v2288
          %v2290 = vrot.slane %v2289, 4
          %v2292 = vshll.u32 %v2193, 16
          %v2294 = vrot.slane %v2292, 5
          %v2295 = vsel %vm1286, %v2290, %v2294
          %v2296 = vshrl.u32 %v2193, 16
          %v2298 = vrot.slane %v2296, 4
          %v2299 = vor.u32 %v2298, %v2294
          %v2300 = vrot.slane %v2299, 4
          %v2302 = vshll.u32 %v2194, 16
          %v2304 = vrot.slane %v2302, 5
          %v2305 = vsel %vm1286, %v2300, %v2304
          %v2307 = vshrl.u32 %v2195, 16
          %v2309 = vrot.slane %v2307, 4
          %v2310 = vshll.u32 %v2195, 16
          %v2312 = vrot.slane %v2310, 5
          %v2313 = vor.u32 %v2309, %v2312
          %v2314 = vrot.slane %v2313, 4
          %v2316 = vshll.u32 %v2196, 16
          %v2318 = vrot.slane %v2316, 5
          %v2319 = vsel %vm1286, %v2314, %v2318
          %v2320 = vshrl.u32 %v2196, 16
          %v2322 = vrot.slane %v2320, 4
          %v2323 = vor.u32 %v2322, %v2318
          %v2324 = vrot.slane %v2323, 4
          %v2326 = vshll.u32 %v2197, 16
          %v2328 = vrot.slane %v2326, 5
          %v2329 = vsel %vm1286, %v2324, %v2328
          %v2331 = vshrl.u32 %v2198, 16
          %v2333 = vrot.slane %v2331, 4
          %v2334 = vshll.u32 %v2198, 16
          %v2336 = vrot.slane %v2334, 5
          %v2337 = vor.u32 %v2333, %v2336
          %v2338 = vrot.slane %v2337, 4
          %v2340 = vshll.u32 %v2199, 16
          %v2342 = vrot.slane %v2340, 5
          %v2343 = vsel %vm1286, %v2338, %v2342
          %v2344 = vshrl.u32 %v2199, 16
          %v2346 = vrot.slane %v2344, 4
          %v2347 = vor.u32 %v2346, %v2342
          %v2348 = vrot.slane %v2347, 4
          %v2350 = vshll.u32 %v2200, 16
          %v2352 = vrot.slane %v2350, 5
          %v2353 = vsel %vm1286, %v2348, %v2352
          %v2355 = vshrl.u32 %v2201, 16
          %v2357 = vrot.slane %v2355, 4
          %v2358 = vshll.u32 %v2201, 16
          %v2360 = vrot.slane %v2358, 5
          %v2361 = vor.u32 %v2357, %v2360
          %v2362 = vrot.slane %v2361, 4
          %v2364 = vshll.u32 %v2202, 16
          %v2366 = vrot.slane %v2364, 5
          %v2367 = vsel %vm1286, %v2362, %v2366
          %v2368 = vshrl.u32 %v2202, 16
          %v2370 = vrot.slane %v2368, 4
          %v2371 = vor.u32 %v2370, %v2366
          %v2372 = vrot.slane %v2371, 4
          %v2374 = vshll.u32 %v2203, 16
          %v2376 = vrot.slane %v2374, 5
          %v2377 = vsel %vm1286, %v2372, %v2376
          %v2379 = vshrl.u32 %v2204, 16
          %v2381 = vrot.slane %v2379, 4
          %v2382 = vshll.u32 %v2204, 16
          %v2384 = vrot.slane %v2382, 5
          %v2385 = vor.u32 %v2381, %v2384
          %v2386 = vrot.slane %v2385, 4
          %v2388 = vshll.u32 %v2205, 16
          %v2390 = vrot.slane %v2388, 5
          %v2391 = vsel %vm1286, %v2386, %v2390
          %v2392 = vshrl.u32 %v2205, 16
          %v2394 = vrot.slane %v2392, 4
          %v2395 = vor.u32 %v2394, %v2390
          %v2396 = vrot.slane %v2395, 4
          %v2398 = vshll.u32 %v2206, 16
          %v2400 = vrot.slane %v2398, 5
          %v2401 = vsel %vm1286, %v2396, %v2400
          %v2403 = vshrl.u32 %v2207, 16
          %v2405 = vrot.slane %v2403, 4
          %v2406 = vshll.u32 %v2207, 16
          %v2408 = vrot.slane %v2406, 5
          %v2409 = vor.u32 %v2405, %v2408
          %v2410 = vrot.slane %v2409, 4
          %v2412 = vshll.u32 %v2208, 16
          %v2414 = vrot.slane %v2412, 5
          %v2415 = vsel %vm1286, %v2410, %v2414
          %v2416 = vshrl.u32 %v2208, 16
          %v2418 = vrot.slane %v2416, 4
          %v2419 = vor.u32 %v2418, %v2414
          %v2420 = vrot.slane %v2419, 4
          %v2422 = vshll.u32 %v2209, 16
          %v2424 = vrot.slane %v2422, 5
          %v2425 = vsel %vm1286, %v2420, %v2424
          %v2427 = vshrl.u32 %v2210, 16
          %v2429 = vrot.slane %v2427, 4
          %v2430 = vshll.u32 %v2210, 16
          %v2432 = vrot.slane %v2430, 5
          %v2433 = vor.u32 %v2429, %v2432
          %v2434 = vrot.slane %v2433, 4
          %v2436 = vshll.u32 %v2211, 16
          %v2438 = vrot.slane %v2436, 5
          %v2439 = vsel %vm1286, %v2434, %v2438
          %v2440 = vshrl.u32 %v2211, 16
          %v2442 = vrot.slane %v2440, 4
          %v2443 = vor.u32 %v2442, %v2438
          %v2444 = vrot.slane %v2443, 4
          %v2446 = vshll.u32 %v2212, 16
          %v2448 = vrot.slane %v2446, 5
          %v2449 = vsel %vm1286, %v2444, %v2448
          %v2451 = vshrl.u32 %v2213, 16
          %v2453 = vrot.slane %v2451, 4
          %v2454 = vshll.u32 %v2213, 16
          %v2456 = vrot.slane %v2454, 5
          %v2457 = vor.u32 %v2453, %v2456
          %v2458 = vrot.slane %v2457, 4
          %v2460 = vshll.u32 %v2214, 16
          %v2462 = vrot.slane %v2460, 5
          %v2463 = vsel %vm1286, %v2458, %v2462
          %v2464 = vshrl.u32 %v2214, 16
          %v2466 = vrot.slane %v2464, 4
          %v2467 = vor.u32 %v2466, %v2462
          %v2468 = vrot.slane %v2467, 4
          %v2470 = vshll.u32 %v2215, 16
          %v2472 = vrot.slane %v2470, 5
          %v2473 = vsel %vm1286, %v2468, %v2472
          %v2475 = vshrl.u32 %v2216, 16
          %v2477 = vrot.slane %v2475, 4
          %v2478 = vshll.u32 %v2216, 16
          %v2480 = vrot.slane %v2478, 5
          %v2481 = vor.u32 %v2477, %v2480
          %v2482 = vrot.slane %v2481, 4
          %v2484 = vshll.u32 %v2217, 16
          %v2486 = vrot.slane %v2484, 5
          %v2487 = vsel %vm1286, %v2482, %v2486
          %v2488 = vshrl.u32 %v2217, 16
          %v2490 = vrot.slane %v2488, 4
          %v2491 = vor.u32 %v2490, %v2486
          %v2492 = vrot.slane %v2491, 4
          %v2494 = vshll.u32 %v2218, 16
          %v2496 = vrot.slane %v2494, 5
          %v2497 = vsel %vm1286, %v2492, %v2496
          %v2499 = vshrl.u32 %v2219, 16
          %v2501 = vrot.slane %v2499, 4
          %v2502 = vshll.u32 %v2219, 16
          %v2504 = vrot.slane %v2502, 5
          %v2505 = vor.u32 %v2501, %v2504
          %v2506 = vrot.slane %v2505, 4
          %v2508 = vshll.u32 %v2220, 16
          %v2510 = vrot.slane %v2508, 5
          %v2511 = vsel %vm1286, %v2506, %v2510
          %v2512 = vshrl.u32 %v2220, 16
          %v2514 = vrot.slane %v2512, 4
          %v2515 = vor.u32 %v2514, %v2510
          %v2516 = vrot.slane %v2515, 4
          %v2518 = vshll.u32 %v2221, 16
          %v2520 = vrot.slane %v2518, 5
          %v2521 = vsel %vm1286, %v2516, %v2520
          %v2523 = vshrl.u32 %v2222, 16
          %v2525 = vrot.slane %v2523, 4
          %v2526 = vshll.u32 %v2222, 16
          %v2528 = vrot.slane %v2526, 5
          %v2529 = vor.u32 %v2525, %v2528
          %v2530 = vrot.slane %v2529, 4
          %v2532 = vshll.u32 %v2223, 16
          %v2534 = vrot.slane %v2532, 5
          %v2535 = vsel %vm1286, %v2530, %v2534
          %v2536 = vshrl.u32 %v2223, 16
          %v2538 = vrot.slane %v2536, 4
          %v2539 = vor.u32 %v2538, %v2534
          %v2540 = vrot.slane %v2539, 4
          %v2542 = vshll.u32 %v2224, 16
          %v2544 = vrot.slane %v2542, 5
          %v2545 = vsel %vm1286, %v2540, %v2544
          %v2547 = vshrl.u32 %v2225, 16
          %v2549 = vrot.slane %v2547, 4
          %v2550 = vshll.u32 %v2225, 16
          %v2552 = vrot.slane %v2550, 5
          %v2553 = vor.u32 %v2549, %v2552
          %v2554 = vrot.slane %v2553, 4
          %v2556 = vshll.u32 %v2226, 16
          %v2558 = vrot.slane %v2556, 5
          %v2559 = vsel %vm1286, %v2554, %v2558
          %v2560 = vshrl.u32 %v2226, 16
          %v2562 = vrot.slane %v2560, 4
          %v2563 = vor.u32 %v2562, %v2558
          %v2564 = vrot.slane %v2563, 4
          %v2566 = vshll.u32 %v2227, 16
          %v2568 = vrot.slane %v2566, 5
          %v2569 = vsel %vm1286, %v2564, %v2568
          %v2571 = vshrl.u32 %v2228, 16
          %v2573 = vrot.slane %v2571, 4
          %v2574 = vshll.u32 %v2228, 16
          %v2576 = vrot.slane %v2574, 5
          %v2577 = vor.u32 %v2573, %v2576
          %v2578 = vrot.slane %v2577, 4
          %v2580 = vshll.u32 %v2229, 16
          %v2582 = vrot.slane %v2580, 5
          %v2583 = vsel %vm1286, %v2578, %v2582
          %v2584 = vshrl.u32 %v2229, 16
          %v2586 = vrot.slane %v2584, 4
          %v2587 = vor.u32 %v2586, %v2582
          %v2588 = vrot.slane %v2587, 4
          %v2590 = vshll.u32 %v2230, 16
          %v2592 = vrot.slane %v2590, 5
          %v2593 = vsel %vm1286, %v2588, %v2592
          %v2595 = vshrl.u32 %v2231, 16
          %v2597 = vrot.slane %v2595, 4
          %v2598 = vshll.u32 %v2231, 16
          %v2600 = vrot.slane %v2598, 5
          %v2601 = vor.u32 %v2597, %v2600
          %v2602 = vrot.slane %v2601, 4
          %v2604 = vshll.u32 %v2232, 16
          %v2606 = vrot.slane %v2604, 5
          %v2607 = vsel %vm1286, %v2602, %v2606
          %v2608 = vshrl.u32 %v2232, 16
          %v2610 = vrot.slane %v2608, 4
          %v2611 = vor.u32 %v2610, %v2606
          %v2612 = vrot.slane %v2611, 4
          %v2614 = vshll.u32 %v2233, 16
          %v2616 = vrot.slane %v2614, 5
          %v2617 = vsel %vm1286, %v2612, %v2616
          %v2618 = vunpack.c.l.b16 %v2247
          %v2619 = vunpack.c.l.b16 %v2257
          %v2620 = vunpack.c.l.b16 %v2271
          %v2621 = vunpack.c.l.b16 %v2281
          %v2622 = vunpack.c.l.b16 %v2295
          %v2623 = vunpack.c.l.b16 %v2305
          %v2624 = vunpack.c.l.b16 %v2319
          %v2625 = vunpack.c.l.b16 %v2329
          %v2626 = vunpack.c.l.b16 %v2343
          %v2627 = vunpack.c.l.b16 %v2353
          %v2628 = vunpack.c.l.b16 %v2367
          %v2629 = vunpack.c.l.b16 %v2377
          %v2630 = vunpack.c.l.b16 %v2391
          %v2631 = vunpack.c.l.b16 %v2401
          %v2632 = vunpack.c.l.b16 %v2415
          %v2633 = vunpack.c.l.b16 %v2425
          %v2634 = vunpack.c.l.b16 %v2439
          %v2635 = vunpack.c.l.b16 %v2449
          %v2636 = vunpack.c.l.b16 %v2463
          %v2637 = vunpack.c.l.b16 %v2473
          %v2638 = vunpack.c.l.b16 %v2487
          %v2639 = vunpack.c.l.b16 %v2497
          %v2640 = vunpack.c.l.b16 %v2511
          %v2641 = vunpack.c.l.b16 %v2521
          %v2642 = vunpack.c.l.b16 %v2535
          %v2643 = vunpack.c.l.b16 %v2545
          %v2644 = vunpack.c.l.b16 %v2559
          %v2645 = vunpack.c.l.b16 %v2569
          %v2646 = vunpack.c.l.b16 %v2583
          %v2647 = vunpack.c.l.b16 %v2593
          %v2648 = vunpack.c.l.b16 %v2607
          %v2649 = vunpack.c.l.b16 %v2617
          %v2650 = vpack.c.b16 %v2619, %v2618
          %v2651 = vpack.c.b16 %v2621, %v2620
          %v2652 = vpack.c.b16 %v2623, %v2622
          %v2653 = vpack.c.b16 %v2625, %v2624
          %v2654 = vpack.c.b16 %v2627, %v2626
          %v2655 = vpack.c.b16 %v2629, %v2628
          %v2656 = vpack.c.b16 %v2631, %v2630
          %v2657 = vpack.c.b16 %v2633, %v2632
          %v2658 = vpack.c.b16 %v2635, %v2634
          %v2659 = vpack.c.b16 %v2637, %v2636
          %v2660 = vpack.c.b16 %v2639, %v2638
          %v2661 = vpack.c.b16 %v2641, %v2640
          %v2662 = vpack.c.b16 %v2643, %v2642
          %v2663 = vpack.c.b16 %v2645, %v2644
          %v2664 = vpack.c.b16 %v2647, %v2646
          %v2665 = vpack.c.b16 %v2649, %v2648
          %2682 = vst [vmem:[#allocation3 + $0x20] sm:$0xff] %v2650
          %2683 = vst [vmem:[#allocation3 + $0x68] sm:$0xff] %v2651
          %2684 = vst [vmem:[#allocation3 + $0xb0] sm:$0xff] %v2652
          %2685 = vst [vmem:[#allocation3 + $0xf8] sm:$0xff] %v2653
          %2686 = vst [vmem:[#allocation3 + $0x140] sm:$0xff] %v2654
          %2687 = vst [vmem:[#allocation3 + $0x188] sm:$0xff] %v2655
          %2688 = vst [vmem:[#allocation3 + $0x1d0] sm:$0xff] %v2656
          %2689 = vst [vmem:[#allocation3 + $0x218] sm:$0xff] %v2657
          %2690 = vst [vmem:[#allocation3 + $0x260] sm:$0xff] %v2658
          %2691 = vst [vmem:[#allocation3 + $0x2a8] sm:$0xff] %v2659
          %2692 = vst [vmem:[#allocation3 + $0x2f0] sm:$0xff] %v2660
          %2693 = vst [vmem:[#allocation3 + $0x338] sm:$0xff] %v2661
          %2694 = vst [vmem:[#allocation3 + $0x380] sm:$0xff] %v2662
          %2695 = vst [vmem:[#allocation3 + $0x3c8] sm:$0xff] %v2663
          %2696 = vst [vmem:[#allocation3 + $0x410] sm:$0xff] %v2664
          %2697 = vst [vmem:[#allocation3 + $0x458] sm:$0xff] %v2665
          %v2698 = vld [vmem:[%s977] sm:$0xe]
          %v2699 = vld [vmem:[%s977 + $0x4] sm:$0xf]
          %v2700 = vld [vmem:[%s977 + $0x8] sm:$0x1]
          %v2701 = vld [vmem:[%s977 + $0xc] sm:$0xe]
          %v2702 = vld [vmem:[%s977 + $0x10] sm:$0xf]
          %v2703 = vld [vmem:[%s977 + $0x14] sm:$0x1]
          %v2704 = vld [vmem:[%s977 + $0x18] sm:$0xe]
          %v2705 = vld [vmem:[%s977 + $0x1c] sm:$0xf]
          %v2706 = vld [vmem:[%s977 + $0x20] sm:$0x1]
          %v2707 = vld [vmem:[%s977 + $0x24] sm:$0xe]
          %v2708 = vld [vmem:[%s977 + $0x28] sm:$0xf]
          %v2709 = vld [vmem:[%s977 + $0x2c] sm:$0x1]
          %v2710 = vld [vmem:[%s977 + $0x30] sm:$0xe]
          %v2711 = vld [vmem:[%s977 + $0x34] sm:$0xf]
          %v2712 = vld [vmem:[%s977 + $0x38] sm:$0x1]
          %v2713 = vld [vmem:[%s977 + $0x3c] sm:$0xe]
          %v2714 = vld [vmem:[%s977 + $0x40] sm:$0xf]
          %v2715 = vld [vmem:[%s977 + $0x44] sm:$0x1]
          %v2716 = vld [vmem:[%s977 + $0x48] sm:$0xe]
          %v2717 = vld [vmem:[%s977 + $0x4c] sm:$0xf]
          %v2718 = vld [vmem:[%s977 + $0x50] sm:$0x1]
          %v2719 = vld [vmem:[%s977 + $0x54] sm:$0xe]
          %v2720 = vld [vmem:[%s977 + $0x58] sm:$0xf]
          %v2721 = vld [vmem:[%s977 + $0x5c] sm:$0x1]
          %v2722 = vld [vmem:[%s977 + $0x60] sm:$0xe]
          %v2723 = vld [vmem:[%s977 + $0x64] sm:$0xf]
          %v2724 = vld [vmem:[%s977 + $0x68] sm:$0x1]
          %v2725 = vld [vmem:[%s977 + $0x6c] sm:$0xe]
          %v2726 = vld [vmem:[%s977 + $0x70] sm:$0xf]
          %v2727 = vld [vmem:[%s977 + $0x74] sm:$0x1]
          %v2728 = vld [vmem:[%s977 + $0x78] sm:$0xe]
          %v2729 = vld [vmem:[%s977 + $0x7c] sm:$0xf]
          %v2730 = vld [vmem:[%s977 + $0x80] sm:$0x1]
          %v2731 = vld [vmem:[%s977 + $0x84] sm:$0xe]
          %v2732 = vld [vmem:[%s977 + $0x88] sm:$0xf]
          %v2733 = vld [vmem:[%s977 + $0x8c] sm:$0x1]
          %v2734 = vld [vmem:[%s977 + $0x90] sm:$0xe]
          %v2735 = vld [vmem:[%s977 + $0x94] sm:$0xf]
          %v2736 = vld [vmem:[%s977 + $0x98] sm:$0x1]
          %v2737 = vld [vmem:[%s977 + $0x9c] sm:$0xe]
          %v2738 = vld [vmem:[%s977 + $0xa0] sm:$0xf]
          %v2739 = vld [vmem:[%s977 + $0xa4] sm:$0x1]
          %v2740 = vld [vmem:[%s977 + $0xa8] sm:$0xe]
          %v2741 = vld [vmem:[%s977 + $0xac] sm:$0xf]
          %v2742 = vld [vmem:[%s977 + $0xb0] sm:$0x1]
          %v2743 = vld [vmem:[%s977 + $0xb4] sm:$0xe]
          %v2744 = vld [vmem:[%s977 + $0xb8] sm:$0xf]
          %v2745 = vld [vmem:[%s977 + $0xbc] sm:$0x1]
          %v2794 = vrot.slane %v2698, 5
          %v2795 = vrot.slane %v2794, 4
          %v2796 = vrot.slane %v2699, 5
          %v2797 = vsel %vm1849, %v2795, %v2796
          %v2798 = vrot.slane %v2796, 4
          %v2799 = vrot.slane %v2700, 5
          %v2800 = vsel %vm1849, %v2798, %v2799
          %v2801 = vrot.slane %v2701, 5
          %v2802 = vrot.slane %v2801, 4
          %v2803 = vrot.slane %v2702, 5
          %v2804 = vsel %vm1849, %v2802, %v2803
          %v2805 = vrot.slane %v2803, 4
          %v2806 = vrot.slane %v2703, 5
          %v2807 = vsel %vm1849, %v2805, %v2806
          %v2808 = vrot.slane %v2704, 5
          %v2809 = vrot.slane %v2808, 4
          %v2810 = vrot.slane %v2705, 5
          %v2811 = vsel %vm1849, %v2809, %v2810
          %v2812 = vrot.slane %v2810, 4
          %v2813 = vrot.slane %v2706, 5
          %v2814 = vsel %vm1849, %v2812, %v2813
          %v2815 = vrot.slane %v2707, 5
          %v2816 = vrot.slane %v2815, 4
          %v2817 = vrot.slane %v2708, 5
          %v2818 = vsel %vm1849, %v2816, %v2817
          %v2819 = vrot.slane %v2817, 4
          %v2820 = vrot.slane %v2709, 5
          %v2821 = vsel %vm1849, %v2819, %v2820
          %v2822 = vrot.slane %v2710, 5
          %v2823 = vrot.slane %v2822, 4
          %v2824 = vrot.slane %v2711, 5
          %v2825 = vsel %vm1849, %v2823, %v2824
          %v2826 = vrot.slane %v2824, 4
          %v2827 = vrot.slane %v2712, 5
          %v2828 = vsel %vm1849, %v2826, %v2827
          %v2829 = vrot.slane %v2713, 5
          %v2830 = vrot.slane %v2829, 4
          %v2831 = vrot.slane %v2714, 5
          %v2832 = vsel %vm1849, %v2830, %v2831
          %v2833 = vrot.slane %v2831, 4
          %v2834 = vrot.slane %v2715, 5
          %v2835 = vsel %vm1849, %v2833, %v2834
          %v2836 = vrot.slane %v2716, 5
          %v2837 = vrot.slane %v2836, 4
          %v2838 = vrot.slane %v2717, 5
          %v2839 = vsel %vm1849, %v2837, %v2838
          %v2840 = vrot.slane %v2838, 4
          %v2841 = vrot.slane %v2718, 5
          %v2842 = vsel %vm1849, %v2840, %v2841
          %v2843 = vrot.slane %v2719, 5
          %v2844 = vrot.slane %v2843, 4
          %v2845 = vrot.slane %v2720, 5
          %v2846 = vsel %vm1849, %v2844, %v2845
          %v2847 = vrot.slane %v2845, 4
          %v2848 = vrot.slane %v2721, 5
          %v2849 = vsel %vm1849, %v2847, %v2848
          %v2850 = vrot.slane %v2722, 5
          %v2851 = vrot.slane %v2850, 4
          %v2852 = vrot.slane %v2723, 5
          %v2853 = vsel %vm1849, %v2851, %v2852
          %v2854 = vrot.slane %v2852, 4
          %v2855 = vrot.slane %v2724, 5
          %v2856 = vsel %vm1849, %v2854, %v2855
          %v2857 = vrot.slane %v2725, 5
          %v2858 = vrot.slane %v2857, 4
          %v2859 = vrot.slane %v2726, 5
          %v2860 = vsel %vm1849, %v2858, %v2859
          %v2861 = vrot.slane %v2859, 4
          %v2862 = vrot.slane %v2727, 5
          %v2863 = vsel %vm1849, %v2861, %v2862
          %v2864 = vrot.slane %v2728, 5
          %v2865 = vrot.slane %v2864, 4
          %v2866 = vrot.slane %v2729, 5
          %v2867 = vsel %vm1849, %v2865, %v2866
          %v2868 = vrot.slane %v2866, 4
          %v2869 = vrot.slane %v2730, 5
          %v2870 = vsel %vm1849, %v2868, %v2869
          %v2871 = vrot.slane %v2731, 5
          %v2872 = vrot.slane %v2871, 4
          %v2873 = vrot.slane %v2732, 5
          %v2874 = vsel %vm1849, %v2872, %v2873
          %v2875 = vrot.slane %v2873, 4
          %v2876 = vrot.slane %v2733, 5
          %v2877 = vsel %vm1849, %v2875, %v2876
          %v2878 = vrot.slane %v2734, 5
          %v2879 = vrot.slane %v2878, 4
          %v2880 = vrot.slane %v2735, 5
          %v2881 = vsel %vm1849, %v2879, %v2880
          %v2882 = vrot.slane %v2880, 4
          %v2883 = vrot.slane %v2736, 5
          %v2884 = vsel %vm1849, %v2882, %v2883
          %v2885 = vrot.slane %v2737, 5
          %v2886 = vrot.slane %v2885, 4
          %v2887 = vrot.slane %v2738, 5
          %v2888 = vsel %vm1849, %v2886, %v2887
          %v2889 = vrot.slane %v2887, 4
          %v2890 = vrot.slane %v2739, 5
          %v2891 = vsel %vm1849, %v2889, %v2890
          %v2892 = vrot.slane %v2740, 5
          %v2893 = vrot.slane %v2892, 4
          %v2894 = vrot.slane %v2741, 5
          %v2895 = vsel %vm1849, %v2893, %v2894
          %v2896 = vrot.slane %v2894, 4
          %v2897 = vrot.slane %v2742, 5
          %v2898 = vsel %vm1849, %v2896, %v2897
          %v2899 = vrot.slane %v2743, 5
          %v2900 = vrot.slane %v2899, 4
          %v2901 = vrot.slane %v2744, 5
          %v2902 = vsel %vm1849, %v2900, %v2901
          %v2903 = vrot.slane %v2901, 4
          %v2904 = vrot.slane %v2745, 5
          %v2905 = vsel %vm1849, %v2903, %v2904
          %v2906 = vunpack.c.l.b16 %v2797
          %v2907 = vunpack.c.l.b16 %v2800
          %v2908 = vunpack.c.l.b16 %v2804
          %v2909 = vunpack.c.l.b16 %v2807
          %v2910 = vunpack.c.l.b16 %v2811
          %v2911 = vunpack.c.l.b16 %v2814
          %v2912 = vunpack.c.l.b16 %v2818
          %v2913 = vunpack.c.l.b16 %v2821
          %v2914 = vunpack.c.l.b16 %v2825
          %v2915 = vunpack.c.l.b16 %v2828
          %v2916 = vunpack.c.l.b16 %v2832
          %v2917 = vunpack.c.l.b16 %v2835
          %v2918 = vunpack.c.l.b16 %v2839
          %v2919 = vunpack.c.l.b16 %v2842
          %v2920 = vunpack.c.l.b16 %v2846
          %v2921 = vunpack.c.l.b16 %v2849
          %v2922 = vunpack.c.l.b16 %v2853
          %v2923 = vunpack.c.l.b16 %v2856
          %v2924 = vunpack.c.l.b16 %v2860
          %v2925 = vunpack.c.l.b16 %v2863
          %v2926 = vunpack.c.l.b16 %v2867
          %v2927 = vunpack.c.l.b16 %v2870
          %v2928 = vunpack.c.l.b16 %v2874
          %v2929 = vunpack.c.l.b16 %v2877
          %v2930 = vunpack.c.l.b16 %v2881
          %v2931 = vunpack.c.l.b16 %v2884
          %v2932 = vunpack.c.l.b16 %v2888
          %v2933 = vunpack.c.l.b16 %v2891
          %v2934 = vunpack.c.l.b16 %v2895
          %v2935 = vunpack.c.l.b16 %v2898
          %v2936 = vunpack.c.l.b16 %v2902
          %v2937 = vunpack.c.l.b16 %v2905
          %v2938 = vpack.c.b16 %v2907, %v2906
          %v2939 = vpack.c.b16 %v2909, %v2908
          %v2940 = vpack.c.b16 %v2911, %v2910
          %v2941 = vpack.c.b16 %v2913, %v2912
          %v2942 = vpack.c.b16 %v2915, %v2914
          %v2943 = vpack.c.b16 %v2917, %v2916
          %v2944 = vpack.c.b16 %v2919, %v2918
          %v2945 = vpack.c.b16 %v2921, %v2920
          %v2946 = vpack.c.b16 %v2923, %v2922
          %v2947 = vpack.c.b16 %v2925, %v2924
          %v2948 = vpack.c.b16 %v2927, %v2926
          %v2949 = vpack.c.b16 %v2929, %v2928
          %v2950 = vpack.c.b16 %v2931, %v2930
          %v2951 = vpack.c.b16 %v2933, %v2932
          %v2952 = vpack.c.b16 %v2935, %v2934
          %v2953 = vpack.c.b16 %v2937, %v2936
          %2970 = vst [vmem:[#allocation3 + $0x28] sm:$0xff] %v2938
          %2971 = vst [vmem:[#allocation3 + $0x70] sm:$0xff] %v2939
          %2972 = vst [vmem:[#allocation3 + $0xb8] sm:$0xff] %v2940
          %2973 = vst [vmem:[#allocation3 + $0x100] sm:$0xff] %v2941
          %2974 = vst [vmem:[#allocation3 + $0x148] sm:$0xff] %v2942
          %2975 = vst [vmem:[#allocation3 + $0x190] sm:$0xff] %v2943
          %2976 = vst [vmem:[#allocation3 + $0x1d8] sm:$0xff] %v2944
          %2977 = vst [vmem:[#allocation3 + $0x220] sm:$0xff] %v2945
          %2978 = vst [vmem:[#allocation3 + $0x268] sm:$0xff] %v2946
          %2979 = vst [vmem:[#allocation3 + $0x2b0] sm:$0xff] %v2947
          %2980 = vst [vmem:[#allocation3 + $0x2f8] sm:$0xff] %v2948
          %2981 = vst [vmem:[#allocation3 + $0x340] sm:$0xff] %v2949
          %2982 = vst [vmem:[#allocation3 + $0x388] sm:$0xff] %v2950
          %2983 = vst [vmem:[#allocation3 + $0x3d0] sm:$0xff] %v2951
          %2984 = vst [vmem:[#allocation3 + $0x418] sm:$0xff] %v2952
          %2985 = vst [vmem:[#allocation3 + $0x460] sm:$0xff] %v2953
          %s2986 = scalar_lea.vmem [#allocation2], 24
          %v2987 = vld [vmem:[%s2986] sm:$0xf]
          %v2988 = vld [vmem:[%s2986 + $0x4] sm:$0xf]
          %v2989 = vld [vmem:[%s2986 + $0xc] sm:$0xf]
          %v2990 = vld [vmem:[%s2986 + $0x10] sm:$0xf]
          %v2991 = vld [vmem:[%s2986 + $0x18] sm:$0xf]
          %v2992 = vld [vmem:[%s2986 + $0x1c] sm:$0xf]
          %v2993 = vld [vmem:[%s2986 + $0x24] sm:$0xf]
          %v2994 = vld [vmem:[%s2986 + $0x28] sm:$0xf]
          %v2995 = vld [vmem:[%s2986 + $0x30] sm:$0xf]
          %v2996 = vld [vmem:[%s2986 + $0x34] sm:$0xf]
          %v2997 = vld [vmem:[%s2986 + $0x3c] sm:$0xf]
          %v2998 = vld [vmem:[%s2986 + $0x40] sm:$0xf]
          %v2999 = vld [vmem:[%s2986 + $0x48] sm:$0xf]
          %v3000 = vld [vmem:[%s2986 + $0x4c] sm:$0xf]
          %v3001 = vld [vmem:[%s2986 + $0x54] sm:$0xf]
          %v3002 = vld [vmem:[%s2986 + $0x58] sm:$0xf]
          %v3003 = vld [vmem:[%s2986 + $0x60] sm:$0xf]
          %v3004 = vld [vmem:[%s2986 + $0x64] sm:$0xf]
          %v3005 = vld [vmem:[%s2986 + $0x6c] sm:$0xf]
          %v3006 = vld [vmem:[%s2986 + $0x70] sm:$0xf]
          %v3007 = vld [vmem:[%s2986 + $0x78] sm:$0xf]
          %v3008 = vld [vmem:[%s2986 + $0x7c] sm:$0xf]
          %v3009 = vld [vmem:[%s2986 + $0x84] sm:$0xf]
          %v3010 = vld [vmem:[%s2986 + $0x88] sm:$0xf]
          %v3011 = vld [vmem:[%s2986 + $0x90] sm:$0xf]
          %v3012 = vld [vmem:[%s2986 + $0x94] sm:$0xf]
          %v3013 = vld [vmem:[%s2986 + $0x9c] sm:$0xf]
          %v3014 = vld [vmem:[%s2986 + $0xa0] sm:$0xf]
          %v3015 = vld [vmem:[%s2986 + $0xa8] sm:$0xf]
          %v3016 = vld [vmem:[%s2986 + $0xac] sm:$0xf]
          %v3017 = vld [vmem:[%s2986 + $0xb4] sm:$0xf]
          %v3018 = vld [vmem:[%s2986 + $0xb8] sm:$0xf]
          %v3051 = vunpack.c.l.b16 %v2987
          %v3052 = vunpack.c.l.b16 %v2988
          %v3053 = vunpack.c.l.b16 %v2989
          %v3054 = vunpack.c.l.b16 %v2990
          %v3055 = vunpack.c.l.b16 %v2991
          %v3056 = vunpack.c.l.b16 %v2992
          %v3057 = vunpack.c.l.b16 %v2993
          %v3058 = vunpack.c.l.b16 %v2994
          %v3059 = vunpack.c.l.b16 %v2995
          %v3060 = vunpack.c.l.b16 %v2996
          %v3061 = vunpack.c.l.b16 %v2997
          %v3062 = vunpack.c.l.b16 %v2998
          %v3063 = vunpack.c.l.b16 %v2999
          %v3064 = vunpack.c.l.b16 %v3000
          %v3065 = vunpack.c.l.b16 %v3001
          %v3066 = vunpack.c.l.b16 %v3002
          %v3067 = vunpack.c.l.b16 %v3003
          %v3068 = vunpack.c.l.b16 %v3004
          %v3069 = vunpack.c.l.b16 %v3005
          %v3070 = vunpack.c.l.b16 %v3006
          %v3071 = vunpack.c.l.b16 %v3007
          %v3072 = vunpack.c.l.b16 %v3008
          %v3073 = vunpack.c.l.b16 %v3009
          %v3074 = vunpack.c.l.b16 %v3010
          %v3075 = vunpack.c.l.b16 %v3011
          %v3076 = vunpack.c.l.b16 %v3012
          %v3077 = vunpack.c.l.b16 %v3013
          %v3078 = vunpack.c.l.b16 %v3014
          %v3079 = vunpack.c.l.b16 %v3015
          %v3080 = vunpack.c.l.b16 %v3016
          %v3081 = vunpack.c.l.b16 %v3017
          %v3082 = vunpack.c.l.b16 %v3018
          %v3083 = vpack.c.b16 %v3052, %v3051
          %v3084 = vpack.c.b16 %v3054, %v3053
          %v3085 = vpack.c.b16 %v3056, %v3055
          %v3086 = vpack.c.b16 %v3058, %v3057
          %v3087 = vpack.c.b16 %v3060, %v3059
          %v3088 = vpack.c.b16 %v3062, %v3061
          %v3089 = vpack.c.b16 %v3064, %v3063
          %v3090 = vpack.c.b16 %v3066, %v3065
          %v3091 = vpack.c.b16 %v3068, %v3067
          %v3092 = vpack.c.b16 %v3070, %v3069
          %v3093 = vpack.c.b16 %v3072, %v3071
          %v3094 = vpack.c.b16 %v3074, %v3073
          %v3095 = vpack.c.b16 %v3076, %v3075
          %v3096 = vpack.c.b16 %v3078, %v3077
          %v3097 = vpack.c.b16 %v3080, %v3079
          %v3098 = vpack.c.b16 %v3082, %v3081
          %3115 = vst [vmem:[#allocation3 + $0x30] sm:$0xff] %v3083
          %3116 = vst [vmem:[#allocation3 + $0x78] sm:$0xff] %v3084
          %3117 = vst [vmem:[#allocation3 + $0xc0] sm:$0xff] %v3085
          %3118 = vst [vmem:[#allocation3 + $0x108] sm:$0xff] %v3086
          %3119 = vst [vmem:[#allocation3 + $0x150] sm:$0xff] %v3087
          %3120 = vst [vmem:[#allocation3 + $0x198] sm:$0xff] %v3088
          %3121 = vst [vmem:[#allocation3 + $0x1e0] sm:$0xff] %v3089
          %3122 = vst [vmem:[#allocation3 + $0x228] sm:$0xff] %v3090
          %3123 = vst [vmem:[#allocation3 + $0x270] sm:$0xff] %v3091
          %3124 = vst [vmem:[#allocation3 + $0x2b8] sm:$0xff] %v3092
          %3125 = vst [vmem:[#allocation3 + $0x300] sm:$0xff] %v3093
          %3126 = vst [vmem:[#allocation3 + $0x348] sm:$0xff] %v3094
          %3127 = vst [vmem:[#allocation3 + $0x390] sm:$0xff] %v3095
          %3128 = vst [vmem:[#allocation3 + $0x3d8] sm:$0xff] %v3096
          %3129 = vst [vmem:[#allocation3 + $0x420] sm:$0xff] %v3097
          %3130 = vst [vmem:[#allocation3 + $0x468] sm:$0xff] %v3098
          %v3131 = vld [vmem:[%s2986] sm:$0xf]
          %v3132 = vld [vmem:[%s2986 + $0x4] sm:$0xf]
          %v3133 = vld [vmem:[%s2986 + $0x8] sm:$0x1]
          %v3134 = vld [vmem:[%s2986 + $0xc] sm:$0xf]
          %v3135 = vld [vmem:[%s2986 + $0x10] sm:$0xf]
          %v3136 = vld [vmem:[%s2986 + $0x14] sm:$0x1]
          %v3137 = vld [vmem:[%s2986 + $0x18] sm:$0xf]
          %v3138 = vld [vmem:[%s2986 + $0x1c] sm:$0xf]
          %v3139 = vld [vmem:[%s2986 + $0x20] sm:$0x1]
          %v3140 = vld [vmem:[%s2986 + $0x24] sm:$0xf]
          %v3141 = vld [vmem:[%s2986 + $0x28] sm:$0xf]
          %v3142 = vld [vmem:[%s2986 + $0x2c] sm:$0x1]
          %v3143 = vld [vmem:[%s2986 + $0x30] sm:$0xf]
          %v3144 = vld [vmem:[%s2986 + $0x34] sm:$0xf]
          %v3145 = vld [vmem:[%s2986 + $0x38] sm:$0x1]
          %v3146 = vld [vmem:[%s2986 + $0x3c] sm:$0xf]
          %v3147 = vld [vmem:[%s2986 + $0x40] sm:$0xf]
          %v3148 = vld [vmem:[%s2986 + $0x44] sm:$0x1]
          %v3149 = vld [vmem:[%s2986 + $0x48] sm:$0xf]
          %v3150 = vld [vmem:[%s2986 + $0x4c] sm:$0xf]
          %v3151 = vld [vmem:[%s2986 + $0x50] sm:$0x1]
          %v3152 = vld [vmem:[%s2986 + $0x54] sm:$0xf]
          %v3153 = vld [vmem:[%s2986 + $0x58] sm:$0xf]
          %v3154 = vld [vmem:[%s2986 + $0x5c] sm:$0x1]
          %v3155 = vld [vmem:[%s2986 + $0x60] sm:$0xf]
          %v3156 = vld [vmem:[%s2986 + $0x64] sm:$0xf]
          %v3157 = vld [vmem:[%s2986 + $0x68] sm:$0x1]
          %v3158 = vld [vmem:[%s2986 + $0x6c] sm:$0xf]
          %v3159 = vld [vmem:[%s2986 + $0x70] sm:$0xf]
          %v3160 = vld [vmem:[%s2986 + $0x74] sm:$0x1]
          %v3161 = vld [vmem:[%s2986 + $0x78] sm:$0xf]
          %v3162 = vld [vmem:[%s2986 + $0x7c] sm:$0xf]
          %v3163 = vld [vmem:[%s2986 + $0x80] sm:$0x1]
          %v3164 = vld [vmem:[%s2986 + $0x84] sm:$0xf]
          %v3165 = vld [vmem:[%s2986 + $0x88] sm:$0xf]
          %v3166 = vld [vmem:[%s2986 + $0x8c] sm:$0x1]
          %v3167 = vld [vmem:[%s2986 + $0x90] sm:$0xf]
          %v3168 = vld [vmem:[%s2986 + $0x94] sm:$0xf]
          %v3169 = vld [vmem:[%s2986 + $0x98] sm:$0x1]
          %v3170 = vld [vmem:[%s2986 + $0x9c] sm:$0xf]
          %v3171 = vld [vmem:[%s2986 + $0xa0] sm:$0xf]
          %v3172 = vld [vmem:[%s2986 + $0xa4] sm:$0x1]
          %v3173 = vld [vmem:[%s2986 + $0xa8] sm:$0xf]
          %v3174 = vld [vmem:[%s2986 + $0xac] sm:$0xf]
          %v3175 = vld [vmem:[%s2986 + $0xb0] sm:$0x1]
          %v3176 = vld [vmem:[%s2986 + $0xb4] sm:$0xf]
          %v3177 = vld [vmem:[%s2986 + $0xb8] sm:$0xf]
          %v3178 = vld [vmem:[%s2986 + $0xbc] sm:$0x1]
          %v3180 = vshrl.u32 %v3131, 16
          %v3182 = vrot.slane %v3180, 4
          %v3183 = vshll.u32 %v3131, 16
          %v3185 = vrot.slane %v3183, 5
          %v3186 = vor.u32 %v3182, %v3185
          %v3187 = vrot.slane %v3186, 4
          %v3189 = vshll.u32 %v3132, 16
          %v3191 = vrot.slane %v3189, 5
          %v3192 = vsel %vm1286, %v3187, %v3191
          %v3193 = vshrl.u32 %v3132, 16
          %v3195 = vrot.slane %v3193, 4
          %v3196 = vor.u32 %v3195, %v3191
          %v3197 = vrot.slane %v3196, 4
          %v3199 = vshll.u32 %v3133, 16
          %v3201 = vrot.slane %v3199, 5
          %v3202 = vsel %vm1286, %v3197, %v3201
          %v3204 = vshrl.u32 %v3134, 16
          %v3206 = vrot.slane %v3204, 4
          %v3207 = vshll.u32 %v3134, 16
          %v3209 = vrot.slane %v3207, 5
          %v3210 = vor.u32 %v3206, %v3209
          %v3211 = vrot.slane %v3210, 4
          %v3213 = vshll.u32 %v3135, 16
          %v3215 = vrot.slane %v3213, 5
          %v3216 = vsel %vm1286, %v3211, %v3215
          %v3217 = vshrl.u32 %v3135, 16
          %v3219 = vrot.slane %v3217, 4
          %v3220 = vor.u32 %v3219, %v3215
          %v3221 = vrot.slane %v3220, 4
          %v3223 = vshll.u32 %v3136, 16
          %v3225 = vrot.slane %v3223, 5
          %v3226 = vsel %vm1286, %v3221, %v3225
          %v3228 = vshrl.u32 %v3137, 16
          %v3230 = vrot.slane %v3228, 4
          %v3231 = vshll.u32 %v3137, 16
          %v3233 = vrot.slane %v3231, 5
          %v3234 = vor.u32 %v3230, %v3233
          %v3235 = vrot.slane %v3234, 4
          %v3237 = vshll.u32 %v3138, 16
          %v3239 = vrot.slane %v3237, 5
          %v3240 = vsel %vm1286, %v3235, %v3239
          %v3241 = vshrl.u32 %v3138, 16
          %v3243 = vrot.slane %v3241, 4
          %v3244 = vor.u32 %v3243, %v3239
          %v3245 = vrot.slane %v3244, 4
          %v3247 = vshll.u32 %v3139, 16
          %v3249 = vrot.slane %v3247, 5
          %v3250 = vsel %vm1286, %v3245, %v3249
          %v3252 = vshrl.u32 %v3140, 16
          %v3254 = vrot.slane %v3252, 4
          %v3255 = vshll.u32 %v3140, 16
          %v3257 = vrot.slane %v3255, 5
          %v3258 = vor.u32 %v3254, %v3257
          %v3259 = vrot.slane %v3258, 4
          %v3261 = vshll.u32 %v3141, 16
          %v3263 = vrot.slane %v3261, 5
          %v3264 = vsel %vm1286, %v3259, %v3263
          %v3265 = vshrl.u32 %v3141, 16
          %v3267 = vrot.slane %v3265, 4
          %v3268 = vor.u32 %v3267, %v3263
          %v3269 = vrot.slane %v3268, 4
          %v3271 = vshll.u32 %v3142, 16
          %v3273 = vrot.slane %v3271, 5
          %v3274 = vsel %vm1286, %v3269, %v3273
          %v3276 = vshrl.u32 %v3143, 16
          %v3278 = vrot.slane %v3276, 4
          %v3279 = vshll.u32 %v3143, 16
          %v3281 = vrot.slane %v3279, 5
          %v3282 = vor.u32 %v3278, %v3281
          %v3283 = vrot.slane %v3282, 4
          %v3285 = vshll.u32 %v3144, 16
          %v3287 = vrot.slane %v3285, 5
          %v3288 = vsel %vm1286, %v3283, %v3287
          %v3289 = vshrl.u32 %v3144, 16
          %v3291 = vrot.slane %v3289, 4
          %v3292 = vor.u32 %v3291, %v3287
          %v3293 = vrot.slane %v3292, 4
          %v3295 = vshll.u32 %v3145, 16
          %v3297 = vrot.slane %v3295, 5
          %v3298 = vsel %vm1286, %v3293, %v3297
          %v3300 = vshrl.u32 %v3146, 16
          %v3302 = vrot.slane %v3300, 4
          %v3303 = vshll.u32 %v3146, 16
          %v3305 = vrot.slane %v3303, 5
          %v3306 = vor.u32 %v3302, %v3305
          %v3307 = vrot.slane %v3306, 4
          %v3309 = vshll.u32 %v3147, 16
          %v3311 = vrot.slane %v3309, 5
          %v3312 = vsel %vm1286, %v3307, %v3311
          %v3313 = vshrl.u32 %v3147, 16
          %v3315 = vrot.slane %v3313, 4
          %v3316 = vor.u32 %v3315, %v3311
          %v3317 = vrot.slane %v3316, 4
          %v3319 = vshll.u32 %v3148, 16
          %v3321 = vrot.slane %v3319, 5
          %v3322 = vsel %vm1286, %v3317, %v3321
          %v3324 = vshrl.u32 %v3149, 16
          %v3326 = vrot.slane %v3324, 4
          %v3327 = vshll.u32 %v3149, 16
          %v3329 = vrot.slane %v3327, 5
          %v3330 = vor.u32 %v3326, %v3329
          %v3331 = vrot.slane %v3330, 4
          %v3333 = vshll.u32 %v3150, 16
          %v3335 = vrot.slane %v3333, 5
          %v3336 = vsel %vm1286, %v3331, %v3335
          %v3337 = vshrl.u32 %v3150, 16
          %v3339 = vrot.slane %v3337, 4
          %v3340 = vor.u32 %v3339, %v3335
          %v3341 = vrot.slane %v3340, 4
          %v3343 = vshll.u32 %v3151, 16
          %v3345 = vrot.slane %v3343, 5
          %v3346 = vsel %vm1286, %v3341, %v3345
          %v3348 = vshrl.u32 %v3152, 16
          %v3350 = vrot.slane %v3348, 4
          %v3351 = vshll.u32 %v3152, 16
          %v3353 = vrot.slane %v3351, 5
          %v3354 = vor.u32 %v3350, %v3353
          %v3355 = vrot.slane %v3354, 4
          %v3357 = vshll.u32 %v3153, 16
          %v3359 = vrot.slane %v3357, 5
          %v3360 = vsel %vm1286, %v3355, %v3359
          %v3361 = vshrl.u32 %v3153, 16
          %v3363 = vrot.slane %v3361, 4
          %v3364 = vor.u32 %v3363, %v3359
          %v3365 = vrot.slane %v3364, 4
          %v3367 = vshll.u32 %v3154, 16
          %v3369 = vrot.slane %v3367, 5
          %v3370 = vsel %vm1286, %v3365, %v3369
          %v3372 = vshrl.u32 %v3155, 16
          %v3374 = vrot.slane %v3372, 4
          %v3375 = vshll.u32 %v3155, 16
          %v3377 = vrot.slane %v3375, 5
          %v3378 = vor.u32 %v3374, %v3377
          %v3379 = vrot.slane %v3378, 4
          %v3381 = vshll.u32 %v3156, 16
          %v3383 = vrot.slane %v3381, 5
          %v3384 = vsel %vm1286, %v3379, %v3383
          %v3385 = vshrl.u32 %v3156, 16
          %v3387 = vrot.slane %v3385, 4
          %v3388 = vor.u32 %v3387, %v3383
          %v3389 = vrot.slane %v3388, 4
          %v3391 = vshll.u32 %v3157, 16
          %v3393 = vrot.slane %v3391, 5
          %v3394 = vsel %vm1286, %v3389, %v3393
          %v3396 = vshrl.u32 %v3158, 16
          %v3398 = vrot.slane %v3396, 4
          %v3399 = vshll.u32 %v3158, 16
          %v3401 = vrot.slane %v3399, 5
          %v3402 = vor.u32 %v3398, %v3401
          %v3403 = vrot.slane %v3402, 4
          %v3405 = vshll.u32 %v3159, 16
          %v3407 = vrot.slane %v3405, 5
          %v3408 = vsel %vm1286, %v3403, %v3407
          %v3409 = vshrl.u32 %v3159, 16
          %v3411 = vrot.slane %v3409, 4
          %v3412 = vor.u32 %v3411, %v3407
          %v3413 = vrot.slane %v3412, 4
          %v3415 = vshll.u32 %v3160, 16
          %v3417 = vrot.slane %v3415, 5
          %v3418 = vsel %vm1286, %v3413, %v3417
          %v3420 = vshrl.u32 %v3161, 16
          %v3422 = vrot.slane %v3420, 4
          %v3423 = vshll.u32 %v3161, 16
          %v3425 = vrot.slane %v3423, 5
          %v3426 = vor.u32 %v3422, %v3425
          %v3427 = vrot.slane %v3426, 4
          %v3429 = vshll.u32 %v3162, 16
          %v3431 = vrot.slane %v3429, 5
          %v3432 = vsel %vm1286, %v3427, %v3431
          %v3433 = vshrl.u32 %v3162, 16
          %v3435 = vrot.slane %v3433, 4
          %v3436 = vor.u32 %v3435, %v3431
          %v3437 = vrot.slane %v3436, 4
          %v3439 = vshll.u32 %v3163, 16
          %v3441 = vrot.slane %v3439, 5
          %v3442 = vsel %vm1286, %v3437, %v3441
          %v3444 = vshrl.u32 %v3164, 16
          %v3446 = vrot.slane %v3444, 4
          %v3447 = vshll.u32 %v3164, 16
          %v3449 = vrot.slane %v3447, 5
          %v3450 = vor.u32 %v3446, %v3449
          %v3451 = vrot.slane %v3450, 4
          %v3453 = vshll.u32 %v3165, 16
          %v3455 = vrot.slane %v3453, 5
          %v3456 = vsel %vm1286, %v3451, %v3455
          %v3457 = vshrl.u32 %v3165, 16
          %v3459 = vrot.slane %v3457, 4
          %v3460 = vor.u32 %v3459, %v3455
          %v3461 = vrot.slane %v3460, 4
          %v3463 = vshll.u32 %v3166, 16
          %v3465 = vrot.slane %v3463, 5
          %v3466 = vsel %vm1286, %v3461, %v3465
          %v3468 = vshrl.u32 %v3167, 16
          %v3470 = vrot.slane %v3468, 4
          %v3471 = vshll.u32 %v3167, 16
          %v3473 = vrot.slane %v3471, 5
          %v3474 = vor.u32 %v3470, %v3473
          %v3475 = vrot.slane %v3474, 4
          %v3477 = vshll.u32 %v3168, 16
          %v3479 = vrot.slane %v3477, 5
          %v3480 = vsel %vm1286, %v3475, %v3479
          %v3481 = vshrl.u32 %v3168, 16
          %v3483 = vrot.slane %v3481, 4
          %v3484 = vor.u32 %v3483, %v3479
          %v3485 = vrot.slane %v3484, 4
          %v3487 = vshll.u32 %v3169, 16
          %v3489 = vrot.slane %v3487, 5
          %v3490 = vsel %vm1286, %v3485, %v3489
          %v3492 = vshrl.u32 %v3170, 16
          %v3494 = vrot.slane %v3492, 4
          %v3495 = vshll.u32 %v3170, 16
          %v3497 = vrot.slane %v3495, 5
          %v3498 = vor.u32 %v3494, %v3497
          %v3499 = vrot.slane %v3498, 4
          %v3501 = vshll.u32 %v3171, 16
          %v3503 = vrot.slane %v3501, 5
          %v3504 = vsel %vm1286, %v3499, %v3503
          %v3505 = vshrl.u32 %v3171, 16
          %v3507 = vrot.slane %v3505, 4
          %v3508 = vor.u32 %v3507, %v3503
          %v3509 = vrot.slane %v3508, 4
          %v3511 = vshll.u32 %v3172, 16
          %v3513 = vrot.slane %v3511, 5
          %v3514 = vsel %vm1286, %v3509, %v3513
          %v3516 = vshrl.u32 %v3173, 16
          %v3518 = vrot.slane %v3516, 4
          %v3519 = vshll.u32 %v3173, 16
          %v3521 = vrot.slane %v3519, 5
          %v3522 = vor.u32 %v3518, %v3521
          %v3523 = vrot.slane %v3522, 4
          %v3525 = vshll.u32 %v3174, 16
          %v3527 = vrot.slane %v3525, 5
          %v3528 = vsel %vm1286, %v3523, %v3527
          %v3529 = vshrl.u32 %v3174, 16
          %v3531 = vrot.slane %v3529, 4
          %v3532 = vor.u32 %v3531, %v3527
          %v3533 = vrot.slane %v3532, 4
          %v3535 = vshll.u32 %v3175, 16
          %v3537 = vrot.slane %v3535, 5
          %v3538 = vsel %vm1286, %v3533, %v3537
          %v3540 = vshrl.u32 %v3176, 16
          %v3542 = vrot.slane %v3540, 4
          %v3543 = vshll.u32 %v3176, 16
          %v3545 = vrot.slane %v3543, 5
          %v3546 = vor.u32 %v3542, %v3545
          %v3547 = vrot.slane %v3546, 4
          %v3549 = vshll.u32 %v3177, 16
          %v3551 = vrot.slane %v3549, 5
          %v3552 = vsel %vm1286, %v3547, %v3551
          %v3553 = vshrl.u32 %v3177, 16
          %v3555 = vrot.slane %v3553, 4
          %v3556 = vor.u32 %v3555, %v3551
          %v3557 = vrot.slane %v3556, 4
          %v3559 = vshll.u32 %v3178, 16
          %v3561 = vrot.slane %v3559, 5
          %v3562 = vsel %vm1286, %v3557, %v3561
          %v3563 = vunpack.c.l.b16 %v3192
          %v3564 = vunpack.c.l.b16 %v3202
          %v3565 = vunpack.c.l.b16 %v3216
          %v3566 = vunpack.c.l.b16 %v3226
          %v3567 = vunpack.c.l.b16 %v3240
          %v3568 = vunpack.c.l.b16 %v3250
          %v3569 = vunpack.c.l.b16 %v3264
          %v3570 = vunpack.c.l.b16 %v3274
          %v3571 = vunpack.c.l.b16 %v3288
          %v3572 = vunpack.c.l.b16 %v3298
          %v3573 = vunpack.c.l.b16 %v3312
          %v3574 = vunpack.c.l.b16 %v3322
          %v3575 = vunpack.c.l.b16 %v3336
          %v3576 = vunpack.c.l.b16 %v3346
          %v3577 = vunpack.c.l.b16 %v3360
          %v3578 = vunpack.c.l.b16 %v3370
          %v3579 = vunpack.c.l.b16 %v3384
          %v3580 = vunpack.c.l.b16 %v3394
          %v3581 = vunpack.c.l.b16 %v3408
          %v3582 = vunpack.c.l.b16 %v3418
          %v3583 = vunpack.c.l.b16 %v3432
          %v3584 = vunpack.c.l.b16 %v3442
          %v3585 = vunpack.c.l.b16 %v3456
          %v3586 = vunpack.c.l.b16 %v3466
          %v3587 = vunpack.c.l.b16 %v3480
          %v3588 = vunpack.c.l.b16 %v3490
          %v3589 = vunpack.c.l.b16 %v3504
          %v3590 = vunpack.c.l.b16 %v3514
          %v3591 = vunpack.c.l.b16 %v3528
          %v3592 = vunpack.c.l.b16 %v3538
          %v3593 = vunpack.c.l.b16 %v3552
          %v3594 = vunpack.c.l.b16 %v3562
          %v3595 = vpack.c.b16 %v3564, %v3563
          %v3596 = vpack.c.b16 %v3566, %v3565
          %v3597 = vpack.c.b16 %v3568, %v3567
          %v3598 = vpack.c.b16 %v3570, %v3569
          %v3599 = vpack.c.b16 %v3572, %v3571
          %v3600 = vpack.c.b16 %v3574, %v3573
          %v3601 = vpack.c.b16 %v3576, %v3575
          %v3602 = vpack.c.b16 %v3578, %v3577
          %v3603 = vpack.c.b16 %v3580, %v3579
          %v3604 = vpack.c.b16 %v3582, %v3581
          %v3605 = vpack.c.b16 %v3584, %v3583
          %v3606 = vpack.c.b16 %v3586, %v3585
          %v3607 = vpack.c.b16 %v3588, %v3587
          %v3608 = vpack.c.b16 %v3590, %v3589
          %v3609 = vpack.c.b16 %v3592, %v3591
          %v3610 = vpack.c.b16 %v3594, %v3593
          %3627 = vst [vmem:[#allocation3 + $0x38] sm:$0xff] %v3595
          %3628 = vst [vmem:[#allocation3 + $0x80] sm:$0xff] %v3596
          %3629 = vst [vmem:[#allocation3 + $0xc8] sm:$0xff] %v3597
          %3630 = vst [vmem:[#allocation3 + $0x110] sm:$0xff] %v3598
          %3631 = vst [vmem:[#allocation3 + $0x158] sm:$0xff] %v3599
          %3632 = vst [vmem:[#allocation3 + $0x1a0] sm:$0xff] %v3600
          %3633 = vst [vmem:[#allocation3 + $0x1e8] sm:$0xff] %v3601
          %3634 = vst [vmem:[#allocation3 + $0x230] sm:$0xff] %v3602
          %3635 = vst [vmem:[#allocation3 + $0x278] sm:$0xff] %v3603
          %3636 = vst [vmem:[#allocation3 + $0x2c0] sm:$0xff] %v3604
          %3637 = vst [vmem:[#allocation3 + $0x308] sm:$0xff] %v3605
          %3638 = vst [vmem:[#allocation3 + $0x350] sm:$0xff] %v3606
          %3639 = vst [vmem:[#allocation3 + $0x398] sm:$0xff] %v3607
          %3640 = vst [vmem:[#allocation3 + $0x3e0] sm:$0xff] %v3608
          %3641 = vst [vmem:[#allocation3 + $0x428] sm:$0xff] %v3609
          %3642 = vst [vmem:[#allocation3 + $0x470] sm:$0xff] %v3610
          %v3643 = vld [vmem:[%s2986] sm:$0xe]
          %v3644 = vld [vmem:[%s2986 + $0x4] sm:$0xf]
          %v3645 = vld [vmem:[%s2986 + $0x8] sm:$0x1]
          %v3646 = vld [vmem:[%s2986 + $0xc] sm:$0xe]
          %v3647 = vld [vmem:[%s2986 + $0x10] sm:$0xf]
          %v3648 = vld [vmem:[%s2986 + $0x14] sm:$0x1]
          %v3649 = vld [vmem:[%s2986 + $0x18] sm:$0xe]
          %v3650 = vld [vmem:[%s2986 + $0x1c] sm:$0xf]
          %v3651 = vld [vmem:[%s2986 + $0x20] sm:$0x1]
          %v3652 = vld [vmem:[%s2986 + $0x24] sm:$0xe]
          %v3653 = vld [vmem:[%s2986 + $0x28] sm:$0xf]
          %v3654 = vld [vmem:[%s2986 + $0x2c] sm:$0x1]
          %v3655 = vld [vmem:[%s2986 + $0x30] sm:$0xe]
          %v3656 = vld [vmem:[%s2986 + $0x34] sm:$0xf]
          %v3657 = vld [vmem:[%s2986 + $0x38] sm:$0x1]
          %v3658 = vld [vmem:[%s2986 + $0x3c] sm:$0xe]
          %v3659 = vld [vmem:[%s2986 + $0x40] sm:$0xf]
          %v3660 = vld [vmem:[%s2986 + $0x44] sm:$0x1]
          %v3661 = vld [vmem:[%s2986 + $0x48] sm:$0xe]
          %v3662 = vld [vmem:[%s2986 + $0x4c] sm:$0xf]
          %v3663 = vld [vmem:[%s2986 + $0x50] sm:$0x1]
          %v3664 = vld [vmem:[%s2986 + $0x54] sm:$0xe]
          %v3665 = vld [vmem:[%s2986 + $0x58] sm:$0xf]
          %v3666 = vld [vmem:[%s2986 + $0x5c] sm:$0x1]
          %v3667 = vld [vmem:[%s2986 + $0x60] sm:$0xe]
          %v3668 = vld [vmem:[%s2986 + $0x64] sm:$0xf]
          %v3669 = vld [vmem:[%s2986 + $0x68] sm:$0x1]
          %v3670 = vld [vmem:[%s2986 + $0x6c] sm:$0xe]
          %v3671 = vld [vmem:[%s2986 + $0x70] sm:$0xf]
          %v3672 = vld [vmem:[%s2986 + $0x74] sm:$0x1]
          %v3673 = vld [vmem:[%s2986 + $0x78] sm:$0xe]
          %v3674 = vld [vmem:[%s2986 + $0x7c] sm:$0xf]
          %v3675 = vld [vmem:[%s2986 + $0x80] sm:$0x1]
          %v3676 = vld [vmem:[%s2986 + $0x84] sm:$0xe]
          %v3677 = vld [vmem:[%s2986 + $0x88] sm:$0xf]
          %v3678 = vld [vmem:[%s2986 + $0x8c] sm:$0x1]
          %v3679 = vld [vmem:[%s2986 + $0x90] sm:$0xe]
          %v3680 = vld [vmem:[%s2986 + $0x94] sm:$0xf]
          %v3681 = vld [vmem:[%s2986 + $0x98] sm:$0x1]
          %v3682 = vld [vmem:[%s2986 + $0x9c] sm:$0xe]
          %v3683 = vld [vmem:[%s2986 + $0xa0] sm:$0xf]
          %v3684 = vld [vmem:[%s2986 + $0xa4] sm:$0x1]
          %v3685 = vld [vmem:[%s2986 + $0xa8] sm:$0xe]
          %v3686 = vld [vmem:[%s2986 + $0xac] sm:$0xf]
          %v3687 = vld [vmem:[%s2986 + $0xb0] sm:$0x1]
          %v3688 = vld [vmem:[%s2986 + $0xb4] sm:$0xe]
          %v3689 = vld [vmem:[%s2986 + $0xb8] sm:$0xf]
          %v3690 = vld [vmem:[%s2986 + $0xbc] sm:$0x1]
          %v3739 = vrot.slane %v3643, 5
          %v3740 = vrot.slane %v3739, 4
          %v3741 = vrot.slane %v3644, 5
          %v3742 = vsel %vm1849, %v3740, %v3741
          %v3743 = vrot.slane %v3741, 4
          %v3744 = vrot.slane %v3645, 5
          %v3745 = vsel %vm1849, %v3743, %v3744
          %v3746 = vrot.slane %v3646, 5
          %v3747 = vrot.slane %v3746, 4
          %v3748 = vrot.slane %v3647, 5
          %v3749 = vsel %vm1849, %v3747, %v3748
          %v3750 = vrot.slane %v3748, 4
          %v3751 = vrot.slane %v3648, 5
          %v3752 = vsel %vm1849, %v3750, %v3751
          %v3753 = vrot.slane %v3649, 5
          %v3754 = vrot.slane %v3753, 4
          %v3755 = vrot.slane %v3650, 5
          %v3756 = vsel %vm1849, %v3754, %v3755
          %v3757 = vrot.slane %v3755, 4
          %v3758 = vrot.slane %v3651, 5
          %v3759 = vsel %vm1849, %v3757, %v3758
          %v3760 = vrot.slane %v3652, 5
          %v3761 = vrot.slane %v3760, 4
          %v3762 = vrot.slane %v3653, 5
          %v3763 = vsel %vm1849, %v3761, %v3762
          %v3764 = vrot.slane %v3762, 4
          %v3765 = vrot.slane %v3654, 5
          %v3766 = vsel %vm1849, %v3764, %v3765
          %v3767 = vrot.slane %v3655, 5
          %v3768 = vrot.slane %v3767, 4
          %v3769 = vrot.slane %v3656, 5
          %v3770 = vsel %vm1849, %v3768, %v3769
          %v3771 = vrot.slane %v3769, 4
          %v3772 = vrot.slane %v3657, 5
          %v3773 = vsel %vm1849, %v3771, %v3772
          %v3774 = vrot.slane %v3658, 5
          %v3775 = vrot.slane %v3774, 4
          %v3776 = vrot.slane %v3659, 5
          %v3777 = vsel %vm1849, %v3775, %v3776
          %v3778 = vrot.slane %v3776, 4
          %v3779 = vrot.slane %v3660, 5
          %v3780 = vsel %vm1849, %v3778, %v3779
          %v3781 = vrot.slane %v3661, 5
          %v3782 = vrot.slane %v3781, 4
          %v3783 = vrot.slane %v3662, 5
          %v3784 = vsel %vm1849, %v3782, %v3783
          %v3785 = vrot.slane %v3783, 4
          %v3786 = vrot.slane %v3663, 5
          %v3787 = vsel %vm1849, %v3785, %v3786
          %v3788 = vrot.slane %v3664, 5
          %v3789 = vrot.slane %v3788, 4
          %v3790 = vrot.slane %v3665, 5
          %v3791 = vsel %vm1849, %v3789, %v3790
          %v3792 = vrot.slane %v3790, 4
          %v3793 = vrot.slane %v3666, 5
          %v3794 = vsel %vm1849, %v3792, %v3793
          %v3795 = vrot.slane %v3667, 5
          %v3796 = vrot.slane %v3795, 4
          %v3797 = vrot.slane %v3668, 5
          %v3798 = vsel %vm1849, %v3796, %v3797
          %v3799 = vrot.slane %v3797, 4
          %v3800 = vrot.slane %v3669, 5
          %v3801 = vsel %vm1849, %v3799, %v3800
          %v3802 = vrot.slane %v3670, 5
          %v3803 = vrot.slane %v3802, 4
          %v3804 = vrot.slane %v3671, 5
          %v3805 = vsel %vm1849, %v3803, %v3804
          %v3806 = vrot.slane %v3804, 4
          %v3807 = vrot.slane %v3672, 5
          %v3808 = vsel %vm1849, %v3806, %v3807
          %v3809 = vrot.slane %v3673, 5
          %v3810 = vrot.slane %v3809, 4
          %v3811 = vrot.slane %v3674, 5
          %v3812 = vsel %vm1849, %v3810, %v3811
          %v3813 = vrot.slane %v3811, 4
          %v3814 = vrot.slane %v3675, 5
          %v3815 = vsel %vm1849, %v3813, %v3814
          %v3816 = vrot.slane %v3676, 5
          %v3817 = vrot.slane %v3816, 4
          %v3818 = vrot.slane %v3677, 5
          %v3819 = vsel %vm1849, %v3817, %v3818
          %v3820 = vrot.slane %v3818, 4
          %v3821 = vrot.slane %v3678, 5
          %v3822 = vsel %vm1849, %v3820, %v3821
          %v3823 = vrot.slane %v3679, 5
          %v3824 = vrot.slane %v3823, 4
          %v3825 = vrot.slane %v3680, 5
          %v3826 = vsel %vm1849, %v3824, %v3825
          %v3827 = vrot.slane %v3825, 4
          %v3828 = vrot.slane %v3681, 5
          %v3829 = vsel %vm1849, %v3827, %v3828
          %v3830 = vrot.slane %v3682, 5
          %v3831 = vrot.slane %v3830, 4
          %v3832 = vrot.slane %v3683, 5
          %v3833 = vsel %vm1849, %v3831, %v3832
          %v3834 = vrot.slane %v3832, 4
          %v3835 = vrot.slane %v3684, 5
          %v3836 = vsel %vm1849, %v3834, %v3835
          %v3837 = vrot.slane %v3685, 5
          %v3838 = vrot.slane %v3837, 4
          %v3839 = vrot.slane %v3686, 5
          %v3840 = vsel %vm1849, %v3838, %v3839
          %v3841 = vrot.slane %v3839, 4
          %v3842 = vrot.slane %v3687, 5
          %v3843 = vsel %vm1849, %v3841, %v3842
          %v3844 = vrot.slane %v3688, 5
          %v3845 = vrot.slane %v3844, 4
          %v3846 = vrot.slane %v3689, 5
          %v3847 = vsel %vm1849, %v3845, %v3846
          %v3848 = vrot.slane %v3846, 4
          %v3849 = vrot.slane %v3690, 5
          %v3850 = vsel %vm1849, %v3848, %v3849
          %v3851 = vunpack.c.l.b16 %v3742
          %v3852 = vunpack.c.l.b16 %v3745
          %v3853 = vunpack.c.l.b16 %v3749
          %v3854 = vunpack.c.l.b16 %v3752
          %v3855 = vunpack.c.l.b16 %v3756
          %v3856 = vunpack.c.l.b16 %v3759
          %v3857 = vunpack.c.l.b16 %v3763
          %v3858 = vunpack.c.l.b16 %v3766
          %v3859 = vunpack.c.l.b16 %v3770
          %v3860 = vunpack.c.l.b16 %v3773
          %v3861 = vunpack.c.l.b16 %v3777
          %v3862 = vunpack.c.l.b16 %v3780
          %v3863 = vunpack.c.l.b16 %v3784
          %v3864 = vunpack.c.l.b16 %v3787
          %v3865 = vunpack.c.l.b16 %v3791
          %v3866 = vunpack.c.l.b16 %v3794
          %v3867 = vunpack.c.l.b16 %v3798
          %v3868 = vunpack.c.l.b16 %v3801
          %v3869 = vunpack.c.l.b16 %v3805
          %v3870 = vunpack.c.l.b16 %v3808
          %v3871 = vunpack.c.l.b16 %v3812
          %v3872 = vunpack.c.l.b16 %v3815
          %v3873 = vunpack.c.l.b16 %v3819
          %v3874 = vunpack.c.l.b16 %v3822
          %v3875 = vunpack.c.l.b16 %v3826
          %v3876 = vunpack.c.l.b16 %v3829
          %v3877 = vunpack.c.l.b16 %v3833
          %v3878 = vunpack.c.l.b16 %v3836
          %v3879 = vunpack.c.l.b16 %v3840
          %v3880 = vunpack.c.l.b16 %v3843
          %v3881 = vunpack.c.l.b16 %v3847
          %v3882 = vunpack.c.l.b16 %v3850
          %v3883 = vpack.c.b16 %v3852, %v3851
          %v3884 = vpack.c.b16 %v3854, %v3853
          %v3885 = vpack.c.b16 %v3856, %v3855
          %v3886 = vpack.c.b16 %v3858, %v3857
          %v3887 = vpack.c.b16 %v3860, %v3859
          %v3888 = vpack.c.b16 %v3862, %v3861
          %v3889 = vpack.c.b16 %v3864, %v3863
          %v3890 = vpack.c.b16 %v3866, %v3865
          %v3891 = vpack.c.b16 %v3868, %v3867
          %v3892 = vpack.c.b16 %v3870, %v3869
          %v3893 = vpack.c.b16 %v3872, %v3871
          %v3894 = vpack.c.b16 %v3874, %v3873
          %v3895 = vpack.c.b16 %v3876, %v3875
          %v3896 = vpack.c.b16 %v3878, %v3877
          %v3897 = vpack.c.b16 %v3880, %v3879
          %v3898 = vpack.c.b16 %v3882, %v3881
          %3915 = vst [vmem:[#allocation3 + $0x40] sm:$0xff] %v3883
          %3916 = vst [vmem:[#allocation3 + $0x88] sm:$0xff] %v3884
          %3917 = vst [vmem:[#allocation3 + $0xd0] sm:$0xff] %v3885
          %3918 = vst [vmem:[#allocation3 + $0x118] sm:$0xff] %v3886
          %3919 = vst [vmem:[#allocation3 + $0x160] sm:$0xff] %v3887
          %3920 = vst [vmem:[#allocation3 + $0x1a8] sm:$0xff] %v3888
          %3921 = vst [vmem:[#allocation3 + $0x1f0] sm:$0xff] %v3889
          %3922 = vst [vmem:[#allocation3 + $0x238] sm:$0xff] %v3890
          %3923 = vst [vmem:[#allocation3 + $0x280] sm:$0xff] %v3891
          %3924 = vst [vmem:[#allocation3 + $0x2c8] sm:$0xff] %v3892
          %3925 = vst [vmem:[#allocation3 + $0x310] sm:$0xff] %v3893
          %3926 = vst [vmem:[#allocation3 + $0x358] sm:$0xff] %v3894
          %3927 = vst [vmem:[#allocation3 + $0x3a0] sm:$0xff] %v3895
          %3928 = vst [vmem:[#allocation3 + $0x3e8] sm:$0xff] %v3896
          %3929 = vst [vmem:[#allocation3 + $0x430] sm:$0xff] %v3897
          %3930 = vst [vmem:[#allocation3 + $0x478] sm:$0xff] %v3898
        $region48: #{tpu_custom_call.1} parent=35 // pred_fallthru
          _
        %v3931 = vld [vmem:[#allocation3] sm:$0xff]
        %v3932 = vld [vmem:[#allocation3 + $0x8] sm:$0xff]
        %v3933 = vld [vmem:[#allocation3 + $0x10] sm:$0xff]
        %v3934 = vld [vmem:[#allocation3 + $0x18] sm:$0xff]
        %v3935 = vld [vmem:[#allocation3 + $0x20] sm:$0xff]
        %v3936 = vld [vmem:[#allocation3 + $0x28] sm:$0xff]
        %v3937 = vld [vmem:[#allocation3 + $0x30] sm:$0xff]
        %v3938 = vld [vmem:[#allocation3 + $0x38] sm:$0xff]
        %v3939 = vld [vmem:[#allocation3 + $0x40] sm:$0xff]
        %v3940 = vld [vmem:[#allocation3 + $0x48] sm:$0xff]
        %v3941 = vld [vmem:[#allocation3 + $0x50] sm:$0xff]
        %v3942 = vld [vmem:[#allocation3 + $0x58] sm:$0xff]
        %v3943 = vld [vmem:[#allocation3 + $0x60] sm:$0xff]
        %v3944 = vld [vmem:[#allocation3 + $0x68] sm:$0xff]
        %v3945 = vld [vmem:[#allocation3 + $0x70] sm:$0xff]
        %v3946 = vld [vmem:[#allocation3 + $0x78] sm:$0xff]
        %v3947 = vld [vmem:[#allocation3 + $0x80] sm:$0xff]
        %v3948 = vld [vmem:[#allocation3 + $0x88] sm:$0xff]
        %v3949 = vld [vmem:[#allocation3 + $0x90] sm:$0xff]
        %v3950 = vld [vmem:[#allocation3 + $0x98] sm:$0xff]
        %v3951 = vld [vmem:[#allocation3 + $0xa0] sm:$0xff]
        %v3952 = vld [vmem:[#allocation3 + $0xa8] sm:$0xff]
        %v3953 = vld [vmem:[#allocation3 + $0xb0] sm:$0xff]
        %v3954 = vld [vmem:[#allocation3 + $0xb8] sm:$0xff]
        %v3955 = vld [vmem:[#allocation3 + $0xc0] sm:$0xff]
        %v3956 = vld [vmem:[#allocation3 + $0xc8] sm:$0xff]
        %v3957 = vld [vmem:[#allocation3 + $0xd0] sm:$0xff]
        %v3958 = vld [vmem:[#allocation3 + $0xd8] sm:$0xff]
        %v3959 = vld [vmem:[#allocation3 + $0xe0] sm:$0xff]
        %v3960 = vld [vmem:[#allocation3 + $0xe8] sm:$0xff]
        %v3961 = vld [vmem:[#allocation3 + $0xf0] sm:$0xff]
        %v3962 = vld [vmem:[#allocation3 + $0xf8] sm:$0xff]
        %v3963 = vld [vmem:[#allocation3 + $0x100] sm:$0xff]
        %v3964 = vld [vmem:[#allocation3 + $0x108] sm:$0xff]
        %v3965 = vld [vmem:[#allocation3 + $0x110] sm:$0xff]
        %v3966 = vld [vmem:[#allocation3 + $0x118] sm:$0xff]
        %v3967 = vld [vmem:[#allocation3 + $0x120] sm:$0xff]
        %v3968 = vld [vmem:[#allocation3 + $0x128] sm:$0xff]
        %v3969 = vld [vmem:[#allocation3 + $0x130] sm:$0xff]
        %v3970 = vld [vmem:[#allocation3 + $0x138] sm:$0xff]
        %v3971 = vld [vmem:[#allocation3 + $0x140] sm:$0xff]
        %v3972 = vld [vmem:[#allocation3 + $0x148] sm:$0xff]
        %v3973 = vld [vmem:[#allocation3 + $0x150] sm:$0xff]
        %v3974 = vld [vmem:[#allocation3 + $0x158] sm:$0xff]
        %v3975 = vld [vmem:[#allocation3 + $0x160] sm:$0xff]
        %v3976 = vld [vmem:[#allocation3 + $0x168] sm:$0xff]
        %v3977 = vld [vmem:[#allocation3 + $0x170] sm:$0xff]
        %v3978 = vld [vmem:[#allocation3 + $0x178] sm:$0xff]
        %v3979 = vld [vmem:[#allocation3 + $0x180] sm:$0xff]
        %v3980 = vld [vmem:[#allocation3 + $0x188] sm:$0xff]
        %v3981 = vld [vmem:[#allocation3 + $0x190] sm:$0xff]
        %v3982 = vld [vmem:[#allocation3 + $0x198] sm:$0xff]
        %v3983 = vld [vmem:[#allocation3 + $0x1a0] sm:$0xff]
        %v3984 = vld [vmem:[#allocation3 + $0x1a8] sm:$0xff]
        %v3985 = vld [vmem:[#allocation3 + $0x1b0] sm:$0xff]
        %v3986 = vld [vmem:[#allocation3 + $0x1b8] sm:$0xff]
        %v3987 = vld [vmem:[#allocation3 + $0x1c0] sm:$0xff]
        %v3988 = vld [vmem:[#allocation3 + $0x1c8] sm:$0xff]
        %v3989 = vld [vmem:[#allocation3 + $0x1d0] sm:$0xff]
        %v3990 = vld [vmem:[#allocation3 + $0x1d8] sm:$0xff]
        %v3991 = vld [vmem:[#allocation3 + $0x1e0] sm:$0xff]
        %v3992 = vld [vmem:[#allocation3 + $0x1e8] sm:$0xff]
        %v3993 = vld [vmem:[#allocation3 + $0x1f0] sm:$0xff]
        %v3994 = vld [vmem:[#allocation3 + $0x1f8] sm:$0xff]
        %v3995 = vld [vmem:[#allocation3 + $0x200] sm:$0xff]
        %v3996 = vld [vmem:[#allocation3 + $0x208] sm:$0xff]
        %v3997 = vld [vmem:[#allocation3 + $0x210] sm:$0xff]
        %v3998 = vld [vmem:[#allocation3 + $0x218] sm:$0xff]
        %v3999 = vld [vmem:[#allocation3 + $0x220] sm:$0xff]
        %v4000 = vld [vmem:[#allocation3 + $0x228] sm:$0xff]
        %v4001 = vld [vmem:[#allocation3 + $0x230] sm:$0xff]
        %v4002 = vld [vmem:[#allocation3 + $0x238] sm:$0xff]
        %v4003 = vld [vmem:[#allocation3 + $0x240] sm:$0xff]
        %v4004 = vld [vmem:[#allocation3 + $0x248] sm:$0xff]
        %v4005 = vld [vmem:[#allocation3 + $0x250] sm:$0xff]
        %v4006 = vld [vmem:[#allocation3 + $0x258] sm:$0xff]
        %v4007 = vld [vmem:[#allocation3 + $0x260] sm:$0xff]
        %v4008 = vld [vmem:[#allocation3 + $0x268] sm:$0xff]
        %v4009 = vld [vmem:[#allocation3 + $0x270] sm:$0xff]
        %v4010 = vld [vmem:[#allocation3 + $0x278] sm:$0xff]
        %v4011 = vld [vmem:[#allocation3 + $0x280] sm:$0xff]
        %v4012 = vld [vmem:[#allocation3 + $0x288] sm:$0xff]
        %v4013 = vld [vmem:[#allocation3 + $0x290] sm:$0xff]
        %v4014 = vld [vmem:[#allocation3 + $0x298] sm:$0xff]
        %v4015 = vld [vmem:[#allocation3 + $0x2a0] sm:$0xff]
        %v4016 = vld [vmem:[#allocation3 + $0x2a8] sm:$0xff]
        %v4017 = vld [vmem:[#allocation3 + $0x2b0] sm:$0xff]
        %v4018 = vld [vmem:[#allocation3 + $0x2b8] sm:$0xff]
        %v4019 = vld [vmem:[#allocation3 + $0x2c0] sm:$0xff]
        %v4020 = vld [vmem:[#allocation3 + $0x2c8] sm:$0xff]
        %v4021 = vld [vmem:[#allocation3 + $0x2d0] sm:$0xff]
        %v4022 = vld [vmem:[#allocation3 + $0x2d8] sm:$0xff]
        %v4023 = vld [vmem:[#allocation3 + $0x2e0] sm:$0xff]
        %v4024 = vld [vmem:[#allocation3 + $0x2e8] sm:$0xff]
        %v4025 = vld [vmem:[#allocation3 + $0x2f0] sm:$0xff]
        %v4026 = vld [vmem:[#allocation3 + $0x2f8] sm:$0xff]
        %v4027 = vld [vmem:[#allocation3 + $0x300] sm:$0xff]
        %v4028 = vld [vmem:[#allocation3 + $0x308] sm:$0xff]
        %v4029 = vld [vmem:[#allocation3 + $0x310] sm:$0xff]
        %v4030 = vld [vmem:[#allocation3 + $0x318] sm:$0xff]
        %v4031 = vld [vmem:[#allocation3 + $0x320] sm:$0xff]
        %v4032 = vld [vmem:[#allocation3 + $0x328] sm:$0xff]
        %v4033 = vld [vmem:[#allocation3 + $0x330] sm:$0xff]
        %v4034 = vld [vmem:[#allocation3 + $0x338] sm:$0xff]
        %v4035 = vld [vmem:[#allocation3 + $0x340] sm:$0xff]
        %v4036 = vld [vmem:[#allocation3 + $0x348] sm:$0xff]
        %v4037 = vld [vmem:[#allocation3 + $0x350] sm:$0xff]
        %v4038 = vld [vmem:[#allocation3 + $0x358] sm:$0xff]
        %v4039 = vld [vmem:[#allocation3 + $0x360] sm:$0xff]
        %v4040 = vld [vmem:[#allocation3 + $0x368] sm:$0xff]
        %v4041 = vld [vmem:[#allocation3 + $0x370] sm:$0xff]
        %v4042 = vld [vmem:[#allocation3 + $0x378] sm:$0xff]
        %v4043 = vld [vmem:[#allocation3 + $0x380] sm:$0xff]
        %v4044 = vld [vmem:[#allocation3 + $0x388] sm:$0xff]
        %v4045 = vld [vmem:[#allocation3 + $0x390] sm:$0xff]
        %v4046 = vld [vmem:[#allocation3 + $0x398] sm:$0xff]
        %v4047 = vld [vmem:[#allocation3 + $0x3a0] sm:$0xff]
        %v4048 = vld [vmem:[#allocation3 + $0x3a8] sm:$0xff]
        %v4049 = vld [vmem:[#allocation3 + $0x3b0] sm:$0xff]
        %v4050 = vld [vmem:[#allocation3 + $0x3b8] sm:$0xff]
        %v4051 = vld [vmem:[#allocation3 + $0x3c0] sm:$0xff]
        %v4052 = vld [vmem:[#allocation3 + $0x3c8] sm:$0xff]
        %v4053 = vld [vmem:[#allocation3 + $0x3d0] sm:$0xff]
        %v4054 = vld [vmem:[#allocation3 + $0x3d8] sm:$0xff]
        %v4055 = vld [vmem:[#allocation3 + $0x3e0] sm:$0xff]
        %v4056 = vld [vmem:[#allocation3 + $0x3e8] sm:$0xff]
        %v4057 = vld [vmem:[#allocation3 + $0x3f0] sm:$0xff]
        %v4058 = vld [vmem:[#allocation3 + $0x3f8] sm:$0xff]
        %v4059 = vld [vmem:[#allocation3 + $0x400] sm:$0xff]
        %v4060 = vld [vmem:[#allocation3 + $0x408] sm:$0xff]
        %v4061 = vld [vmem:[#allocation3 + $0x410] sm:$0xff]
        %v4062 = vld [vmem:[#allocation3 + $0x418] sm:$0xff]
        %v4063 = vld [vmem:[#allocation3 + $0x420] sm:$0xff]
        %v4064 = vld [vmem:[#allocation3 + $0x428] sm:$0xff]
        %v4065 = vld [vmem:[#allocation3 + $0x430] sm:$0xff]
        %v4066 = vld [vmem:[#allocation3 + $0x438] sm:$0xff]
        %v4067 = vld [vmem:[#allocation3 + $0x440] sm:$0xff]
        %v4068 = vld [vmem:[#allocation3 + $0x448] sm:$0xff]
        %v4069 = vld [vmem:[#allocation3 + $0x450] sm:$0xff]
        %v4070 = vld [vmem:[#allocation3 + $0x458] sm:$0xff]
        %v4071 = vld [vmem:[#allocation3 + $0x460] sm:$0xff]
        %v4072 = vld [vmem:[#allocation3 + $0x468] sm:$0xff]
        %v4073 = vld [vmem:[#allocation3 + $0x470] sm:$0xff]
        %v4074 = vld [vmem:[#allocation3 + $0x478] sm:$0xff]
        %v4075 = vld [vmem:[#allocation7] sm:$0xf]
        %v4076 = vld [vmem:[#allocation7 + $0x4] sm:$0xf]
        %v4077 = vld [vmem:[#allocation7 + $0x8] sm:$0xf]
        %v4078 = vld [vmem:[#allocation7 + $0xc] sm:$0xf]
        %v4079 = vld [vmem:[#allocation7 + $0x10] sm:$0xf]
        %v4080 = vld [vmem:[#allocation7 + $0x14] sm:$0xf]
        %v4081 = vld [vmem:[#allocation7 + $0x18] sm:$0xf]
        %v4082 = vld [vmem:[#allocation7 + $0x1c] sm:$0xf]
        %v4083 = vld [vmem:[#allocation7 + $0x20] sm:$0xf]
        %v4084 = vld [vmem:[#allocation7 + $0x24] sm:$0xf]
        %v4085 = vld [vmem:[#allocation7 + $0x28] sm:$0xf]
        %v4086 = vld [vmem:[#allocation7 + $0x2c] sm:$0xf]
        %v4087 = vld [vmem:[#allocation7 + $0x30] sm:$0xf]
        %v4088 = vld [vmem:[#allocation7 + $0x34] sm:$0xf]
        %v4089 = vld [vmem:[#allocation7 + $0x38] sm:$0xf]
        %v4090 = vld [vmem:[#allocation7 + $0x3c] sm:$0xf]
        %v4091 = vld [vmem:[#allocation7 + $0x40] sm:$0xf]
        %v4092 = vld [vmem:[#allocation7 + $0x44] sm:$0xf]
        %v4093 = vld [vmem:[#allocation7 + $0x48] sm:$0xf]
        %v4094 = vld [vmem:[#allocation7 + $0x4c] sm:$0xf]
        %v4095 = vld [vmem:[#allocation7 + $0x50] sm:$0xf]
        %v4096 = vld [vmem:[#allocation7 + $0x54] sm:$0xf]
        %v4097 = vld [vmem:[#allocation7 + $0x58] sm:$0xf]
        %v4098 = vld [vmem:[#allocation7 + $0x5c] sm:$0xf]
        %v4099 = vld [vmem:[#allocation7 + $0x60] sm:$0xf]
        %v4100 = vld [vmem:[#allocation7 + $0x64] sm:$0xf]
        %v4101 = vld [vmem:[#allocation7 + $0x68] sm:$0xf]
        %v4102 = vld [vmem:[#allocation7 + $0x6c] sm:$0xf]
        %v4103 = vld [vmem:[#allocation7 + $0x70] sm:$0xf]
        %v4104 = vld [vmem:[#allocation7 + $0x74] sm:$0xf]
        %v4105 = vld [vmem:[#allocation7 + $0x78] sm:$0xf]
        %v4106 = vld [vmem:[#allocation7 + $0x7c] sm:$0xf]
        %v4107 = vld [vmem:[#allocation7 + $0x80] sm:$0xf]
        %v4108 = vld [vmem:[#allocation7 + $0x84] sm:$0xf]
        %v4109 = vld [vmem:[#allocation7 + $0x88] sm:$0xf]
        %v4110 = vld [vmem:[#allocation7 + $0x8c] sm:$0xf]
        %v4111 = vld [vmem:[#allocation7 + $0x90] sm:$0xf]
        %v4112 = vld [vmem:[#allocation7 + $0x94] sm:$0xf]
        %v4113 = vld [vmem:[#allocation7 + $0x98] sm:$0xf]
        %v4114 = vld [vmem:[#allocation7 + $0x9c] sm:$0xf]
        %v4115 = vld [vmem:[#allocation7 + $0xa0] sm:$0xf]
        %v4116 = vld [vmem:[#allocation7 + $0xa4] sm:$0xf]
        %v4117 = vld [vmem:[#allocation7 + $0xa8] sm:$0xf]
        %v4118 = vld [vmem:[#allocation7 + $0xac] sm:$0xf]
        %v4119 = vld [vmem:[#allocation7 + $0xb0] sm:$0xf]
        %v4120 = vld [vmem:[#allocation7 + $0xb4] sm:$0xf]
        %v4121 = vld [vmem:[#allocation7 + $0xb8] sm:$0xf]
        %v4122 = vld [vmem:[#allocation7 + $0xbc] sm:$0xf]
        %v4123 = vld [vmem:[#allocation7 + $0xc0] sm:$0xf]
        %v4124 = vld [vmem:[#allocation7 + $0xc4] sm:$0xf]
        %v4125 = vld [vmem:[#allocation7 + $0xc8] sm:$0xf]
        %v4126 = vld [vmem:[#allocation7 + $0xcc] sm:$0xf]
        %v4127 = vld [vmem:[#allocation7 + $0xd0] sm:$0xf]
        %v4128 = vld [vmem:[#allocation7 + $0xd4] sm:$0xf]
        %v4129 = vld [vmem:[#allocation7 + $0xd8] sm:$0xf]
        %v4130 = vld [vmem:[#allocation7 + $0xdc] sm:$0xf]
        %v4131 = vld [vmem:[#allocation7 + $0xe0] sm:$0xf]
        %v4132 = vld [vmem:[#allocation7 + $0xe4] sm:$0xf]
        %v4133 = vld [vmem:[#allocation7 + $0xe8] sm:$0xf]
        %v4134 = vld [vmem:[#allocation7 + $0xec] sm:$0xf]
        %v4135 = vld [vmem:[#allocation7 + $0xf0] sm:$0xf]
        %v4136 = vld [vmem:[#allocation7 + $0xf4] sm:$0xf]
        %v4137 = vld [vmem:[#allocation7 + $0xf8] sm:$0xf]
        %v4138 = vld [vmem:[#allocation7 + $0xfc] sm:$0xf]
        %v4139 = vld [vmem:[#allocation7 + $0x100] sm:$0xf]
        %v4140 = vld [vmem:[#allocation7 + $0x104] sm:$0xf]
        %v4141 = vld [vmem:[#allocation7 + $0x108] sm:$0xf]
        %v4142 = vld [vmem:[#allocation7 + $0x10c] sm:$0xf]
        %v4143 = vld [vmem:[#allocation7 + $0x110] sm:$0xf]
        %v4144 = vld [vmem:[#allocation7 + $0x114] sm:$0xf]
        %v4145 = vld [vmem:[#allocation7 + $0x118] sm:$0xf]
        %v4146 = vld [vmem:[#allocation7 + $0x11c] sm:$0xf]
        %v4147 = vld [vmem:[#allocation7 + $0x120] sm:$0xf]
        %v4148 = vld [vmem:[#allocation7 + $0x124] sm:$0xf]
        %v4149 = vld [vmem:[#allocation7 + $0x128] sm:$0xf]
        %v4150 = vld [vmem:[#allocation7 + $0x12c] sm:$0xf]
        %v4151 = vld [vmem:[#allocation7 + $0x130] sm:$0xf]
        %v4152 = vld [vmem:[#allocation7 + $0x134] sm:$0xf]
        %v4153 = vld [vmem:[#allocation7 + $0x138] sm:$0xf]
        %v4154 = vld [vmem:[#allocation7 + $0x13c] sm:$0xf]
        %v4155 = vld [vmem:[#allocation7 + $0x140] sm:$0xf]
        %v4156 = vld [vmem:[#allocation7 + $0x144] sm:$0xf]
        %v4157 = vld [vmem:[#allocation7 + $0x148] sm:$0xf]
        %v4158 = vld [vmem:[#allocation7 + $0x14c] sm:$0xf]
        %v4159 = vld [vmem:[#allocation7 + $0x150] sm:$0xf]
        %v4160 = vld [vmem:[#allocation7 + $0x154] sm:$0xf]
        %v4161 = vld [vmem:[#allocation7 + $0x158] sm:$0xf]
        %v4162 = vld [vmem:[#allocation7 + $0x15c] sm:$0xf]
        %v4163 = vld [vmem:[#allocation7 + $0x160] sm:$0xf]
        %v4164 = vld [vmem:[#allocation7 + $0x164] sm:$0xf]
        %v4165 = vld [vmem:[#allocation7 + $0x168] sm:$0xf]
        %v4166 = vld [vmem:[#allocation7 + $0x16c] sm:$0xf]
        %v4167 = vld [vmem:[#allocation7 + $0x170] sm:$0xf]
        %v4168 = vld [vmem:[#allocation7 + $0x174] sm:$0xf]
        %v4169 = vld [vmem:[#allocation7 + $0x178] sm:$0xf]
        %v4170 = vld [vmem:[#allocation7 + $0x17c] sm:$0xf]
        %v4171 = vld [vmem:[#allocation7 + $0x180] sm:$0xf]
        %v4172 = vld [vmem:[#allocation7 + $0x184] sm:$0xf]
        %v4173 = vld [vmem:[#allocation7 + $0x188] sm:$0xf]
        %v4174 = vld [vmem:[#allocation7 + $0x18c] sm:$0xf]
        %v4175 = vld [vmem:[#allocation7 + $0x190] sm:$0xf]
        %v4176 = vld [vmem:[#allocation7 + $0x194] sm:$0xf]
        %v4177 = vld [vmem:[#allocation7 + $0x198] sm:$0xf]
        %v4178 = vld [vmem:[#allocation7 + $0x19c] sm:$0xf]
        %v4179 = vld [vmem:[#allocation7 + $0x1a0] sm:$0xf]
        %v4180 = vld [vmem:[#allocation7 + $0x1a4] sm:$0xf]
        %v4181 = vld [vmem:[#allocation7 + $0x1a8] sm:$0xf]
        %v4182 = vld [vmem:[#allocation7 + $0x1ac] sm:$0xf]
        %v4183 = vld [vmem:[#allocation7 + $0x1b0] sm:$0xf]
        %v4184 = vld [vmem:[#allocation7 + $0x1b4] sm:$0xf]
        %v4185 = vld [vmem:[#allocation7 + $0x1b8] sm:$0xf]
        %v4186 = vld [vmem:[#allocation7 + $0x1bc] sm:$0xf]
        %v4187 = vld [vmem:[#allocation7 + $0x1c0] sm:$0xf]
        %v4188 = vld [vmem:[#allocation7 + $0x1c4] sm:$0xf]
        %v4189 = vld [vmem:[#allocation7 + $0x1c8] sm:$0xf]
        %v4190 = vld [vmem:[#allocation7 + $0x1cc] sm:$0xf]
        %v4191 = vld [vmem:[#allocation7 + $0x1d0] sm:$0xf]
        %v4192 = vld [vmem:[#allocation7 + $0x1d4] sm:$0xf]
        %v4193 = vld [vmem:[#allocation7 + $0x1d8] sm:$0xf]
        %v4194 = vld [vmem:[#allocation7 + $0x1dc] sm:$0xf]
        %v4195 = vld [vmem:[#allocation7 + $0x1e0] sm:$0xf]
        %v4196 = vld [vmem:[#allocation7 + $0x1e4] sm:$0xf]
        %v4197 = vld [vmem:[#allocation7 + $0x1e8] sm:$0xf]
        %v4198 = vld [vmem:[#allocation7 + $0x1ec] sm:$0xf]
        %v4199 = vld [vmem:[#allocation7 + $0x1f0] sm:$0xf]
        %v4200 = vld [vmem:[#allocation7 + $0x1f4] sm:$0xf]
        %v4201 = vld [vmem:[#allocation7 + $0x1f8] sm:$0xf]
        %v4202 = vld [vmem:[#allocation7 + $0x1fc] sm:$0xf]
        %v4203 = vld [vmem:[#allocation7 + $0x200] sm:$0xf]
        %v4204 = vld [vmem:[#allocation7 + $0x204] sm:$0xf]
        %v4205 = vld [vmem:[#allocation7 + $0x208] sm:$0xf]
        %v4206 = vld [vmem:[#allocation7 + $0x20c] sm:$0xf]
        %v4207 = vld [vmem:[#allocation7 + $0x210] sm:$0xf]
        %v4208 = vld [vmem:[#allocation7 + $0x214] sm:$0xf]
        %v4209 = vld [vmem:[#allocation7 + $0x218] sm:$0xf]
        %v4210 = vld [vmem:[#allocation7 + $0x21c] sm:$0xf]
        %v4211 = vld [vmem:[#allocation7 + $0x220] sm:$0xf]
        %v4212 = vld [vmem:[#allocation7 + $0x224] sm:$0xf]
        %v4213 = vld [vmem:[#allocation7 + $0x228] sm:$0xf]
        %v4214 = vld [vmem:[#allocation7 + $0x22c] sm:$0xf]
        %v4215 = vld [vmem:[#allocation7 + $0x230] sm:$0xf]
        %v4216 = vld [vmem:[#allocation7 + $0x234] sm:$0xf]
        %v4217 = vld [vmem:[#allocation7 + $0x238] sm:$0xf]
        %v4218 = vld [vmem:[#allocation7 + $0x23c] sm:$0xf]
        %v4363 = vunpack.c.l.b16 %v4075
        %v4364 = vunpack.c.l.b16 %v4076
        %v4365 = vunpack.c.l.b16 %v4077
        %v4366 = vunpack.c.l.b16 %v4078
        %v4367 = vunpack.c.l.b16 %v4079
        %v4368 = vunpack.c.l.b16 %v4080
        %v4369 = vunpack.c.l.b16 %v4081
        %v4370 = vunpack.c.l.b16 %v4082
        %v4371 = vunpack.c.l.b16 %v4083
        %v4372 = vunpack.c.l.b16 %v4084
        %v4373 = vunpack.c.l.b16 %v4085
        %v4374 = vunpack.c.l.b16 %v4086
        %v4375 = vunpack.c.l.b16 %v4087
        %v4376 = vunpack.c.l.b16 %v4088
        %v4377 = vunpack.c.l.b16 %v4089
        %v4378 = vunpack.c.l.b16 %v4090
        %v4379 = vunpack.c.l.b16 %v4091
        %v4380 = vunpack.c.l.b16 %v4092
        %v4381 = vunpack.c.l.b16 %v4093
        %v4382 = vunpack.c.l.b16 %v4094
        %v4383 = vunpack.c.l.b16 %v4095
        %v4384 = vunpack.c.l.b16 %v4096
        %v4385 = vunpack.c.l.b16 %v4097
        %v4386 = vunpack.c.l.b16 %v4098
        %v4387 = vunpack.c.l.b16 %v4099
        %v4388 = vunpack.c.l.b16 %v4100
        %v4389 = vunpack.c.l.b16 %v4101
        %v4390 = vunpack.c.l.b16 %v4102
        %v4391 = vunpack.c.l.b16 %v4103
        %v4392 = vunpack.c.l.b16 %v4104
        %v4393 = vunpack.c.l.b16 %v4105
        %v4394 = vunpack.c.l.b16 %v4106
        %v4395 = vunpack.c.l.b16 %v4107
        %v4396 = vunpack.c.l.b16 %v4108
        %v4397 = vunpack.c.l.b16 %v4109
        %v4398 = vunpack.c.l.b16 %v4110
        %v4399 = vunpack.c.l.b16 %v4111
        %v4400 = vunpack.c.l.b16 %v4112
        %v4401 = vunpack.c.l.b16 %v4113
        %v4402 = vunpack.c.l.b16 %v4114
        %v4403 = vunpack.c.l.b16 %v4115
        %v4404 = vunpack.c.l.b16 %v4116
        %v4405 = vunpack.c.l.b16 %v4117
        %v4406 = vunpack.c.l.b16 %v4118
        %v4407 = vunpack.c.l.b16 %v4119
        %v4408 = vunpack.c.l.b16 %v4120
        %v4409 = vunpack.c.l.b16 %v4121
        %v4410 = vunpack.c.l.b16 %v4122
        %v4411 = vunpack.c.l.b16 %v4123
        %v4412 = vunpack.c.l.b16 %v4124
        %v4413 = vunpack.c.l.b16 %v4125
        %v4414 = vunpack.c.l.b16 %v4126
        %v4415 = vunpack.c.l.b16 %v4127
        %v4416 = vunpack.c.l.b16 %v4128
        %v4417 = vunpack.c.l.b16 %v4129
        %v4418 = vunpack.c.l.b16 %v4130
        %v4419 = vunpack.c.l.b16 %v4131
        %v4420 = vunpack.c.l.b16 %v4132
        %v4421 = vunpack.c.l.b16 %v4133
        %v4422 = vunpack.c.l.b16 %v4134
        %v4423 = vunpack.c.l.b16 %v4135
        %v4424 = vunpack.c.l.b16 %v4136
        %v4425 = vunpack.c.l.b16 %v4137
        %v4426 = vunpack.c.l.b16 %v4138
        %v4427 = vunpack.c.l.b16 %v4139
        %v4428 = vunpack.c.l.b16 %v4140
        %v4429 = vunpack.c.l.b16 %v4141
        %v4430 = vunpack.c.l.b16 %v4142
        %v4431 = vunpack.c.l.b16 %v4143
        %v4432 = vunpack.c.l.b16 %v4144
        %v4433 = vunpack.c.l.b16 %v4145
        %v4434 = vunpack.c.l.b16 %v4146
        %v4435 = vunpack.c.l.b16 %v4147
        %v4436 = vunpack.c.l.b16 %v4148
        %v4437 = vunpack.c.l.b16 %v4149
        %v4438 = vunpack.c.l.b16 %v4150
        %v4439 = vunpack.c.l.b16 %v4151
        %v4440 = vunpack.c.l.b16 %v4152
        %v4441 = vunpack.c.l.b16 %v4153
        %v4442 = vunpack.c.l.b16 %v4154
        %v4443 = vunpack.c.l.b16 %v4155
        %v4444 = vunpack.c.l.b16 %v4156
        %v4445 = vunpack.c.l.b16 %v4157
        %v4446 = vunpack.c.l.b16 %v4158
        %v4447 = vunpack.c.l.b16 %v4159
        %v4448 = vunpack.c.l.b16 %v4160
        %v4449 = vunpack.c.l.b16 %v4161
        %v4450 = vunpack.c.l.b16 %v4162
        %v4451 = vunpack.c.l.b16 %v4163
        %v4452 = vunpack.c.l.b16 %v4164
        %v4453 = vunpack.c.l.b16 %v4165
        %v4454 = vunpack.c.l.b16 %v4166
        %v4455 = vunpack.c.l.b16 %v4167
        %v4456 = vunpack.c.l.b16 %v4168
        %v4457 = vunpack.c.l.b16 %v4169
        %v4458 = vunpack.c.l.b16 %v4170
        %v4459 = vunpack.c.l.b16 %v4171
        %v4460 = vunpack.c.l.b16 %v4172
        %v4461 = vunpack.c.l.b16 %v4173
        %v4462 = vunpack.c.l.b16 %v4174
        %v4463 = vunpack.c.l.b16 %v4175
        %v4464 = vunpack.c.l.b16 %v4176
        %v4465 = vunpack.c.l.b16 %v4177
        %v4466 = vunpack.c.l.b16 %v4178
        %v4467 = vunpack.c.l.b16 %v4179
        %v4468 = vunpack.c.l.b16 %v4180
        %v4469 = vunpack.c.l.b16 %v4181
        %v4470 = vunpack.c.l.b16 %v4182
        %v4471 = vunpack.c.l.b16 %v4183
        %v4472 = vunpack.c.l.b16 %v4184
        %v4473 = vunpack.c.l.b16 %v4185
        %v4474 = vunpack.c.l.b16 %v4186
        %v4475 = vunpack.c.l.b16 %v4187
        %v4476 = vunpack.c.l.b16 %v4188
        %v4477 = vunpack.c.l.b16 %v4189
        %v4478 = vunpack.c.l.b16 %v4190
        %v4479 = vunpack.c.l.b16 %v4191
        %v4480 = vunpack.c.l.b16 %v4192
        %v4481 = vunpack.c.l.b16 %v4193
        %v4482 = vunpack.c.l.b16 %v4194
        %v4483 = vunpack.c.l.b16 %v4195
        %v4484 = vunpack.c.l.b16 %v4196
        %v4485 = vunpack.c.l.b16 %v4197
        %v4486 = vunpack.c.l.b16 %v4198
        %v4487 = vunpack.c.l.b16 %v4199
        %v4488 = vunpack.c.l.b16 %v4200
        %v4489 = vunpack.c.l.b16 %v4201
        %v4490 = vunpack.c.l.b16 %v4202
        %v4491 = vunpack.c.l.b16 %v4203
        %v4492 = vunpack.c.l.b16 %v4204
        %v4493 = vunpack.c.l.b16 %v4205
        %v4494 = vunpack.c.l.b16 %v4206
        %v4495 = vunpack.c.l.b16 %v4207
        %v4496 = vunpack.c.l.b16 %v4208
        %v4497 = vunpack.c.l.b16 %v4209
        %v4498 = vunpack.c.l.b16 %v4210
        %v4499 = vunpack.c.l.b16 %v4211
        %v4500 = vunpack.c.l.b16 %v4212
        %v4501 = vunpack.c.l.b16 %v4213
        %v4502 = vunpack.c.l.b16 %v4214
        %v4503 = vunpack.c.l.b16 %v4215
        %v4504 = vunpack.c.l.b16 %v4216
        %v4505 = vunpack.c.l.b16 %v4217
        %v4506 = vunpack.c.l.b16 %v4218
        %v4507 = vpack.c.b16 %v4364, %v4363
        %v4508 = vpack.c.b16 %v4366, %v4365
        %v4509 = vpack.c.b16 %v4368, %v4367
        %v4510 = vpack.c.b16 %v4370, %v4369
        %v4511 = vpack.c.b16 %v4372, %v4371
        %v4512 = vpack.c.b16 %v4374, %v4373
        %v4513 = vpack.c.b16 %v4376, %v4375
        %v4514 = vpack.c.b16 %v4378, %v4377
        %v4515 = vpack.c.b16 %v4380, %v4379
        %v4516 = vpack.c.b16 %v4382, %v4381
        %v4517 = vpack.c.b16 %v4384, %v4383
        %v4518 = vpack.c.b16 %v4386, %v4385
        %v4519 = vpack.c.b16 %v4388, %v4387
        %v4520 = vpack.c.b16 %v4390, %v4389
        %v4521 = vpack.c.b16 %v4392, %v4391
        %v4522 = vpack.c.b16 %v4394, %v4393
        %v4523 = vpack.c.b16 %v4396, %v4395
        %v4524 = vpack.c.b16 %v4398, %v4397
        %v4525 = vpack.c.b16 %v4400, %v4399
        %v4526 = vpack.c.b16 %v4402, %v4401
        %v4527 = vpack.c.b16 %v4404, %v4403
        %v4528 = vpack.c.b16 %v4406, %v4405
        %v4529 = vpack.c.b16 %v4408, %v4407
        %v4530 = vpack.c.b16 %v4410, %v4409
        %v4531 = vpack.c.b16 %v4412, %v4411
        %v4532 = vpack.c.b16 %v4414, %v4413
        %v4533 = vpack.c.b16 %v4416, %v4415
        %v4534 = vpack.c.b16 %v4418, %v4417
        %v4535 = vpack.c.b16 %v4420, %v4419
        %v4536 = vpack.c.b16 %v4422, %v4421
        %v4537 = vpack.c.b16 %v4424, %v4423
        %v4538 = vpack.c.b16 %v4426, %v4425
        %v4539 = vpack.c.b16 %v4428, %v4427
        %v4540 = vpack.c.b16 %v4430, %v4429
        %v4541 = vpack.c.b16 %v4432, %v4431
        %v4542 = vpack.c.b16 %v4434, %v4433
        %v4543 = vpack.c.b16 %v4436, %v4435
        %v4544 = vpack.c.b16 %v4438, %v4437
        %v4545 = vpack.c.b16 %v4440, %v4439
        %v4546 = vpack.c.b16 %v4442, %v4441
        %v4547 = vpack.c.b16 %v4444, %v4443
        %v4548 = vpack.c.b16 %v4446, %v4445
        %v4549 = vpack.c.b16 %v4448, %v4447
        %v4550 = vpack.c.b16 %v4450, %v4449
        %v4551 = vpack.c.b16 %v4452, %v4451
        %v4552 = vpack.c.b16 %v4454, %v4453
        %v4553 = vpack.c.b16 %v4456, %v4455
        %v4554 = vpack.c.b16 %v4458, %v4457
        %v4555 = vpack.c.b16 %v4460, %v4459
        %v4556 = vpack.c.b16 %v4462, %v4461
        %v4557 = vpack.c.b16 %v4464, %v4463
        %v4558 = vpack.c.b16 %v4466, %v4465
        %v4559 = vpack.c.b16 %v4468, %v4467
        %v4560 = vpack.c.b16 %v4470, %v4469
        %v4561 = vpack.c.b16 %v4472, %v4471
        %v4562 = vpack.c.b16 %v4474, %v4473
        %v4563 = vpack.c.b16 %v4476, %v4475
        %v4564 = vpack.c.b16 %v4478, %v4477
        %v4565 = vpack.c.b16 %v4480, %v4479
        %v4566 = vpack.c.b16 %v4482, %v4481
        %v4567 = vpack.c.b16 %v4484, %v4483
        %v4568 = vpack.c.b16 %v4486, %v4485
        %v4569 = vpack.c.b16 %v4488, %v4487
        %v4570 = vpack.c.b16 %v4490, %v4489
        %v4571 = vpack.c.b16 %v4492, %v4491
        %v4572 = vpack.c.b16 %v4494, %v4493
        %v4573 = vpack.c.b16 %v4496, %v4495
        %v4574 = vpack.c.b16 %v4498, %v4497
        %v4575 = vpack.c.b16 %v4500, %v4499
        %v4576 = vpack.c.b16 %v4502, %v4501
        %v4577 = vpack.c.b16 %v4504, %v4503
        %v4578 = vpack.c.b16 %v4506, %v4505
        %4651 = vmatprep.subr.bf16.mxu0 0
        %4652 = vmatpush1.bf16.msra.mxu0 %v4507
        %4653 = vmatprep.subr.bf16.mxu0 0
        %4654 = vmatpush1.bf16.msra.mxu0 %v4508
        %4655 = vmatprep.subr.bf16.mxu0 0
        %4656 = vmatpush1.bf16.msra.mxu0 %v4509
        %4657 = vmatprep.subr.bf16.mxu0 0
        %4658 = vmatpush1.bf16.msra.mxu0 %v4510
        %4659 = vmatprep.subr.bf16.mxu0 0
        %4660 = vmatpush1.bf16.msra.mxu0 %v4511
        %4661 = vmatprep.subr.bf16.mxu0 0
        %4662 = vmatpush1.bf16.msra.mxu0 %v4512
        %4663 = vmatprep.subr.bf16.mxu0 0
        %4664 = vmatpush1.bf16.msra.mxu0 %v4513
        %4665 = vmatprep.subr.bf16.mxu0 0
        %4666 = vmatpush1.bf16.msra.mxu0 %v4514
        %4667 = vmatprep.subr.bf16.mxu0 0
        %4668 = vmatpush1.bf16.msra.mxu0 %v4515
        %4669 = vmatprep.subr.bf16.mxu0 0
        %4670 = vmatpush1.bf16.msra.mxu0 %v4516
        %4671 = vmatprep.subr.bf16.mxu0 0
        %4672 = vmatpush1.bf16.msra.mxu0 %v4517
        %4673 = vmatprep.subr.bf16.mxu0 0
        %4674 = vmatpush1.bf16.msra.mxu0 %v4518
        %4675 = vmatprep.subr.bf16.mxu0 0
        %4676 = vmatpush1.bf16.msra.mxu0 %v4519
        %4677 = vmatprep.subr.bf16.mxu0 0
        %4678 = vmatpush1.bf16.msra.mxu0 %v4520
        %4679 = vmatprep.subr.bf16.mxu0 0
        %4680 = vmatpush1.bf16.msra.mxu0 %v4521
        %4681 = vmatprep.subr.bf16.mxu0 0
        %4682 = vmatpush1.bf16.msra.mxu0 %v4522
        %4683 = vmatprep.mubr.bf16.mxu0 %v3932
        %4684 = vmatmul.mubr.bf16.gmra.mrb[0].mxu0 %v3931
        %v4685 = vpop.f32.mrb[0].mxu0
        %v4686 = vadd.f32 0.0, %v4685
        %v4687 = vpop.f32.mrb[0].mxu0
        %v4688 = vpop.f32.mrb[0].mxu0
        %v4689 = vadd.f32 0.0, %v4688
        %v4690 = vpop.f32.mrb[0].mxu0
        %4691 = vmatprep.mubr.bf16.mxu0 %v3941
        %4692 = vmatmul.mubr.bf16.gmra.mrb[0].mxu0 %v3940
        %v4693 = vpop.f32.mrb[0].mxu0
        %v4694 = vadd.f32 0.0, %v4693
        %v4695 = vpop.f32.mrb[0].mxu0
        %v4696 = vpop.f32.mrb[0].mxu0
        %v4697 = vadd.f32 0.0, %v4696
        %v4698 = vpop.f32.mrb[0].mxu0
        %4699 = vmatprep.mubr.bf16.mxu0 %v3950
        %4700 = vmatmul.mubr.bf16.gmra.mrb[0].mxu0 %v3949
        %v4701 = vpop.f32.mrb[0].mxu0
        %v4702 = vadd.f32 0.0, %v4701
        %v4703 = vpop.f32.mrb[0].mxu0
        %v4704 = vpop.f32.mrb[0].mxu0
        %v4705 = vadd.f32 0.0, %v4704
        %v4706 = vpop.f32.mrb[0].mxu0
        %4707 = vmatprep.mubr.bf16.mxu0 %v3959
        %4708 = vmatmul.mubr.bf16.gmra.mrb[0].mxu0 %v3958
        %v4709 = vpop.f32.mrb[0].mxu0
        %v4710 = vadd.f32 0.0, %v4709
        %v4711 = vpop.f32.mrb[0].mxu0
        %v4712 = vpop.f32.mrb[0].mxu0
        %v4713 = vadd.f32 0.0, %v4712
        %v4714 = vpop.f32.mrb[0].mxu0
        %4715 = vmatprep.mubr.bf16.mxu0 %v3968
        %4716 = vmatmul.mubr.bf16.gmra.mrb[0].mxu0 %v3967
        %v4717 = vpop.f32.mrb[0].mxu0
        %v4718 = vadd.f32 0.0, %v4717
        %v4719 = vpop.f32.mrb[0].mxu0
        %v4720 = vpop.f32.mrb[0].mxu0
        %v4721 = vadd.f32 0.0, %v4720
        %v4722 = vpop.f32.mrb[0].mxu0
        %4723 = vmatprep.mubr.bf16.mxu0 %v3977
        %4724 = vmatmul.mubr.bf16.gmra.mrb[0].mxu0 %v3976
        %v4725 = vpop.f32.mrb[0].mxu0
        %v4726 = vadd.f32 0.0, %v4725
        %v4727 = vpop.f32.mrb[0].mxu0
        %v4728 = vpop.f32.mrb[0].mxu0
        %v4729 = vadd.f32 0.0, %v4728
        %v4730 = vpop.f32.mrb[0].mxu0
        %4731 = vmatprep.mubr.bf16.mxu0 %v3986
        %4732 = vmatmul.mubr.bf16.gmra.mrb[0].mxu0 %v3985
        %v4733 = vpop.f32.mrb[0].mxu0
        %v4734 = vadd.f32 0.0, %v4733
        %v4735 = vpop.f32.mrb[0].mxu0
        %v4736 = vpop.f32.mrb[0].mxu0
        %v4737 = vadd.f32 0.0, %v4736
        %v4738 = vpop.f32.mrb[0].mxu0
        %4739 = vmatprep.mubr.bf16.mxu0 %v3995
        %4740 = vmatmul.mubr.bf16.gmra.mrb[0].mxu0 %v3994
        %v4741 = vpop.f32.mrb[0].mxu0
        %v4742 = vadd.f32 0.0, %v4741
        %v4743 = vpop.f32.mrb[0].mxu0
        %v4744 = vpop.f32.mrb[0].mxu0
        %v4745 = vadd.f32 0.0, %v4744
        %v4746 = vpop.f32.mrb[0].mxu0
        %4747 = vmatprep.mubr.bf16.mxu0 %v4004
        %4748 = vmatmul.mubr.bf16.gmra.mrb[0].mxu0 %v4003
        %v4749 = vpop.f32.mrb[0].mxu0
        %v4750 = vadd.f32 0.0, %v4749
        %v4751 = vpop.f32.mrb[0].mxu0
        %v4752 = vpop.f32.mrb[0].mxu0
        %v4753 = vadd.f32 0.0, %v4752
        %v4754 = vpop.f32.mrb[0].mxu0
        %4755 = vmatprep.mubr.bf16.mxu0 %v4013
        %4756 = vmatmul.mubr.bf16.gmra.mrb[0].mxu0 %v4012
        %v4757 = vpop.f32.mrb[0].mxu0
        %v4758 = vadd.f32 0.0, %v4757
        %v4759 = vpop.f32.mrb[0].mxu0
        %v4760 = vpop.f32.mrb[0].mxu0
        %v4761 = vadd.f32 0.0, %v4760
        %v4762 = vpop.f32.mrb[0].mxu0
        %4763 = vmatprep.mubr.bf16.mxu0 %v4022
        %4764 = vmatmul.mubr.bf16.gmra.mrb[0].mxu0 %v4021
        %v4765 = vpop.f32.mrb[0].mxu0
        %v4766 = vadd.f32 0.0, %v4765
        %v4767 = vpop.f32.mrb[0].mxu0
        %v4768 = vpop.f32.mrb[0].mxu0
        %v4769 = vadd.f32 0.0, %v4768
        %v4770 = vpop.f32.mrb[0].mxu0
        %4771 = vmatprep.mubr.bf16.mxu0 %v4031
        %4772 = vmatmul.mubr.bf16.gmra.mrb[0].mxu0 %v4030
        %v4773 = vpop.f32.mrb[0].mxu0
        %v4774 = vadd.f32 0.0, %v4773
        %v4775 = vpop.f32.mrb[0].mxu0
        %v4776 = vpop.f32.mrb[0].mxu0
        %v4777 = vadd.f32 0.0, %v4776
        %v4778 = vpop.f32.mrb[0].mxu0
        %4779 = vmatprep.mubr.bf16.mxu0 %v4040
        %4780 = vmatmul.mubr.bf16.gmra.mrb[0].mxu0 %v4039
        %v4781 = vpop.f32.mrb[0].mxu0
        %v4782 = vadd.f32 0.0, %v4781
        %v4783 = vpop.f32.mrb[0].mxu0
        %v4784 = vpop.f32.mrb[0].mxu0
        %v4785 = vadd.f32 0.0, %v4784
        %v4786 = vpop.f32.mrb[0].mxu0
        %4787 = vmatprep.mubr.bf16.mxu0 %v4049
        %4788 = vmatmul.mubr.bf16.gmra.mrb[0].mxu0 %v4048
        %v4789 = vpop.f32.mrb[0].mxu0
        %v4790 = vadd.f32 0.0, %v4789
        %v4791 = vpop.f32.mrb[0].mxu0
        %v4792 = vpop.f32.mrb[0].mxu0
        %v4793 = vadd.f32 0.0, %v4792
        %v4794 = vpop.f32.mrb[0].mxu0
        %4795 = vmatprep.mubr.bf16.mxu0 %v4058
        %4796 = vmatmul.mubr.bf16.gmra.mrb[0].mxu0 %v4057
        %v4797 = vpop.f32.mrb[0].mxu0
        %v4798 = vadd.f32 0.0, %v4797
        %v4799 = vpop.f32.mrb[0].mxu0
        %v4800 = vpop.f32.mrb[0].mxu0
        %v4801 = vadd.f32 0.0, %v4800
        %v4802 = vpop.f32.mrb[0].mxu0
        %4803 = vmatprep.mubr.bf16.mxu0 %v4067
        %4804 = vmatmul.mubr.bf16.gmra.mrb[0].mxu0 %v4066
        %v4805 = vpop.f32.mrb[0].mxu0
        %v4806 = vadd.f32 0.0, %v4805
        %v4807 = vpop.f32.mrb[0].mxu0
        %v4808 = vpop.f32.mrb[0].mxu0
        %v4809 = vadd.f32 0.0, %v4808
        %v4810 = vpop.f32.mrb[0].mxu0
        %4811 = vdwg.mxu0
        %4812 = vmatprep.subr.bf16.mxu0 0
        %4813 = vmatpush1.bf16.msra.mxu0 %v4523
        %4814 = vmatprep.subr.bf16.mxu0 0
        %4815 = vmatpush1.bf16.msra.mxu0 %v4524
        %4816 = vmatprep.subr.bf16.mxu0 0
        %4817 = vmatpush1.bf16.msra.mxu0 %v4525
        %4818 = vmatprep.subr.bf16.mxu0 0
        %4819 = vmatpush1.bf16.msra.mxu0 %v4526
        %4820 = vmatprep.subr.bf16.mxu0 0
        %4821 = vmatpush1.bf16.msra.mxu0 %v4527
        %4822 = vmatprep.subr.bf16.mxu0 0
        %4823 = vmatpush1.bf16.msra.mxu0 %v4528
        %4824 = vmatprep.subr.bf16.mxu0 0
        %4825 = vmatpush1.bf16.msra.mxu0 %v4529
        %4826 = vmatprep.subr.bf16.mxu0 0
        %4827 = vmatpush1.bf16.msra.mxu0 %v4530
        %4828 = vmatprep.subr.bf16.mxu0 0
        %4829 = vmatpush1.bf16.msra.mxu0 %v4531
        %4830 = vmatprep.subr.bf16.mxu0 0
        %4831 = vmatpush1.bf16.msra.mxu0 %v4532
        %4832 = vmatprep.subr.bf16.mxu0 0
        %4833 = vmatpush1.bf16.msra.mxu0 %v4533
        %4834 = vmatprep.subr.bf16.mxu0 0
        %4835 = vmatpush1.bf16.msra.mxu0 %v4534
        %4836 = vmatprep.subr.bf16.mxu0 0
        %4837 = vmatpush1.bf16.msra.mxu0 %v4535
        %4838 = vmatprep.subr.bf16.mxu0 0
        %4839 = vmatpush1.bf16.msra.mxu0 %v4536
        %4840 = vmatprep.subr.bf16.mxu0 0
        %4841 = vmatpush1.bf16.msra.mxu0 %v4537
        %4842 = vmatprep.subr.bf16.mxu0 0
        %4843 = vmatpush1.bf16.msra.mxu0 %v4538
        %4844 = vmatprep.mubr.bf16.mxu0 %v3934
        %4845 = vmatmul.mubr.bf16.gmra.mrb[0].mxu0 %v3933
        %v4846 = vpop.f32.mrb[0].mxu0
        %v4847 = vadd.f32 %v4686, %v4846
        %v4848 = vpop.f32.mrb[0].mxu0
        %v4849 = vpop.f32.mrb[0].mxu0
        %v4850 = vadd.f32 %v4689, %v4849
        %v4851 = vpop.f32.mrb[0].mxu0
        %4852 = vmatprep.mubr.bf16.mxu0 %v3943
        %4853 = vmatmul.mubr.bf16.gmra.mrb[0].mxu0 %v3942
        %v4854 = vpop.f32.mrb[0].mxu0
        %v4855 = vadd.f32 %v4694, %v4854
        %v4856 = vpop.f32.mrb[0].mxu0
        %v4857 = vpop.f32.mrb[0].mxu0
        %v4858 = vadd.f32 %v4697, %v4857
        %v4859 = vpop.f32.mrb[0].mxu0
        %4860 = vmatprep.mubr.bf16.mxu0 %v3952
        %4861 = vmatmul.mubr.bf16.gmra.mrb[0].mxu0 %v3951
        %v4862 = vpop.f32.mrb[0].mxu0
        %v4863 = vadd.f32 %v4702, %v4862
        %v4864 = vpop.f32.mrb[0].mxu0
        %v4865 = vpop.f32.mrb[0].mxu0
        %v4866 = vadd.f32 %v4705, %v4865
        %v4867 = vpop.f32.mrb[0].mxu0
        %4868 = vmatprep.mubr.bf16.mxu0 %v3961
        %4869 = vmatmul.mubr.bf16.gmra.mrb[0].mxu0 %v3960
        %v4870 = vpop.f32.mrb[0].mxu0
        %v4871 = vadd.f32 %v4710, %v4870
        %v4872 = vpop.f32.mrb[0].mxu0
        %v4873 = vpop.f32.mrb[0].mxu0
        %v4874 = vadd.f32 %v4713, %v4873
        %v4875 = vpop.f32.mrb[0].mxu0
        %4876 = vmatprep.mubr.bf16.mxu0 %v3970
        %4877 = vmatmul.mubr.bf16.gmra.mrb[0].mxu0 %v3969
        %v4878 = vpop.f32.mrb[0].mxu0
        %v4879 = vadd.f32 %v4718, %v4878
        %v4880 = vpop.f32.mrb[0].mxu0
        %v4881 = vpop.f32.mrb[0].mxu0
        %v4882 = vadd.f32 %v4721, %v4881
        %v4883 = vpop.f32.mrb[0].mxu0
        %4884 = vmatprep.mubr.bf16.mxu0 %v3979
        %4885 = vmatmul.mubr.bf16.gmra.mrb[0].mxu0 %v3978
        %v4886 = vpop.f32.mrb[0].mxu0
        %v4887 = vadd.f32 %v4726, %v4886
        %v4888 = vpop.f32.mrb[0].mxu0
        %v4889 = vpop.f32.mrb[0].mxu0
        %v4890 = vadd.f32 %v4729, %v4889
        %v4891 = vpop.f32.mrb[0].mxu0
        %4892 = vmatprep.mubr.bf16.mxu0 %v3988
        %4893 = vmatmul.mubr.bf16.gmra.mrb[0].mxu0 %v3987
        %v4894 = vpop.f32.mrb[0].mxu0
        %v4895 = vadd.f32 %v4734, %v4894
        %v4896 = vpop.f32.mrb[0].mxu0
        %v4897 = vpop.f32.mrb[0].mxu0
        %v4898 = vadd.f32 %v4737, %v4897
        %v4899 = vpop.f32.mrb[0].mxu0
        %4900 = vmatprep.mubr.bf16.mxu0 %v3997
        %4901 = vmatmul.mubr.bf16.gmra.mrb[0].mxu0 %v3996
        %v4902 = vpop.f32.mrb[0].mxu0
        %v4903 = vadd.f32 %v4742, %v4902
        %v4904 = vpop.f32.mrb[0].mxu0
        %v4905 = vpop.f32.mrb[0].mxu0
        %v4906 = vadd.f32 %v4745, %v4905
        %v4907 = vpop.f32.mrb[0].mxu0
        %4908 = vmatprep.mubr.bf16.mxu0 %v4006
        %4909 = vmatmul.mubr.bf16.gmra.mrb[0].mxu0 %v4005
        %v4910 = vpop.f32.mrb[0].mxu0
        %v4911 = vadd.f32 %v4750, %v4910
        %v4912 = vpop.f32.mrb[0].mxu0
        %v4913 = vpop.f32.mrb[0].mxu0
        %v4914 = vadd.f32 %v4753, %v4913
        %v4915 = vpop.f32.mrb[0].mxu0
        %4916 = vmatprep.mubr.bf16.mxu0 %v4015
        %4917 = vmatmul.mubr.bf16.gmra.mrb[0].mxu0 %v4014
        %v4918 = vpop.f32.mrb[0].mxu0
        %v4919 = vadd.f32 %v4758, %v4918
        %v4920 = vpop.f32.mrb[0].mxu0
        %v4921 = vpop.f32.mrb[0].mxu0
        %v4922 = vadd.f32 %v4761, %v4921
        %v4923 = vpop.f32.mrb[0].mxu0
        %4924 = vmatprep.mubr.bf16.mxu0 %v4024
        %4925 = vmatmul.mubr.bf16.gmra.mrb[0].mxu0 %v4023
        %v4926 = vpop.f32.mrb[0].mxu0
        %v4927 = vadd.f32 %v4766, %v4926
        %v4928 = vpop.f32.mrb[0].mxu0
        %v4929 = vpop.f32.mrb[0].mxu0
        %v4930 = vadd.f32 %v4769, %v4929
        %v4931 = vpop.f32.mrb[0].mxu0
        %4932 = vmatprep.mubr.bf16.mxu0 %v4033
        %4933 = vmatmul.mubr.bf16.gmra.mrb[0].mxu0 %v4032
        %v4934 = vpop.f32.mrb[0].mxu0
        %v4935 = vadd.f32 %v4774, %v4934
        %v4936 = vpop.f32.mrb[0].mxu0
        %v4937 = vpop.f32.mrb[0].mxu0
        %v4938 = vadd.f32 %v4777, %v4937
        %v4939 = vpop.f32.mrb[0].mxu0
        %4940 = vmatprep.mubr.bf16.mxu0 %v4042
        %4941 = vmatmul.mubr.bf16.gmra.mrb[0].mxu0 %v4041
        %v4942 = vpop.f32.mrb[0].mxu0
        %v4943 = vadd.f32 %v4782, %v4942
        %v4944 = vpop.f32.mrb[0].mxu0
        %v4945 = vpop.f32.mrb[0].mxu0
        %v4946 = vadd.f32 %v4785, %v4945
        %v4947 = vpop.f32.mrb[0].mxu0
        %4948 = vmatprep.mubr.bf16.mxu0 %v4051
        %4949 = vmatmul.mubr.bf16.gmra.mrb[0].mxu0 %v4050
        %v4950 = vpop.f32.mrb[0].mxu0
        %v4951 = vadd.f32 %v4790, %v4950
        %v4952 = vpop.f32.mrb[0].mxu0
        %v4953 = vpop.f32.mrb[0].mxu0
        %v4954 = vadd.f32 %v4793, %v4953
        %v4955 = vpop.f32.mrb[0].mxu0
        %4956 = vmatprep.mubr.bf16.mxu0 %v4060
        %4957 = vmatmul.mubr.bf16.gmra.mrb[0].mxu0 %v4059
        %v4958 = vpop.f32.mrb[0].mxu0
        %v4959 = vadd.f32 %v4798, %v4958
        %v4960 = vpop.f32.mrb[0].mxu0
        %v4961 = vpop.f32.mrb[0].mxu0
        %v4962 = vadd.f32 %v4801, %v4961
        %v4963 = vpop.f32.mrb[0].mxu0
        %4964 = vmatprep.mubr.bf16.mxu0 %v4069
        %4965 = vmatmul.mubr.bf16.gmra.mrb[0].mxu0 %v4068
        %v4966 = vpop.f32.mrb[0].mxu0
        %v4967 = vadd.f32 %v4806, %v4966
        %v4968 = vpop.f32.mrb[0].mxu0
        %v4969 = vpop.f32.mrb[0].mxu0
        %v4970 = vadd.f32 %v4809, %v4969
        %v4971 = vpop.f32.mrb[0].mxu0
        %4972 = vdwg.mxu0
        %4973 = vmatprep.subr.bf16.mxu0 0
        %4974 = vmatpush1.bf16.msra.mxu0 %v4539
        %4975 = vmatprep.subr.bf16.mxu0 0
        %4976 = vmatpush1.bf16.msra.mxu0 %v4540
        %4977 = vmatprep.subr.bf16.mxu0 0
        %4978 = vmatpush1.bf16.msra.mxu0 %v4541
        %4979 = vmatprep.subr.bf16.mxu0 0
        %4980 = vmatpush1.bf16.msra.mxu0 %v4542
        %4981 = vmatprep.subr.bf16.mxu0 0
        %4982 = vmatpush1.bf16.msra.mxu0 %v4543
        %4983 = vmatprep.subr.bf16.mxu0 0
        %4984 = vmatpush1.bf16.msra.mxu0 %v4544
        %4985 = vmatprep.subr.bf16.mxu0 0
        %4986 = vmatpush1.bf16.msra.mxu0 %v4545
        %4987 = vmatprep.subr.bf16.mxu0 0
        %4988 = vmatpush1.bf16.msra.mxu0 %v4546
        %4989 = vmatprep.subr.bf16.mxu0 0
        %4990 = vmatpush1.bf16.msra.mxu0 %v4547
        %4991 = vmatprep.subr.bf16.mxu0 0
        %4992 = vmatpush1.bf16.msra.mxu0 %v4548
        %4993 = vmatprep.subr.bf16.mxu0 0
        %4994 = vmatpush1.bf16.msra.mxu0 %v4549
        %4995 = vmatprep.subr.bf16.mxu0 0
        %4996 = vmatpush1.bf16.msra.mxu0 %v4550
        %4997 = vmatprep.subr.bf16.mxu0 0
        %4998 = vmatpush1.bf16.msra.mxu0 %v4551
        %4999 = vmatprep.subr.bf16.mxu0 0
        %5000 = vmatpush1.bf16.msra.mxu0 %v4552
        %5001 = vmatprep.subr.bf16.mxu0 0
        %5002 = vmatpush1.bf16.msra.mxu0 %v4553
        %5003 = vmatprep.subr.bf16.mxu0 0
        %5004 = vmatpush1.bf16.msra.mxu0 %v4554
        %5005 = vmatprep.mubr.bf16.mxu0 %v3936
        %5006 = vmatmul.mubr.bf16.gmra.mrb[0].mxu0 %v3935
        %v5007 = vpop.f32.mrb[0].mxu0
        %v5008 = vadd.f32 %v4847, %v5007
        %v5009 = vpop.f32.mrb[0].mxu0
        %v5010 = vpop.f32.mrb[0].mxu0
        %v5011 = vadd.f32 %v4850, %v5010
        %v5012 = vpop.f32.mrb[0].mxu0
        %5013 = vmatprep.mubr.bf16.mxu0 %v3945
        %5014 = vmatmul.mubr.bf16.gmra.mrb[0].mxu0 %v3944
        %v5015 = vpop.f32.mrb[0].mxu0
        %v5016 = vadd.f32 %v4855, %v5015
        %v5017 = vpop.f32.mrb[0].mxu0
        %v5018 = vpop.f32.mrb[0].mxu0
        %v5019 = vadd.f32 %v4858, %v5018
        %v5020 = vpop.f32.mrb[0].mxu0
        %5021 = vmatprep.mubr.bf16.mxu0 %v3954
        %5022 = vmatmul.mubr.bf16.gmra.mrb[0].mxu0 %v3953
        %v5023 = vpop.f32.mrb[0].mxu0
        %v5024 = vadd.f32 %v4863, %v5023
        %v5025 = vpop.f32.mrb[0].mxu0
        %v5026 = vpop.f32.mrb[0].mxu0
        %v5027 = vadd.f32 %v4866, %v5026
        %v5028 = vpop.f32.mrb[0].mxu0
        %5029 = vmatprep.mubr.bf16.mxu0 %v3963
        %5030 = vmatmul.mubr.bf16.gmra.mrb[0].mxu0 %v3962
        %v5031 = vpop.f32.mrb[0].mxu0
        %v5032 = vadd.f32 %v4871, %v5031
        %v5033 = vpop.f32.mrb[0].mxu0
        %v5034 = vpop.f32.mrb[0].mxu0
        %v5035 = vadd.f32 %v4874, %v5034
        %v5036 = vpop.f32.mrb[0].mxu0
        %5037 = vmatprep.mubr.bf16.mxu0 %v3972
        %5038 = vmatmul.mubr.bf16.gmra.mrb[0].mxu0 %v3971
        %v5039 = vpop.f32.mrb[0].mxu0
        %v5040 = vadd.f32 %v4879, %v5039
        %v5041 = vpop.f32.mrb[0].mxu0
        %v5042 = vpop.f32.mrb[0].mxu0
        %v5043 = vadd.f32 %v4882, %v5042
        %v5044 = vpop.f32.mrb[0].mxu0
        %5045 = vmatprep.mubr.bf16.mxu0 %v3981
        %5046 = vmatmul.mubr.bf16.gmra.mrb[0].mxu0 %v3980
        %v5047 = vpop.f32.mrb[0].mxu0
        %v5048 = vadd.f32 %v4887, %v5047
        %v5049 = vpop.f32.mrb[0].mxu0
        %v5050 = vpop.f32.mrb[0].mxu0
        %v5051 = vadd.f32 %v4890, %v5050
        %v5052 = vpop.f32.mrb[0].mxu0
        %5053 = vmatprep.mubr.bf16.mxu0 %v3990
        %5054 = vmatmul.mubr.bf16.gmra.mrb[0].mxu0 %v3989
        %v5055 = vpop.f32.mrb[0].mxu0
        %v5056 = vadd.f32 %v4895, %v5055
        %v5057 = vpop.f32.mrb[0].mxu0
        %v5058 = vpop.f32.mrb[0].mxu0
        %v5059 = vadd.f32 %v4898, %v5058
        %v5060 = vpop.f32.mrb[0].mxu0
        %5061 = vmatprep.mubr.bf16.mxu0 %v3999
        %5062 = vmatmul.mubr.bf16.gmra.mrb[0].mxu0 %v3998
        %v5063 = vpop.f32.mrb[0].mxu0
        %v5064 = vadd.f32 %v4903, %v5063
        %v5065 = vpop.f32.mrb[0].mxu0
        %v5066 = vpop.f32.mrb[0].mxu0
        %v5067 = vadd.f32 %v4906, %v5066
        %v5068 = vpop.f32.mrb[0].mxu0
        %5069 = vmatprep.mubr.bf16.mxu0 %v4008
        %5070 = vmatmul.mubr.bf16.gmra.mrb[0].mxu0 %v4007
        %v5071 = vpop.f32.mrb[0].mxu0
        %v5072 = vadd.f32 %v4911, %v5071
        %v5073 = vpop.f32.mrb[0].mxu0
        %v5074 = vpop.f32.mrb[0].mxu0
        %v5075 = vadd.f32 %v4914, %v5074
        %v5076 = vpop.f32.mrb[0].mxu0
        %5077 = vmatprep.mubr.bf16.mxu0 %v4017
        %5078 = vmatmul.mubr.bf16.gmra.mrb[0].mxu0 %v4016
        %v5079 = vpop.f32.mrb[0].mxu0
        %v5080 = vadd.f32 %v4919, %v5079
        %v5081 = vpop.f32.mrb[0].mxu0
        %v5082 = vpop.f32.mrb[0].mxu0
        %v5083 = vadd.f32 %v4922, %v5082
        %v5084 = vpop.f32.mrb[0].mxu0
        %5085 = vmatprep.mubr.bf16.mxu0 %v4026
        %5086 = vmatmul.mubr.bf16.gmra.mrb[0].mxu0 %v4025
        %v5087 = vpop.f32.mrb[0].mxu0
        %v5088 = vadd.f32 %v4927, %v5087
        %v5089 = vpop.f32.mrb[0].mxu0
        %v5090 = vpop.f32.mrb[0].mxu0
        %v5091 = vadd.f32 %v4930, %v5090
        %v5092 = vpop.f32.mrb[0].mxu0
        %5093 = vmatprep.mubr.bf16.mxu0 %v4035
        %5094 = vmatmul.mubr.bf16.gmra.mrb[0].mxu0 %v4034
        %v5095 = vpop.f32.mrb[0].mxu0
        %v5096 = vadd.f32 %v4935, %v5095
        %v5097 = vpop.f32.mrb[0].mxu0
        %v5098 = vpop.f32.mrb[0].mxu0
        %v5099 = vadd.f32 %v4938, %v5098
        %v5100 = vpop.f32.mrb[0].mxu0
        %5101 = vmatprep.mubr.bf16.mxu0 %v4044
        %5102 = vmatmul.mubr.bf16.gmra.mrb[0].mxu0 %v4043
        %v5103 = vpop.f32.mrb[0].mxu0
        %v5104 = vadd.f32 %v4943, %v5103
        %v5105 = vpop.f32.mrb[0].mxu0
        %v5106 = vpop.f32.mrb[0].mxu0
        %v5107 = vadd.f32 %v4946, %v5106
        %v5108 = vpop.f32.mrb[0].mxu0
        %5109 = vmatprep.mubr.bf16.mxu0 %v4053
        %5110 = vmatmul.mubr.bf16.gmra.mrb[0].mxu0 %v4052
        %v5111 = vpop.f32.mrb[0].mxu0
        %v5112 = vadd.f32 %v4951, %v5111
        %v5113 = vpop.f32.mrb[0].mxu0
        %v5114 = vpop.f32.mrb[0].mxu0
        %v5115 = vadd.f32 %v4954, %v5114
        %v5116 = vpop.f32.mrb[0].mxu0
        %5117 = vmatprep.mubr.bf16.mxu0 %v4062
        %5118 = vmatmul.mubr.bf16.gmra.mrb[0].mxu0 %v4061
        %v5119 = vpop.f32.mrb[0].mxu0
        %v5120 = vadd.f32 %v4959, %v5119
        %v5121 = vpop.f32.mrb[0].mxu0
        %v5122 = vpop.f32.mrb[0].mxu0
        %v5123 = vadd.f32 %v4962, %v5122
        %v5124 = vpop.f32.mrb[0].mxu0
        %5125 = vmatprep.mubr.bf16.mxu0 %v4071
        %5126 = vmatmul.mubr.bf16.gmra.mrb[0].mxu0 %v4070
        %v5127 = vpop.f32.mrb[0].mxu0
        %v5128 = vadd.f32 %v4967, %v5127
        %v5129 = vpop.f32.mrb[0].mxu0
        %v5130 = vpop.f32.mrb[0].mxu0
        %v5131 = vadd.f32 %v4970, %v5130
        %v5132 = vpop.f32.mrb[0].mxu0
        %5133 = vdwg.mxu0
        %5134 = vmatprep.subr.bf16.mxu0 0
        %5135 = vmatpush1.bf16.msra.mxu0 %v4555
        %5136 = vmatprep.subr.bf16.mxu0 0
        %5137 = vmatpush1.bf16.msra.mxu0 %v4556
        %5138 = vmatprep.subr.bf16.mxu0 0
        %5139 = vmatpush1.bf16.msra.mxu0 %v4557
        %5140 = vmatprep.subr.bf16.mxu0 0
        %5141 = vmatpush1.bf16.msra.mxu0 %v4558
        %5142 = vmatprep.subr.bf16.mxu0 0
        %5143 = vmatpush1.bf16.msra.mxu0 %v4559
        %5144 = vmatprep.subr.bf16.mxu0 0
        %5145 = vmatpush1.bf16.msra.mxu0 %v4560
        %5146 = vmatprep.subr.bf16.mxu0 0
        %5147 = vmatpush1.bf16.msra.mxu0 %v4561
        %5148 = vmatprep.subr.bf16.mxu0 0
        %5149 = vmatpush1.bf16.msra.mxu0 %v4562
        %5150 = vmatprep.subr.bf16.mxu0 0
        %5151 = vmatpush1.bf16.msra.mxu0 %v4563
        %5152 = vmatprep.subr.bf16.mxu0 0
        %5153 = vmatpush1.bf16.msra.mxu0 %v4564
        %5154 = vmatprep.subr.bf16.mxu0 0
        %5155 = vmatpush1.bf16.msra.mxu0 %v4565
        %5156 = vmatprep.subr.bf16.mxu0 0
        %5157 = vmatpush1.bf16.msra.mxu0 %v4566
        %5158 = vmatprep.subr.bf16.mxu0 0
        %5159 = vmatpush1.bf16.msra.mxu0 %v4567
        %5160 = vmatprep.subr.bf16.mxu0 0
        %5161 = vmatpush1.bf16.msra.mxu0 %v4568
        %5162 = vmatprep.subr.bf16.mxu0 0
        %5163 = vmatpush1.bf16.msra.mxu0 %v4569
        %5164 = vmatprep.subr.bf16.mxu0 0
        %5165 = vmatpush1.bf16.msra.mxu0 %v4570
        %5166 = vmatprep.mubr.bf16.mxu0 %v3938
        %5167 = vmatmul.mubr.bf16.gmra.mrb[0].mxu0 %v3937
        %v5168 = vpop.f32.mrb[0].mxu0
        %v5169 = vadd.f32 %v5008, %v5168
        %v5170 = vpop.f32.mrb[0].mxu0
        %v5171 = vpop.f32.mrb[0].mxu0
        %v5172 = vadd.f32 %v5011, %v5171
        %v5173 = vpop.f32.mrb[0].mxu0
        %5174 = vmatprep.mubr.bf16.mxu0 %v3947
        %5175 = vmatmul.mubr.bf16.gmra.mrb[0].mxu0 %v3946
        %v5176 = vpop.f32.mrb[0].mxu0
        %v5177 = vadd.f32 %v5016, %v5176
        %v5178 = vpop.f32.mrb[0].mxu0
        %v5179 = vpop.f32.mrb[0].mxu0
        %v5180 = vadd.f32 %v5019, %v5179
        %v5181 = vpop.f32.mrb[0].mxu0
        %5182 = vmatprep.mubr.bf16.mxu0 %v3956
        %5183 = vmatmul.mubr.bf16.gmra.mrb[0].mxu0 %v3955
        %v5184 = vpop.f32.mrb[0].mxu0
        %v5185 = vadd.f32 %v5024, %v5184
        %v5186 = vpop.f32.mrb[0].mxu0
        %v5187 = vpop.f32.mrb[0].mxu0
        %v5188 = vadd.f32 %v5027, %v5187
        %v5189 = vpop.f32.mrb[0].mxu0
        %5190 = vmatprep.mubr.bf16.mxu0 %v3965
        %5191 = vmatmul.mubr.bf16.gmra.mrb[0].mxu0 %v3964
        %v5192 = vpop.f32.mrb[0].mxu0
        %v5193 = vadd.f32 %v5032, %v5192
        %v5194 = vpop.f32.mrb[0].mxu0
        %v5195 = vpop.f32.mrb[0].mxu0
        %v5196 = vadd.f32 %v5035, %v5195
        %v5197 = vpop.f32.mrb[0].mxu0
        %5198 = vmatprep.mubr.bf16.mxu0 %v3974
        %5199 = vmatmul.mubr.bf16.gmra.mrb[0].mxu0 %v3973
        %v5200 = vpop.f32.mrb[0].mxu0
        %v5201 = vadd.f32 %v5040, %v5200
        %v5202 = vpop.f32.mrb[0].mxu0
        %v5203 = vpop.f32.mrb[0].mxu0
        %v5204 = vadd.f32 %v5043, %v5203
        %v5205 = vpop.f32.mrb[0].mxu0
        %5206 = vmatprep.mubr.bf16.mxu0 %v3983
        %5207 = vmatmul.mubr.bf16.gmra.mrb[0].mxu0 %v3982
        %v5208 = vpop.f32.mrb[0].mxu0
        %v5209 = vadd.f32 %v5048, %v5208
        %v5210 = vpop.f32.mrb[0].mxu0
        %v5211 = vpop.f32.mrb[0].mxu0
        %v5212 = vadd.f32 %v5051, %v5211
        %v5213 = vpop.f32.mrb[0].mxu0
        %5214 = vmatprep.mubr.bf16.mxu0 %v3992
        %5215 = vmatmul.mubr.bf16.gmra.mrb[0].mxu0 %v3991
        %v5216 = vpop.f32.mrb[0].mxu0
        %v5217 = vadd.f32 %v5056, %v5216
        %v5218 = vpop.f32.mrb[0].mxu0
        %v5219 = vpop.f32.mrb[0].mxu0
        %v5220 = vadd.f32 %v5059, %v5219
        %v5221 = vpop.f32.mrb[0].mxu0
        %5222 = vmatprep.mubr.bf16.mxu0 %v4001
        %5223 = vmatmul.mubr.bf16.gmra.mrb[0].mxu0 %v4000
        %v5224 = vpop.f32.mrb[0].mxu0
        %v5225 = vadd.f32 %v5064, %v5224
        %v5226 = vpop.f32.mrb[0].mxu0
        %v5227 = vpop.f32.mrb[0].mxu0
        %v5228 = vadd.f32 %v5067, %v5227
        %v5229 = vpop.f32.mrb[0].mxu0
        %5230 = vmatprep.mubr.bf16.mxu0 %v4010
        %5231 = vmatmul.mubr.bf16.gmra.mrb[0].mxu0 %v4009
        %v5232 = vpop.f32.mrb[0].mxu0
        %v5233 = vadd.f32 %v5072, %v5232
        %v5234 = vpop.f32.mrb[0].mxu0
        %v5235 = vpop.f32.mrb[0].mxu0
        %v5236 = vadd.f32 %v5075, %v5235
        %v5237 = vpop.f32.mrb[0].mxu0
        %5238 = vmatprep.mubr.bf16.mxu0 %v4019
        %5239 = vmatmul.mubr.bf16.gmra.mrb[0].mxu0 %v4018
        %v5240 = vpop.f32.mrb[0].mxu0
        %v5241 = vadd.f32 %v5080, %v5240
        %v5242 = vpop.f32.mrb[0].mxu0
        %v5243 = vpop.f32.mrb[0].mxu0
        %v5244 = vadd.f32 %v5083, %v5243
        %v5245 = vpop.f32.mrb[0].mxu0
        %5246 = vmatprep.mubr.bf16.mxu0 %v4028
        %5247 = vmatmul.mubr.bf16.gmra.mrb[0].mxu0 %v4027
        %v5248 = vpop.f32.mrb[0].mxu0
        %v5249 = vadd.f32 %v5088, %v5248
        %v5250 = vpop.f32.mrb[0].mxu0
        %v5251 = vpop.f32.mrb[0].mxu0
        %v5252 = vadd.f32 %v5091, %v5251
        %v5253 = vpop.f32.mrb[0].mxu0
        %5254 = vmatprep.mubr.bf16.mxu0 %v4037
        %5255 = vmatmul.mubr.bf16.gmra.mrb[0].mxu0 %v4036
        %v5256 = vpop.f32.mrb[0].mxu0
        %v5257 = vadd.f32 %v5096, %v5256
        %v5258 = vpop.f32.mrb[0].mxu0
        %v5259 = vpop.f32.mrb[0].mxu0
        %v5260 = vadd.f32 %v5099, %v5259
        %v5261 = vpop.f32.mrb[0].mxu0
        %5262 = vmatprep.mubr.bf16.mxu0 %v4046
        %5263 = vmatmul.mubr.bf16.gmra.mrb[0].mxu0 %v4045
        %v5264 = vpop.f32.mrb[0].mxu0
        %v5265 = vadd.f32 %v5104, %v5264
        %v5266 = vpop.f32.mrb[0].mxu0
        %v5267 = vpop.f32.mrb[0].mxu0
        %v5268 = vadd.f32 %v5107, %v5267
        %v5269 = vpop.f32.mrb[0].mxu0
        %5270 = vmatprep.mubr.bf16.mxu0 %v4055
        %5271 = vmatmul.mubr.bf16.gmra.mrb[0].mxu0 %v4054
        %v5272 = vpop.f32.mrb[0].mxu0
        %v5273 = vadd.f32 %v5112, %v5272
        %v5274 = vpop.f32.mrb[0].mxu0
        %v5275 = vpop.f32.mrb[0].mxu0
        %v5276 = vadd.f32 %v5115, %v5275
        %v5277 = vpop.f32.mrb[0].mxu0
        %5278 = vmatprep.mubr.bf16.mxu0 %v4064
        %5279 = vmatmul.mubr.bf16.gmra.mrb[0].mxu0 %v4063
        %v5280 = vpop.f32.mrb[0].mxu0
        %v5281 = vadd.f32 %v5120, %v5280
        %v5282 = vpop.f32.mrb[0].mxu0
        %v5283 = vpop.f32.mrb[0].mxu0
        %v5284 = vadd.f32 %v5123, %v5283
        %v5285 = vpop.f32.mrb[0].mxu0
        %5286 = vmatprep.mubr.bf16.mxu0 %v4073
        %5287 = vmatmul.mubr.bf16.gmra.mrb[0].mxu0 %v4072
        %v5288 = vpop.f32.mrb[0].mxu0
        %v5289 = vadd.f32 %v5128, %v5288
        %v5290 = vpop.f32.mrb[0].mxu0
        %v5291 = vpop.f32.mrb[0].mxu0
        %v5292 = vadd.f32 %v5131, %v5291
        %v5293 = vpop.f32.mrb[0].mxu0
        %5294 = vdwg.mxu0
        %5295 = vmatprep.subr.bf16.mxu0 0
        %5296 = vmatpush1.bf16.msra.mxu0 %v4571
        %5297 = vmatprep.subr.bf16.mxu0 0
        %5298 = vmatpush1.bf16.msra.mxu0 %v4572
        %5299 = vmatprep.subr.bf16.mxu0 0
        %5300 = vmatpush1.bf16.msra.mxu0 %v4573
        %5301 = vmatprep.subr.bf16.mxu0 0
        %5302 = vmatpush1.bf16.msra.mxu0 %v4574
        %5303 = vmatprep.subr.bf16.mxu0 0
        %5304 = vmatpush1.bf16.msra.mxu0 %v4575
        %5305 = vmatprep.subr.bf16.mxu0 0
        %5306 = vmatpush1.bf16.msra.mxu0 %v4576
        %5307 = vmatprep.subr.bf16.mxu0 0
        %5308 = vmatpush1.bf16.msra.mxu0 %v4577
        %5309 = vmatprep.subr.bf16.mxu0 0
        %5310 = vmatpush1.bf16.msra.mxu0 %v4578
        %5311 = vmatprep.subr.bf16.mxu0 0
        %5312 = vmatpush1.bf16.msra.mxu0 0
        %5313 = vmatprep.subr.bf16.mxu0 0
        %5314 = vmatpush1.bf16.msra.mxu0 0
        %5315 = vmatprep.subr.bf16.mxu0 0
        %5316 = vmatpush1.bf16.msra.mxu0 0
        %5317 = vmatprep.subr.bf16.mxu0 0
        %5318 = vmatpush1.bf16.msra.mxu0 0
        %5319 = vmatprep.subr.bf16.mxu0 0
        %5320 = vmatpush1.bf16.msra.mxu0 0
        %5321 = vmatprep.subr.bf16.mxu0 0
        %5322 = vmatpush1.bf16.msra.mxu0 0
        %5323 = vmatprep.subr.bf16.mxu0 0
        %5324 = vmatpush1.bf16.msra.mxu0 0
        %5325 = vmatprep.subr.bf16.mxu0 0
        %5326 = vmatpush1.bf16.msra.mxu0 0
        %5327 = vmatprep.mubr.bf16.mxu0 0
        %5328 = vmatmul.mubr.bf16.gmra.mrb[0].mxu0 %v3939
        %v5329 = vpop.f32.mrb[0].mxu0
        %v5330 = vadd.f32 %v5169, %v5329
        %v5331 = vpop.f32.mrb[0].mxu0
        %v5332 = vpop.f32.mrb[0].mxu0
        %v5333 = vadd.f32 %v5172, %v5332
        %v5334 = vpop.f32.mrb[0].mxu0
        %5335 = vmatprep.mubr.bf16.mxu0 0
        %5336 = vmatmul.mubr.bf16.gmra.mrb[0].mxu0 %v3948
        %v5337 = vpop.f32.mrb[0].mxu0
        %v5338 = vadd.f32 %v5177, %v5337
        %v5339 = vpop.f32.mrb[0].mxu0
        %v5340 = vpop.f32.mrb[0].mxu0
        %v5341 = vadd.f32 %v5180, %v5340
        %v5342 = vpop.f32.mrb[0].mxu0
        %5343 = vmatprep.mubr.bf16.mxu0 0
        %5344 = vmatmul.mubr.bf16.gmra.mrb[0].mxu0 %v3957
        %v5345 = vpop.f32.mrb[0].mxu0
        %v5346 = vadd.f32 %v5185, %v5345
        %v5347 = vpop.f32.mrb[0].mxu0
        %v5348 = vpop.f32.mrb[0].mxu0
        %v5349 = vadd.f32 %v5188, %v5348
        %v5350 = vpop.f32.mrb[0].mxu0
        %5351 = vmatprep.mubr.bf16.mxu0 0
        %5352 = vmatmul.mubr.bf16.gmra.mrb[0].mxu0 %v3966
        %v5353 = vpop.f32.mrb[0].mxu0
        %v5354 = vadd.f32 %v5193, %v5353
        %v5355 = vpop.f32.mrb[0].mxu0
        %v5356 = vpop.f32.mrb[0].mxu0
        %v5357 = vadd.f32 %v5196, %v5356
        %v5358 = vpop.f32.mrb[0].mxu0
        %5359 = vmatprep.mubr.bf16.mxu0 0
        %5360 = vmatmul.mubr.bf16.gmra.mrb[0].mxu0 %v3975
        %v5361 = vpop.f32.mrb[0].mxu0
        %v5362 = vadd.f32 %v5201, %v5361
        %v5363 = vpop.f32.mrb[0].mxu0
        %v5364 = vpop.f32.mrb[0].mxu0
        %v5365 = vadd.f32 %v5204, %v5364
        %v5366 = vpop.f32.mrb[0].mxu0
        %5367 = vmatprep.mubr.bf16.mxu0 0
        %5368 = vmatmul.mubr.bf16.gmra.mrb[0].mxu0 %v3984
        %v5369 = vpop.f32.mrb[0].mxu0
        %v5370 = vadd.f32 %v5209, %v5369
        %v5371 = vpop.f32.mrb[0].mxu0
        %v5372 = vpop.f32.mrb[0].mxu0
        %v5373 = vadd.f32 %v5212, %v5372
        %v5374 = vpop.f32.mrb[0].mxu0
        %5375 = vmatprep.mubr.bf16.mxu0 0
        %5376 = vmatmul.mubr.bf16.gmra.mrb[0].mxu0 %v3993
        %v5377 = vpop.f32.mrb[0].mxu0
        %v5378 = vadd.f32 %v5217, %v5377
        %v5379 = vpop.f32.mrb[0].mxu0
        %v5380 = vpop.f32.mrb[0].mxu0
        %v5381 = vadd.f32 %v5220, %v5380
        %v5382 = vpop.f32.mrb[0].mxu0
        %5383 = vmatprep.mubr.bf16.mxu0 0
        %5384 = vmatmul.mubr.bf16.gmra.mrb[0].mxu0 %v4002
        %v5385 = vpop.f32.mrb[0].mxu0
        %v5386 = vadd.f32 %v5225, %v5385
        %v5387 = vpop.f32.mrb[0].mxu0
        %v5388 = vpop.f32.mrb[0].mxu0
        %v5389 = vadd.f32 %v5228, %v5388
        %v5390 = vpop.f32.mrb[0].mxu0
        %5391 = vmatprep.mubr.bf16.mxu0 0
        %5392 = vmatmul.mubr.bf16.gmra.mrb[0].mxu0 %v4011
        %v5393 = vpop.f32.mrb[0].mxu0
        %v5394 = vadd.f32 %v5233, %v5393
        %v5395 = vpop.f32.mrb[0].mxu0
        %v5396 = vpop.f32.mrb[0].mxu0
        %v5397 = vadd.f32 %v5236, %v5396
        %v5398 = vpop.f32.mrb[0].mxu0
        %5399 = vmatprep.mubr.bf16.mxu0 0
        %5400 = vmatmul.mubr.bf16.gmra.mrb[0].mxu0 %v4020
        %v5401 = vpop.f32.mrb[0].mxu0
        %v5402 = vadd.f32 %v5241, %v5401
        %v5403 = vpop.f32.mrb[0].mxu0
        %v5404 = vpop.f32.mrb[0].mxu0
        %v5405 = vadd.f32 %v5244, %v5404
        %v5406 = vpop.f32.mrb[0].mxu0
        %5407 = vmatprep.mubr.bf16.mxu0 0
        %5408 = vmatmul.mubr.bf16.gmra.mrb[0].mxu0 %v4029
        %v5409 = vpop.f32.mrb[0].mxu0
        %v5410 = vadd.f32 %v5249, %v5409
        %v5411 = vpop.f32.mrb[0].mxu0
        %v5412 = vpop.f32.mrb[0].mxu0
        %v5413 = vadd.f32 %v5252, %v5412
        %v5414 = vpop.f32.mrb[0].mxu0
        %5415 = vmatprep.mubr.bf16.mxu0 0
        %5416 = vmatmul.mubr.bf16.gmra.mrb[0].mxu0 %v4038
        %v5417 = vpop.f32.mrb[0].mxu0
        %v5418 = vadd.f32 %v5257, %v5417
        %v5419 = vpop.f32.mrb[0].mxu0
        %v5420 = vpop.f32.mrb[0].mxu0
        %v5421 = vadd.f32 %v5260, %v5420
        %v5422 = vpop.f32.mrb[0].mxu0
        %5423 = vmatprep.mubr.bf16.mxu0 0
        %5424 = vmatmul.mubr.bf16.gmra.mrb[0].mxu0 %v4047
        %v5425 = vpop.f32.mrb[0].mxu0
        %v5426 = vadd.f32 %v5265, %v5425
        %v5427 = vpop.f32.mrb[0].mxu0
        %v5428 = vpop.f32.mrb[0].mxu0
        %v5429 = vadd.f32 %v5268, %v5428
        %v5430 = vpop.f32.mrb[0].mxu0
        %5431 = vmatprep.mubr.bf16.mxu0 0
        %5432 = vmatmul.mubr.bf16.gmra.mrb[0].mxu0 %v4056
        %v5433 = vpop.f32.mrb[0].mxu0
        %v5434 = vadd.f32 %v5273, %v5433
        %v5435 = vpop.f32.mrb[0].mxu0
        %v5436 = vpop.f32.mrb[0].mxu0
        %v5437 = vadd.f32 %v5276, %v5436
        %v5438 = vpop.f32.mrb[0].mxu0
        %5439 = vmatprep.mubr.bf16.mxu0 0
        %5440 = vmatmul.mubr.bf16.gmra.mrb[0].mxu0 %v4065
        %v5441 = vpop.f32.mrb[0].mxu0
        %v5442 = vadd.f32 %v5281, %v5441
        %v5443 = vpop.f32.mrb[0].mxu0
        %v5444 = vpop.f32.mrb[0].mxu0
        %v5445 = vadd.f32 %v5284, %v5444
        %v5446 = vpop.f32.mrb[0].mxu0
        %5447 = vmatprep.mubr.bf16.mxu0 0
        %5448 = vmatmul.mubr.bf16.gmra.mrb[0].mxu0 %v4074
        %v5449 = vpop.f32.mrb[0].mxu0
        %v5450 = vadd.f32 %v5289, %v5449
        %v5451 = vpop.f32.mrb[0].mxu0
        %v5452 = vpop.f32.mrb[0].mxu0
        %v5453 = vadd.f32 %v5292, %v5452
        %v5454 = vpop.f32.mrb[0].mxu0
        %5455 = vdwg.mxu0
        %v5456 = vpack.c.bf16 %v5333, %v5330
        %v5457 = vpack.c.bf16 %v5341, %v5338
        %v5458 = vpack.c.bf16 %v5349, %v5346
        %v5459 = vpack.c.bf16 %v5357, %v5354
        %v5460 = vpack.c.bf16 %v5365, %v5362
        %v5461 = vpack.c.bf16 %v5373, %v5370
        %v5462 = vpack.c.bf16 %v5381, %v5378
        %v5463 = vpack.c.bf16 %v5389, %v5386
        %v5464 = vpack.c.bf16 %v5397, %v5394
        %v5465 = vpack.c.bf16 %v5405, %v5402
        %v5466 = vpack.c.bf16 %v5413, %v5410
        %v5467 = vpack.c.bf16 %v5421, %v5418
        %v5468 = vpack.c.bf16 %v5429, %v5426
        %v5469 = vpack.c.bf16 %v5437, %v5434
        %v5470 = vpack.c.bf16 %v5445, %v5442
        %v5471 = vpack.c.bf16 %v5453, %v5450
        %v5488 = vunpack.c.l.b16 %v5456
        %v5489 = vunpack.c.h.b16 %v5456
        %v5490 = vunpack.c.l.b16 %v5457
        %v5491 = vunpack.c.h.b16 %v5457
        %v5492 = vunpack.c.l.b16 %v5458
        %v5493 = vunpack.c.h.b16 %v5458
        %v5494 = vunpack.c.l.b16 %v5459
        %v5495 = vunpack.c.h.b16 %v5459
        %v5496 = vunpack.c.l.b16 %v5460
        %v5497 = vunpack.c.h.b16 %v5460
        %v5498 = vunpack.c.l.b16 %v5461
        %v5499 = vunpack.c.h.b16 %v5461
        %v5500 = vunpack.c.l.b16 %v5462
        %v5501 = vunpack.c.h.b16 %v5462
        %v5502 = vunpack.c.l.b16 %v5463
        %v5503 = vunpack.c.h.b16 %v5463
        %v5504 = vunpack.c.l.b16 %v5464
        %v5505 = vunpack.c.h.b16 %v5464
        %v5506 = vunpack.c.l.b16 %v5465
        %v5507 = vunpack.c.h.b16 %v5465
        %v5508 = vunpack.c.l.b16 %v5466
        %v5509 = vunpack.c.h.b16 %v5466
        %v5510 = vunpack.c.l.b16 %v5467
        %v5511 = vunpack.c.h.b16 %v5467
        %v5512 = vunpack.c.l.b16 %v5468
        %v5513 = vunpack.c.h.b16 %v5468
        %v5514 = vunpack.c.l.b16 %v5469
        %v5515 = vunpack.c.h.b16 %v5469
        %v5516 = vunpack.c.l.b16 %v5470
        %v5517 = vunpack.c.h.b16 %v5470
        %v5518 = vunpack.c.l.b16 %v5471
        %v5519 = vunpack.c.h.b16 %v5471
        %v5520 = vpack.c.b16 %v5488, %v5488
        %v5521 = vpack.c.b16 %v5489, %v5489
        %v5522 = vpack.c.b16 %v5490, %v5490
        %v5523 = vpack.c.b16 %v5491, %v5491
        %v5524 = vpack.c.b16 %v5492, %v5492
        %v5525 = vpack.c.b16 %v5493, %v5493
        %v5526 = vpack.c.b16 %v5494, %v5494
        %v5527 = vpack.c.b16 %v5495, %v5495
        %v5528 = vpack.c.b16 %v5496, %v5496
        %v5529 = vpack.c.b16 %v5497, %v5497
        %v5530 = vpack.c.b16 %v5498, %v5498
        %v5531 = vpack.c.b16 %v5499, %v5499
        %v5532 = vpack.c.b16 %v5500, %v5500
        %v5533 = vpack.c.b16 %v5501, %v5501
        %v5534 = vpack.c.b16 %v5502, %v5502
        %v5535 = vpack.c.b16 %v5503, %v5503
        %v5536 = vpack.c.b16 %v5504, %v5504
        %v5537 = vpack.c.b16 %v5505, %v5505
        %v5538 = vpack.c.b16 %v5506, %v5506
        %v5539 = vpack.c.b16 %v5507, %v5507
        %v5540 = vpack.c.b16 %v5508, %v5508
        %v5541 = vpack.c.b16 %v5509, %v5509
        %v5542 = vpack.c.b16 %v5510, %v5510
        %v5543 = vpack.c.b16 %v5511, %v5511
        %v5544 = vpack.c.b16 %v5512, %v5512
        %v5545 = vpack.c.b16 %v5513, %v5513
        %v5546 = vpack.c.b16 %v5514, %v5514
        %v5547 = vpack.c.b16 %v5515, %v5515
        %v5548 = vpack.c.b16 %v5516, %v5516
        %v5549 = vpack.c.b16 %v5517, %v5517
        %v5550 = vpack.c.b16 %v5518, %v5518
        %v5551 = vpack.c.b16 %v5519, %v5519
        %5584 = vst [vmem:[%s284] sm:$0xf] %v5520
        %5585 = vst [vmem:[%s284 + $0x4] sm:$0xf] %v5521
        %5586 = vst [vmem:[%s284 + $0x8] sm:$0xf] %v5522
        %5587 = vst [vmem:[%s284 + $0xc] sm:$0xf] %v5523
        %5588 = vst [vmem:[%s284 + $0x10] sm:$0xf] %v5524
        %5589 = vst [vmem:[%s284 + $0x14] sm:$0xf] %v5525
        %5590 = vst [vmem:[%s284 + $0x18] sm:$0xf] %v5526
        %5591 = vst [vmem:[%s284 + $0x1c] sm:$0xf] %v5527
        %5592 = vst [vmem:[%s284 + $0x20] sm:$0xf] %v5528
        %5593 = vst [vmem:[%s284 + $0x24] sm:$0xf] %v5529
        %5594 = vst [vmem:[%s284 + $0x28] sm:$0xf] %v5530
        %5595 = vst [vmem:[%s284 + $0x2c] sm:$0xf] %v5531
        %5596 = vst [vmem:[%s284 + $0x30] sm:$0xf] %v5532
        %5597 = vst [vmem:[%s284 + $0x34] sm:$0xf] %v5533
        %5598 = vst [vmem:[%s284 + $0x38] sm:$0xf] %v5534
        %5599 = vst [vmem:[%s284 + $0x3c] sm:$0xf] %v5535
        %5600 = vst [vmem:[%s284 + $0x40] sm:$0xf] %v5536
        %5601 = vst [vmem:[%s284 + $0x44] sm:$0xf] %v5537
        %5602 = vst [vmem:[%s284 + $0x48] sm:$0xf] %v5538
        %5603 = vst [vmem:[%s284 + $0x4c] sm:$0xf] %v5539
        %5604 = vst [vmem:[%s284 + $0x50] sm:$0xf] %v5540
        %5605 = vst [vmem:[%s284 + $0x54] sm:$0xf] %v5541
        %5606 = vst [vmem:[%s284 + $0x58] sm:$0xf] %v5542
        %5607 = vst [vmem:[%s284 + $0x5c] sm:$0xf] %v5543
        %5608 = vst [vmem:[%s284 + $0x60] sm:$0xf] %v5544
        %5609 = vst [vmem:[%s284 + $0x64] sm:$0xf] %v5545
        %5610 = vst [vmem:[%s284 + $0x68] sm:$0xf] %v5546
        %5611 = vst [vmem:[%s284 + $0x6c] sm:$0xf] %v5547
        %5612 = vst [vmem:[%s284 + $0x70] sm:$0xf] %v5548
        %5613 = vst [vmem:[%s284 + $0x74] sm:$0xf] %v5549
        %5614 = vst [vmem:[%s284 + $0x78] sm:$0xf] %v5550
        %5615 = vst [vmem:[%s284 + $0x7c] sm:$0xf] %v5551
        %v5616 = vadd.f32 %v5330, %v5333
        %v5617 = vadd.f32 %v5616, %v5338
        %v5618 = vadd.f32 %v5617, %v5341
        %v5619 = vadd.f32 %v5618, %v5346
        %v5620 = vadd.f32 %v5619, %v5349
        %v5621 = vadd.f32 %v5620, %v5354
        %v5622 = vadd.f32 %v5621, %v5357
        %v5623 = vadd.f32 %v5622, %v5362
        %v5624 = vadd.f32 %v5623, %v5365
        %v5625 = vadd.f32 %v5624, %v5370
        %v5626 = vadd.f32 %v5625, %v5373
        %v5627 = vadd.f32 %v5626, %v5378
        %v5628 = vadd.f32 %v5627, %v5381
        %v5629 = vadd.f32 %v5628, %v5386
        %v5630 = vadd.f32 %v5629, %v5389
        %v5631 = vadd.f32 %v5630, %v5394
        %v5632 = vadd.f32 %v5631, %v5397
        %v5633 = vadd.f32 %v5632, %v5402
        %v5634 = vadd.f32 %v5633, %v5405
        %v5635 = vadd.f32 %v5634, %v5410
        %v5636 = vadd.f32 %v5635, %v5413
        %v5637 = vadd.f32 %v5636, %v5418
        %v5638 = vadd.f32 %v5637, %v5421
        %v5639 = vadd.f32 %v5638, %v5426
        %v5640 = vadd.f32 %v5639, %v5429
        %v5641 = vadd.f32 %v5640, %v5434
        %v5642 = vadd.f32 %v5641, %v5437
        %v5643 = vadd.f32 %v5642, %v5442
        %v5644 = vadd.f32 %v5643, %v5445
        %v5645 = vadd.f32 %v5644, %v5450
        %v5646 = vadd.f32 %v5645, %v5453
        %v5647 = vrot.slane %v5646, 4
        %v5648 = vadd.f32 %v5646, %v5647
        %v5649 = vrot.slane %v5648, 2
        %v5650 = vadd.f32 %v5648, %v5649
        %v5651 = vrot.slane %v5650, 1
        %v5652 = vadd.f32 %v5650, %v5651
        %v5653 = vmul.f32 %v5330, %v5330
        %v5654 = vmul.f32 %v5333, %v5333
        %v5655 = vmul.f32 %v5338, %v5338
        %v5656 = vmul.f32 %v5341, %v5341
        %v5657 = vmul.f32 %v5346, %v5346
        %v5658 = vmul.f32 %v5349, %v5349
        %v5659 = vmul.f32 %v5354, %v5354
        %v5660 = vmul.f32 %v5357, %v5357
        %v5661 = vmul.f32 %v5362, %v5362
        %v5662 = vmul.f32 %v5365, %v5365
        %v5663 = vmul.f32 %v5370, %v5370
        %v5664 = vmul.f32 %v5373, %v5373
        %v5665 = vmul.f32 %v5378, %v5378
        %v5666 = vmul.f32 %v5381, %v5381
        %v5667 = vmul.f32 %v5386, %v5386
        %v5668 = vmul.f32 %v5389, %v5389
        %v5669 = vmul.f32 %v5394, %v5394
        %v5670 = vmul.f32 %v5397, %v5397
        %v5671 = vmul.f32 %v5402, %v5402
        %v5672 = vmul.f32 %v5405, %v5405
        %v5673 = vmul.f32 %v5410, %v5410
        %v5674 = vmul.f32 %v5413, %v5413
        %v5675 = vmul.f32 %v5418, %v5418
        %v5676 = vmul.f32 %v5421, %v5421
        %v5677 = vmul.f32 %v5426, %v5426
        %v5678 = vmul.f32 %v5429, %v5429
        %v5679 = vmul.f32 %v5434, %v5434
        %v5680 = vmul.f32 %v5437, %v5437
        %v5681 = vmul.f32 %v5442, %v5442
        %v5682 = vmul.f32 %v5445, %v5445
        %v5683 = vmul.f32 %v5450, %v5450
        %v5684 = vmul.f32 %v5453, %v5453
        %v5685 = vadd.f32 %v5653, %v5654
        %v5686 = vadd.f32 %v5685, %v5655
        %v5687 = vadd.f32 %v5686, %v5656
        %v5688 = vadd.f32 %v5687, %v5657
        %v5689 = vadd.f32 %v5688, %v5658
        %v5690 = vadd.f32 %v5689, %v5659
        %v5691 = vadd.f32 %v5690, %v5660
        %v5692 = vadd.f32 %v5691, %v5661
        %v5693 = vadd.f32 %v5692, %v5662
        %v5694 = vadd.f32 %v5693, %v5663
        %v5695 = vadd.f32 %v5694, %v5664
        %v5696 = vadd.f32 %v5695, %v5665
        %v5697 = vadd.f32 %v5696, %v5666
        %v5698 = vadd.f32 %v5697, %v5667
        %v5699 = vadd.f32 %v5698, %v5668
        %v5700 = vadd.f32 %v5699, %v5669
        %v5701 = vadd.f32 %v5700, %v5670
        %v5702 = vadd.f32 %v5701, %v5671
        %v5703 = vadd.f32 %v5702, %v5672
        %v5704 = vadd.f32 %v5703, %v5673
        %v5705 = vadd.f32 %v5704, %v5674
        %v5706 = vadd.f32 %v5705, %v5675
        %v5707 = vadd.f32 %v5706, %v5676
        %v5708 = vadd.f32 %v5707, %v5677
        %v5709 = vadd.f32 %v5708, %v5678
        %v5710 = vadd.f32 %v5709, %v5679
        %v5711 = vadd.f32 %v5710, %v5680
        %v5712 = vadd.f32 %v5711, %v5681
        %v5713 = vadd.f32 %v5712, %v5682
        %v5714 = vadd.f32 %v5713, %v5683
        %v5715 = vadd.f32 %v5714, %v5684
        %v5716 = vrot.slane %v5715, 4
        %v5717 = vadd.f32 %v5715, %v5716
        %v5718 = vrot.slane %v5717, 2
        %v5719 = vadd.f32 %v5717, %v5718
        %v5720 = vrot.slane %v5719, 1
        %v5721 = vadd.f32 %v5719, %v5720
        %vm5722 = vcmask 1040384
        %v5723 = vsel %vm5722, %v5652, %v5721
        %5724 = vst [vmem:[%s291] sm:$0x3] %v5723
        %s5725 = sand.u32 %s143, 1
        %s5726 = scalar_lea.sflag [#allocation6], %s5725
        %s5727 = sand.u32 %s143, 1
        %s5728 = smul.addr %s5727, 128
        %s5729 = scalar_lea.vmem [#allocation9], %s5728
        %s5730 = sand.u32 %s171, 1
        %s5731 = scalar_lea.sflag [#allocation11], %s5730
        %s5732 = sand.u32 %s171, 1
        %s5733 = smul.addr %s5732, 2
        %s5734 = scalar_lea.vmem [#allocation10], %s5733
        // Predicated region
        $region49: #{tpu_custom_call.1} parent=35 // pred_check
          %p5735 = pneg %p153
        $region50: #{tpu_custom_call.1} parent=35 // pred_check_branch
          %5737 = sbr.rel (%p5735) target = $region52
        $region51: #{tpu_custom_call.1} parent=35 // pred_region
          %s5739 = ssub.s32 2048, 2048
          %5740 = vsyncadd %s5726, %s5739
          %s5741 = smul.addr %s31, 32
          %s5742 = sadd.s32 %s32, %s5741
          %s5743 = smul.addr %s5742, 64
          %s5744 = scalar_lea.hbm %s4, %s5743
          %s5745 = sshll.u32 %s5729, 4
          %s5746 = int_to_ptr.vmem [resolvable:$true] %s5745
          %5751 = dma.vmem_to_hbm [thread:$0]  %s5746, 2048, %s5744, %s5726, 64, 64, 4
        $region52: #{tpu_custom_call.1} parent=35 // pred_fallthru
          _
        // Predicated region
        $region53: #{tpu_custom_call.1} parent=35 // pred_check
          %p5752 = pneg %p181
        $region54: #{tpu_custom_call.1} parent=35 // pred_check_branch
          %5754 = sbr.rel (%p5752) target = $region56
        $region55: #{tpu_custom_call.1} parent=35 // pred_region
          %s5756 = ssub.s32 32, 32
          %5757 = vsyncadd %s5731, %s5756
          %s5758 = sadd.s32 %s32, %s31
          %s5759 = smul.addr %s5758, 32
          %s5760 = scalar_lea.hbm %s5, %s5759
          %s5762 = sshll.u32 %s5734, 4
          %s5763 = int_to_ptr.vmem [resolvable:$true] %s5762
          %5765 = dma.vmem_to_hbm [thread:$0]  %s5763, 32, %s5760, %s5731
        $region56: #{tpu_custom_call.1} parent=35 // pred_fallthru
          _
      $region36: #{tpu_custom_call.1} parent=5 // pred_fallthru
        _
      %p5766 = scmp.le.s32.totalorder 2, %s22
      // Predicated region
      $region57: #{tpu_custom_call.1} parent=5 // pred_check
        %p5767 = pneg %p5766
      $region58: #{tpu_custom_call.1} parent=5 // pred_check_branch
        %5769 = sbr.rel (%p5767) target = $region60
      $region59: #{tpu_custom_call.1} parent=5 // pred_region
        %s5770 = ssub.s32 %s22, 2
        // Predicated region
        $region61: #{tpu_custom_call.1} parent=59 // pred_check
          %p5771 = pneg %p159
        $region62: #{tpu_custom_call.1} parent=59 // pred_check_branch
          %5773 = sbr.rel (%p5771) target = $region64
        $region63: #{tpu_custom_call.1} parent=59 // pred_region
          %s5774 = sand.u32 %s144, 1
          %s5775 = scalar_lea.sflag [#allocation6], %s5774
          %s5776 = sand.u32 %s144, 1
          %s5777 = smul.addr %s5776, 128
          %s5778 = scalar_lea.vmem [#allocation9], %s5777
          %5779 = dma.done %s5775, 2048
        $region64: #{tpu_custom_call.1} parent=59 // pred_fallthru
          _
        // Predicated region
        $region65: #{tpu_custom_call.1} parent=59 // pred_check
          %p5780 = pneg %p187
        $region66: #{tpu_custom_call.1} parent=59 // pred_check_branch
          %5782 = sbr.rel (%p5780) target = $region68
        $region67: #{tpu_custom_call.1} parent=59 // pred_region
          %s5783 = sand.u32 %s172, 1
          %s5784 = scalar_lea.sflag [#allocation11], %s5783
          %s5785 = sand.u32 %s172, 1
          %s5786 = smul.addr %s5785, 2
          %s5787 = scalar_lea.vmem [#allocation10], %s5786
          %5788 = dma.done %s5784, 32
        $region68: #{tpu_custom_call.1} parent=59 // pred_fallthru
          _
      $region60: #{tpu_custom_call.1} parent=5 // pred_fallthru
        _
    $region6: #{tpu_custom_call.1} parent=1 // loop_footer
      %s26 = sadd.s32 1, %s22
    $region7: #{tpu_custom_call.1} parent=1 // loop_footer_branch
      %21 = sbr.rel target = $region3
    $region8: #{tpu_custom_call.1} parent=1 // loop_exit
      _
    %5789 = vsyncpa [#allocation5], 1
    %s5790 = scalar_lea.sflag [#allocation5], 1
    %5791 = vsyncpa %s5790, 1
    %5792 = vsyncpa [#allocation8], 1
    %5793 = vsyncpa [#allocation6], 1
    %s5794 = scalar_lea.sflag [#allocation6], 1
    %5795 = vsyncpa %s5794, 1
    %5796 = vsyncpa [#allocation11], 1
    %s5797 = scalar_lea.sflag [#allocation11], 1
    %5798 = vsyncpa %s5797, 1

</llo_original>
